<compile_context>
chip_gen: v7x
topology: tpu7x:2x2x1
jax: 0.10.0
libtpu: 0.0.40
codegen_flags: <defaults>
</compile_context>

<pallas_src>
import functools

import jax
import jax.numpy as jnp
from jax.experimental import pallas as pl
from jax.experimental.pallas import tpu as pltpu

LANES = 128
# Below this many bytes the fixed pallas_call launch / DMA-setup cost dominates
# a pure streaming op, so plain fused XLA elementwise is strictly faster.
MIN_KERNEL_BYTES = 1 << 20  # 1 MiB


def _lrelu_sat_kernel(x_ref, o_ref, *, negative_slope, saturation):
    x = x_ref[...]
    if 0.0 <= negative_slope <= 1.0:
        # max(x, slope*x) == leaky_relu(x) for slope in [0, 1]; drops a
        # vcmp+vsel to a single vmax (lower VALU/vreg pressure if ever fused
        # into a compute-bound kernel; hidden under DMA here either way).
        activated = jnp.maximum(x, x * negative_slope)
    else:
        activated = jnp.where(x >= 0, x, x * negative_slope)
    # torch.clamp(activated, max=saturation)
    o_ref[...] = jnp.minimum(activated, saturation)


def _reference(x, negative_slope, saturation):
    activated = jnp.where(x >= 0, x, x * negative_slope)
    return jnp.minimum(activated, saturation)


def _tile_config(itemsize):
    """Byte-budgeted tile + scoped-VMEM limit.

    Default: 4 MiB per buffer (2 arrays x 2 pipeline buffers = 16 MiB), limit
    raised to 32 MiB (v5e's default scope is only 16 MiB).  On v7x-class chips
    (64 MiB physical VMEM, ~3.2 TB/s HBM) go to 8 MiB per buffer and a 48 MiB
    limit: bigger DMAs amortize the ~0.35 us/step overhead, while staying well
    under physical VMEM.
    """
    per_buffer_bytes = 4 << 20
    vmem_limit_bytes = 32 << 20
    try:
        info = pltpu.get_tpu_info()
        vmem_cap = getattr(info, "vmem_capacity_bytes", None)
        if vmem_cap is not None and vmem_cap <= (64 << 20):
            per_buffer_bytes = 8 << 20
            vmem_limit_bytes = 48 << 20
    except Exception:
        pass  # conservative defaults are safe on every generation
    rows = (per_buffer_bytes // (LANES * itemsize)) & ~7  # multiple of 8
    return max(rows, 8), vmem_limit_bytes


def lrelu_with_saturation(x, negative_slope=0.1, saturation=20.0, *,
                          donate_input=False):
    negative_slope = float(negative_slope)
    saturation = float(saturation)
    dtype = x.dtype
    itemsize = jnp.dtype(dtype).itemsize
    n = x.size

    # (1) Tiny inputs: launch + DMA setup dominate -> plain fused XLA.
    # (2) Non-lane-aligned element counts: a (rows, 128) view does not exist
    #     without a full-tensor repack (pad / slice / concat each add a full
    #     HBM read+write, doubling traffic for this mem-bound op), so the fused
    #     XLA elementwise -- already at the HBM roofline -- is strictly better.
    # TODO(synk): zero-copy in-kernel tail masking (scalar-prefetch n +
    # broadcasted_iota >= n predicate) needs a 1-D block path; not implemented.
    if n == 0 or n * itemsize < MIN_KERNEL_BYTES or n % LANES != 0:
        return _reference(x, negative_slope, saturation)

    orig_shape = x.shape
    n_rows = n // LANES
    x2d = x.reshape(n_rows, LANES)  # lane-dense slab, no padding

    rows_per_tile, vmem_limit_bytes = _tile_config(itemsize)
    block_rows = rows_per_tile if n_rows > rows_per_tile else n_rows
    grid = (pl.cdiv(n_rows, block_rows),)  # ragged last block is auto-masked

    kernel = functools.partial(
        _lrelu_sat_kernel,
        negative_slope=negative_slope,
        saturation=saturation,
    )

    out2d = pl.pallas_call(
        kernel,
        out_shape=jax.ShapeDtypeStruct((n_rows, LANES), dtype),
        grid_spec=pltpu.PrefetchScalarGridSpec(
            num_scalar_prefetch=0,
            grid=grid,
            in_specs=[pl.BlockSpec((block_rows, LANES), lambda i: (i, 0))],
            out_specs=pl.BlockSpec((block_rows, LANES), lambda i: (i, 0)),
        ),
        compiler_params=pltpu.CompilerParams(
            dimension_semantics=("parallel",),
            vmem_limit_bytes=vmem_limit_bytes,
        ),
        cost_estimate=pl.CostEstimate(
            flops=3 * n,
            transcendentals=0,
            bytes_accessed=2 * n * itemsize,
        ),
        # In-place update when the caller can donate x (halves peak HBM
        # footprint).  Off by default: if x stays live, XLA must insert a
        # defensive copy, which would *add* traffic.
        input_output_aliases=({0: 0} if donate_input else {}),
    )(x2d)

    return out2d.reshape(orig_shape)


if __name__ == "__main__":
    # Module hyper-parameters (deterministic, in-script).
    negative_slope = 0.1
    saturation = 20.0

    key = jax.random.PRNGKey(0)
    k1, k2, k3 = jax.random.split(key, 3)

    # 1) Small NCHW conv-style activation (matches module usage) -> XLA
    #    fallback path (launch cost would dominate the Pallas kernel).
    x_small = jax.random.normal(k1, (2, 4, 16, 16), dtype=jnp.float32) * 30.0
    # 2) Larger lane-aligned activation -> Pallas kernel path (multi-block grid
    #    with a ragged, auto-masked last block on v5e/v6e).
    x_big = jax.random.normal(k2, (2, 16, 128, 320), dtype=jnp.float32) * 30.0
    # 3) Non-128-aligned element count -> traffic-optimal XLA fallback path.
    x_odd = jax.random.normal(k3, (3, 367, 257), dtype=jnp.float32) * 30.0

    for x in (x_small, x_big, x_odd):
        out = jax.block_until_ready(
            lrelu_with_saturation(x, negative_slope, saturation))
        ref = _reference(x, negative_slope, saturation)
        assert out.shape == x.shape and out.dtype == x.dtype
        assert jnp.allclose(out, ref, atol=1e-6, rtol=1e-6), "mismatch vs reference"

    print("KERNEL_OK")
</pallas_src>

<mosaic_0001>
module attributes {stable_mosaic.version = 11 : i64} {
  func.func @_lrelu_sat_kernel(%arg0: i32, %arg1: memref<8192x128xf32, #tpu.memory_space<vmem>>, %arg2: memref<8192x128xf32, #tpu.memory_space<vmem>>) attributes {dimension_semantics = [#tpu.dimension_semantics<parallel>], iteration_bounds = array<i64: 2>, scalar_prefetch = 0 : i64, scratch_operands = 0 : i64, tpu.core_type = #tpu.core_type<tc>, window_params = [{transform_indices = @transform_0, window_bounds = array<i64: 8192, 128>}, {transform_indices = @transform_1, window_bounds = array<i64: 8192, 128>}]} {
    %c0 = arith.constant 0 : index
    %c0_0 = arith.constant 0 : index
    %0 = vector.load %arg1[%c0, %c0_0] : memref<8192x128xf32, #tpu.memory_space<vmem>>, vector<8192x128xf32>
    %cst = arith.constant 1.000000e-01 : f32
    %1 = vector.broadcast %cst : f32 to vector<8192x128xf32>
    %2 = arith.mulf %0, %1 : vector<8192x128xf32>
    %3 = arith.maximumf %0, %2 : vector<8192x128xf32>
    %cst_1 = arith.constant 2.000000e+01 : f32
    %4 = vector.broadcast %cst_1 : f32 to vector<8192x128xf32>
    %5 = arith.minimumf %3, %4 : vector<8192x128xf32>
    %c0_2 = arith.constant 0 : index
    %c0_3 = arith.constant 0 : index
    %6 = vector.load %arg2[%c0_2, %c0_3] : memref<8192x128xf32, #tpu.memory_space<vmem>>, vector<8192x128xf32>
    tpu.vector_store %arg2[%c0_2, %c0_3], %5 {strides = array<i32>} : memref<8192x128xf32, #tpu.memory_space<vmem>>, vector<8192x128xf32>,
    return
  }
  func.func @transform_0(%arg0: i32) -> (i32, i32) {
    %c0_i32 = arith.constant 0 : i32
    %c0_i32_0 = arith.constant 0 : i32
    return %arg0, %c0_i32 : i32, i32
  }
  func.func @transform_1(%arg0: i32) -> (i32, i32) {
    %c0_i32 = arith.constant 0 : i32
    %c0_i32_0 = arith.constant 0 : i32
    return %arg0, %c0_i32 : i32, i32
  }
}

</mosaic_0001>

<llo_original>
// kernel: tpu_custom_call.1
$region0: #{tpu_custom_call.1}
  #allocation0 [shape = 'u32[]', space=smem, size = 0x4, offset = 0x4, fixed_abs, tag = 'smem constant byte address 0x4 - core index']
  #allocation1 [shape = 'u32[144,128]{1,0:T(1,128)}', space=vmem, size = 0x12000, scoped, tag = 'internal scratch']
  %s0 = inlined_call_operand.hbm [shape: f32[10240,128], index: 0, kind: input, shape index: {}]
  %s1 = inlined_call_operand.hbm [shape: f32[10240,128], index: 1, kind: output, shape index: {}]
  %s2 = sld [smem:[#allocation0]]
  $region41: #{tpu_custom_call.1} parent=0
    _
  %s4 = ssub.s32 1, %s2
  %s5 = scalar_select 0, %s4, %s2
  $region1: #{tpu_custom_call.1} parent=0
    #allocation2 [shape = 'u8[8388608]{0}', space=vmem, size = 0x800000, scoped, tag = 'input window, operand 0']
    #allocation3 [shape = 's32[2]{0}', space=sflag, size = 0x8, scoped, tag = 'scoped memory for tpu_custom_call.1']
    #allocation4 [shape = 's32[2]{0}', space=sflag, size = 0x8, scoped, tag = 'scoped memory for tpu_custom_call.1']
    #allocation5 [shape = 'u8[8388608]{0}', space=vmem, size = 0x800000, scoped, tag = 'output window, operand 0']
    %6 = vsyncpa [#allocation3], 0
    %s7 = scalar_lea.sflag [#allocation3], 1
    %8 = vsyncpa %s7, 0
    %9 = vsyncpa [#allocation4], 0
    %s10 = scalar_lea.sflag [#allocation4], 1
    %11 = vsyncpa %s10, 0
    loop: start=0, step=1, limit=4
    $region2: #{tpu_custom_call.1} parent=1 // loop_pre_header
      _
    $region3: #{tpu_custom_call.1} parent=1 // loop_header
      %s13 = sphi 0, %s17
      %p14 = scmp.ge.s32.totalorder %s13, 4
      %s23 = sphi 0, %s25
      %s26 = sphi 0, %s23
      %s27 = sphi 0, %s26
      %s43 = sphi 0, %s27
      %s49 = sphi 0, %s51
      %s52 = sphi 0, %s49
      %s53 = sphi 0, %s52
      %s69 = sphi 0, %s53
    $region4: #{tpu_custom_call.1} parent=1 // loop_header_branch
      %16 = sbr.rel (%p14) target = $region8
    $region5: #{tpu_custom_call.1} parent=1 // loop_body
      %s18 = ssub.s32 %s13, 1
      %s19 = ssub.s32 %s13, 2
      %s20 = sadd.s32 %s13, 1
      %s21 = ssub.s32 %s13, %s20
      %p22 = scmp.eq.s32.totalorder %s21, 0
      %s24 = sadd.s32 %s23, 1
      %s25 = scalar_select %p22, %s23, %s24
      %p28 = pneg %p22
      %p29 = scmp.eq.s32.totalorder %s13, 1
      %p30 = por %p28, %p29
      %p31 = scmp.ne.s32.totalorder %s23, %s26
      %p32 = scmp.eq.s32.totalorder %s13, 0
      %p33 = por %p31, %p32
      %p34 = scmp.ne.s32.totalorder %s23, %s26
      %p35 = scmp.eq.s32.totalorder %s18, 1
      %p36 = por %p34, %p35
      %p37 = scmp.ne.s32.totalorder %s26, %s27
      %p38 = scmp.eq.s32.totalorder %s18, 0
      %p39 = por %p37, %p38
      %p40 = scmp.ne.s32.totalorder %s26, %s27
      %p41 = scmp.eq.s32.totalorder %s19, 1
      %p42 = por %p40, %p41
      %p44 = scmp.ne.s32.totalorder %s27, %s43
      %p45 = scmp.eq.s32.totalorder %s19, 0
      %p46 = por %p44, %p45
      %s47 = ssub.s32 %s13, %s20
      %p48 = scmp.eq.s32.totalorder %s47, 0
      %s50 = sadd.s32 %s49, 1
      %s51 = scalar_select %p48, %s49, %s50
      %p54 = pneg %p48
      %p55 = scmp.eq.s32.totalorder %s13, 1
      %p56 = por %p54, %p55
      %p57 = scmp.ne.s32.totalorder %s49, %s52
      %p58 = scmp.eq.s32.totalorder %s13, 0
      %p59 = por %p57, %p58
      %p60 = scmp.ne.s32.totalorder %s49, %s52
      %p61 = scmp.eq.s32.totalorder %s18, 1
      %p62 = por %p60, %p61
      %p63 = scmp.ne.s32.totalorder %s52, %s53
      %p64 = scmp.eq.s32.totalorder %s18, 0
      %p65 = por %p63, %p64
      %p66 = scmp.ne.s32.totalorder %s52, %s53
      %p67 = scmp.eq.s32.totalorder %s19, 1
      %p68 = por %p66, %p67
      %p70 = scmp.ne.s32.totalorder %s53, %s69
      %p71 = scmp.eq.s32.totalorder %s19, 0
      %p72 = por %p70, %p71
      %p73 = scmp.le.s32.totalorder 1, %s13
      %p74 = scmp.lt.s32.totalorder %s13, 3
      %p75 = pnand %p73, %p74
      %p76 = pneg %p75
      // Predicated region
      $region9: #{tpu_custom_call.1} parent=5 // pred_check
        _
      $region10: #{tpu_custom_call.1} parent=5 // pred_check_branch
        %78 = sbr.rel (%p75) target = $region12
      $region11: #{tpu_custom_call.1} parent=5 // pred_region
        %s79 = ssub.s32 %s13, 1
      $region12: #{tpu_custom_call.1} parent=5 // pred_fallthru
        _
      %p80 = scmp.lt.s32.totalorder %s13, 2
      // Predicated region
      $region13: #{tpu_custom_call.1} parent=5 // pred_check
        %p81 = pneg %p80
      $region14: #{tpu_custom_call.1} parent=5 // pred_check_branch
        %83 = sbr.rel (%p81) target = $region16
      $region15: #{tpu_custom_call.1} parent=5 // pred_region
        // Predicated region
        $region17: #{tpu_custom_call.1} parent=15 // pred_check
          %p84 = pneg %p33
        $region18: #{tpu_custom_call.1} parent=15 // pred_check_branch
          %86 = sbr.rel (%p84) target = $region20
        $region19: #{tpu_custom_call.1} parent=15 // pred_region
          %s87 = sand.u32 %s23, 1
          %s88 = scalar_lea.sflag [#allocation3], %s87
          %s89 = sand.u32 %s23, 1
          %s90 = smul.addr %s89, 8192
          %s91 = scalar_lea.vmem [#allocation2], %s90
          %s92 = smul.u32 1024, %s13
          %s93 = ssub.s32 1280, %s92
          %p94 = scmp.lt.s32.totalorder %s93, 1024
          %s95 = scalar_select %p94, %s93, 1024
          %s96 = smul.u32 128, %s95
          %s98 = ssub.s32 131072, %s96
          %99 = vsyncadd %s88, %s98
          %p100 = scmp.ne.s32.totalorder 0, %s96
          %s101 = smul.addr %s92, 128
          %s102 = scalar_lea.hbm %s0, %s101
          %s103 = smul.u32 8, %s95
          %s104 = sshll.u32 %s91, 4
          %s105 = int_to_ptr.vmem [resolvable:$true] %s104
          %s106 = sshll.u32 %s103, 4
          %110 = dma.hbm_to_vmem [thread:$0]  (%p100), %s102, %s106, %s105, %s88, 128, 128, 8
        $region20: #{tpu_custom_call.1} parent=15 // pred_fallthru
          _
      $region16: #{tpu_custom_call.1} parent=5 // pred_fallthru
        _
      %p111 = scmp.le.s32.totalorder 1, %s13
      %p112 = scmp.lt.s32.totalorder %s13, 3
      %p113 = pnand %p111, %p112
      %p114 = pneg %p113
      // Predicated region
      $region21: #{tpu_custom_call.1} parent=5 // pred_check
        _
      $region22: #{tpu_custom_call.1} parent=5 // pred_check_branch
        %116 = sbr.rel (%p113) target = $region24
      $region23: #{tpu_custom_call.1} parent=5 // pred_region
        %s117 = ssub.s32 %s13, 1
        %s118 = sand.u32 %s26, 1
        %s119 = scalar_lea.sflag [#allocation3], %s118
        %s120 = sand.u32 %s26, 1
        %s121 = smul.addr %s120, 8192
        %s122 = scalar_lea.vmem [#allocation2], %s121
        // Predicated region
        $region25: #{tpu_custom_call.1} parent=23 // pred_check
          %p123 = pneg %p39
        $region26: #{tpu_custom_call.1} parent=23 // pred_check_branch
          %125 = sbr.rel (%p123) target = $region28
        $region27: #{tpu_custom_call.1} parent=23 // pred_region
          %126 = dma.done %s119, 131072
        $region28: #{tpu_custom_call.1} parent=23 // pred_fallthru
          _
        %s127 = sand.u32 %s26, 1
        %s128 = scalar_lea.sflag [#allocation3], %s127
        %s129 = sand.u32 %s26, 1
        %s130 = smul.addr %s129, 8192
        %s131 = scalar_lea.vmem [#allocation2], %s130
        %p132 = pneg %p39
        %p133 = pneg %p36
        %p134 = pneg %p65
        %p135 = pneg %p62
        %s136 = sand.u32 %s52, 1
        %s137 = scalar_lea.sflag [#allocation4], %s136
        %s138 = sand.u32 %s52, 1
        %s139 = smul.addr %s138, 8192
        %s140 = scalar_lea.vmem [#allocation5], %s139
        %s141 = smul.u32 1024, %s18
        %s142 = ssub.s32 1280, %s141
        %p143 = scmp.lt.s32.totalorder %s142, 1024
        %s144 = scalar_select %p143, %s142, 1024
        %s145 = smul.u32 128, %s144
        %s146 = smul.u32 1024, %s18
        %s147 = ssub.s32 1280, %s146
        %p148 = scmp.lt.s32.totalorder %s147, 1024
        %s149 = scalar_select %p148, %s147, 1024
        %s150 = smul.u32 128, %s149
        %v151 = vld [vmem:[%s122] sm:$0xff]
        %v152 = vld [vmem:[%s122 + $0x8] sm:$0xff]
        %v153 = vld [vmem:[%s122 + $0x10] sm:$0xff]
        %v154 = vld [vmem:[%s122 + $0x18] sm:$0xff]
        %v155 = vld [vmem:[%s122 + $0x20] sm:$0xff]
        %v156 = vld [vmem:[%s122 + $0x28] sm:$0xff]
        %v157 = vld [vmem:[%s122 + $0x30] sm:$0xff]
        %v158 = vld [vmem:[%s122 + $0x38] sm:$0xff]
        %v159 = vld [vmem:[%s122 + $0x40] sm:$0xff]
        %v160 = vld [vmem:[%s122 + $0x48] sm:$0xff]
        %v161 = vld [vmem:[%s122 + $0x50] sm:$0xff]
        %v162 = vld [vmem:[%s122 + $0x58] sm:$0xff]
        %v163 = vld [vmem:[%s122 + $0x60] sm:$0xff]
        %v164 = vld [vmem:[%s122 + $0x68] sm:$0xff]
        %v165 = vld [vmem:[%s122 + $0x70] sm:$0xff]
        %v166 = vld [vmem:[%s122 + $0x78] sm:$0xff]
        %v167 = vld [vmem:[%s122 + $0x80] sm:$0xff]
        %v168 = vld [vmem:[%s122 + $0x88] sm:$0xff]
        %v169 = vld [vmem:[%s122 + $0x90] sm:$0xff]
        %v170 = vld [vmem:[%s122 + $0x98] sm:$0xff]
        %v171 = vld [vmem:[%s122 + $0xa0] sm:$0xff]
        %v172 = vld [vmem:[%s122 + $0xa8] sm:$0xff]
        %v173 = vld [vmem:[%s122 + $0xb0] sm:$0xff]
        %v174 = vld [vmem:[%s122 + $0xb8] sm:$0xff]
        %v175 = vld [vmem:[%s122 + $0xc0] sm:$0xff]
        %v176 = vld [vmem:[%s122 + $0xc8] sm:$0xff]
        %v177 = vld [vmem:[%s122 + $0xd0] sm:$0xff]
        %v178 = vld [vmem:[%s122 + $0xd8] sm:$0xff]
        %v179 = vld [vmem:[%s122 + $0xe0] sm:$0xff]
        %v180 = vld [vmem:[%s122 + $0xe8] sm:$0xff]
        %v181 = vld [vmem:[%s122 + $0xf0] sm:$0xff]
        %v182 = vld [vmem:[%s122 + $0xf8] sm:$0xff]
        %v183 = vld [vmem:[%s122 + $0x100] sm:$0xff]
        %v184 = vld [vmem:[%s122 + $0x108] sm:$0xff]
        %v185 = vld [vmem:[%s122 + $0x110] sm:$0xff]
        %v186 = vld [vmem:[%s122 + $0x118] sm:$0xff]
        %v187 = vld [vmem:[%s122 + $0x120] sm:$0xff]
        %v188 = vld [vmem:[%s122 + $0x128] sm:$0xff]
        %v189 = vld [vmem:[%s122 + $0x130] sm:$0xff]
        %v190 = vld [vmem:[%s122 + $0x138] sm:$0xff]
        %v191 = vld [vmem:[%s122 + $0x140] sm:$0xff]
        %v192 = vld [vmem:[%s122 + $0x148] sm:$0xff]
        %v193 = vld [vmem:[%s122 + $0x150] sm:$0xff]
        %v194 = vld [vmem:[%s122 + $0x158] sm:$0xff]
        %v195 = vld [vmem:[%s122 + $0x160] sm:$0xff]
        %v196 = vld [vmem:[%s122 + $0x168] sm:$0xff]
        %v197 = vld [vmem:[%s122 + $0x170] sm:$0xff]
        %v198 = vld [vmem:[%s122 + $0x178] sm:$0xff]
        %v199 = vld [vmem:[%s122 + $0x180] sm:$0xff]
        %v200 = vld [vmem:[%s122 + $0x188] sm:$0xff]
        %v201 = vld [vmem:[%s122 + $0x190] sm:$0xff]
        %v202 = vld [vmem:[%s122 + $0x198] sm:$0xff]
        %v203 = vld [vmem:[%s122 + $0x1a0] sm:$0xff]
        %v204 = vld [vmem:[%s122 + $0x1a8] sm:$0xff]
        %v205 = vld [vmem:[%s122 + $0x1b0] sm:$0xff]
        %v206 = vld [vmem:[%s122 + $0x1b8] sm:$0xff]
        %v207 = vld [vmem:[%s122 + $0x1c0] sm:$0xff]
        %v208 = vld [vmem:[%s122 + $0x1c8] sm:$0xff]
        %v209 = vld [vmem:[%s122 + $0x1d0] sm:$0xff]
        %v210 = vld [vmem:[%s122 + $0x1d8] sm:$0xff]
        %v211 = vld [vmem:[%s122 + $0x1e0] sm:$0xff]
        %v212 = vld [vmem:[%s122 + $0x1e8] sm:$0xff]
        %v213 = vld [vmem:[%s122 + $0x1f0] sm:$0xff]
        %v214 = vld [vmem:[%s122 + $0x1f8] sm:$0xff]
        %v215 = vld [vmem:[%s122 + $0x200] sm:$0xff]
        %v216 = vld [vmem:[%s122 + $0x208] sm:$0xff]
        %v217 = vld [vmem:[%s122 + $0x210] sm:$0xff]
        %v218 = vld [vmem:[%s122 + $0x218] sm:$0xff]
        %v219 = vld [vmem:[%s122 + $0x220] sm:$0xff]
        %v220 = vld [vmem:[%s122 + $0x228] sm:$0xff]
        %v221 = vld [vmem:[%s122 + $0x230] sm:$0xff]
        %v222 = vld [vmem:[%s122 + $0x238] sm:$0xff]
        %v223 = vld [vmem:[%s122 + $0x240] sm:$0xff]
        %v224 = vld [vmem:[%s122 + $0x248] sm:$0xff]
        %v225 = vld [vmem:[%s122 + $0x250] sm:$0xff]
        %v226 = vld [vmem:[%s122 + $0x258] sm:$0xff]
        %v227 = vld [vmem:[%s122 + $0x260] sm:$0xff]
        %v228 = vld [vmem:[%s122 + $0x268] sm:$0xff]
        %v229 = vld [vmem:[%s122 + $0x270] sm:$0xff]
        %v230 = vld [vmem:[%s122 + $0x278] sm:$0xff]
        %v231 = vld [vmem:[%s122 + $0x280] sm:$0xff]
        %v232 = vld [vmem:[%s122 + $0x288] sm:$0xff]
        %v233 = vld [vmem:[%s122 + $0x290] sm:$0xff]
        %v234 = vld [vmem:[%s122 + $0x298] sm:$0xff]
        %v235 = vld [vmem:[%s122 + $0x2a0] sm:$0xff]
        %v236 = vld [vmem:[%s122 + $0x2a8] sm:$0xff]
        %v237 = vld [vmem:[%s122 + $0x2b0] sm:$0xff]
        %v238 = vld [vmem:[%s122 + $0x2b8] sm:$0xff]
        %v239 = vld [vmem:[%s122 + $0x2c0] sm:$0xff]
        %v240 = vld [vmem:[%s122 + $0x2c8] sm:$0xff]
        %v241 = vld [vmem:[%s122 + $0x2d0] sm:$0xff]
        %v242 = vld [vmem:[%s122 + $0x2d8] sm:$0xff]
        %v243 = vld [vmem:[%s122 + $0x2e0] sm:$0xff]
        %v244 = vld [vmem:[%s122 + $0x2e8] sm:$0xff]
        %v245 = vld [vmem:[%s122 + $0x2f0] sm:$0xff]
        %v246 = vld [vmem:[%s122 + $0x2f8] sm:$0xff]
        %v247 = vld [vmem:[%s122 + $0x300] sm:$0xff]
        %v248 = vld [vmem:[%s122 + $0x308] sm:$0xff]
        %v249 = vld [vmem:[%s122 + $0x310] sm:$0xff]
        %v250 = vld [vmem:[%s122 + $0x318] sm:$0xff]
        %v251 = vld [vmem:[%s122 + $0x320] sm:$0xff]
        %v252 = vld [vmem:[%s122 + $0x328] sm:$0xff]
        %v253 = vld [vmem:[%s122 + $0x330] sm:$0xff]
        %v254 = vld [vmem:[%s122 + $0x338] sm:$0xff]
        %v255 = vld [vmem:[%s122 + $0x340] sm:$0xff]
        %v256 = vld [vmem:[%s122 + $0x348] sm:$0xff]
        %v257 = vld [vmem:[%s122 + $0x350] sm:$0xff]
        %v258 = vld [vmem:[%s122 + $0x358] sm:$0xff]
        %v259 = vld [vmem:[%s122 + $0x360] sm:$0xff]
        %v260 = vld [vmem:[%s122 + $0x368] sm:$0xff]
        %v261 = vld [vmem:[%s122 + $0x370] sm:$0xff]
        %v262 = vld [vmem:[%s122 + $0x378] sm:$0xff]
        %v263 = vld [vmem:[%s122 + $0x380] sm:$0xff]
        %v264 = vld [vmem:[%s122 + $0x388] sm:$0xff]
        %v265 = vld [vmem:[%s122 + $0x390] sm:$0xff]
        %v266 = vld [vmem:[%s122 + $0x398] sm:$0xff]
        %v267 = vld [vmem:[%s122 + $0x3a0] sm:$0xff]
        %v268 = vld [vmem:[%s122 + $0x3a8] sm:$0xff]
        %v269 = vld [vmem:[%s122 + $0x3b0] sm:$0xff]
        %v270 = vld [vmem:[%s122 + $0x3b8] sm:$0xff]
        %v271 = vld [vmem:[%s122 + $0x3c0] sm:$0xff]
        %v272 = vld [vmem:[%s122 + $0x3c8] sm:$0xff]
        %v273 = vld [vmem:[%s122 + $0x3d0] sm:$0xff]
        %v274 = vld [vmem:[%s122 + $0x3d8] sm:$0xff]
        %v275 = vld [vmem:[%s122 + $0x3e0] sm:$0xff]
        %v276 = vld [vmem:[%s122 + $0x3e8] sm:$0xff]
        %v277 = vld [vmem:[%s122 + $0x3f0] sm:$0xff]
        %v278 = vld [vmem:[%s122 + $0x3f8] sm:$0xff]
        %v279 = vld [vmem:[%s122 + $0x400] sm:$0xff]
        %v280 = vld [vmem:[%s122 + $0x408] sm:$0xff]
        %v281 = vld [vmem:[%s122 + $0x410] sm:$0xff]
        %v282 = vld [vmem:[%s122 + $0x418] sm:$0xff]
        %v283 = vld [vmem:[%s122 + $0x420] sm:$0xff]
        %v284 = vld [vmem:[%s122 + $0x428] sm:$0xff]
        %v285 = vld [vmem:[%s122 + $0x430] sm:$0xff]
        %v286 = vld [vmem:[%s122 + $0x438] sm:$0xff]
        %v287 = vld [vmem:[%s122 + $0x440] sm:$0xff]
        %v288 = vld [vmem:[%s122 + $0x448] sm:$0xff]
        %v289 = vld [vmem:[%s122 + $0x450] sm:$0xff]
        %v290 = vld [vmem:[%s122 + $0x458] sm:$0xff]
        %v291 = vld [vmem:[%s122 + $0x460] sm:$0xff]
        %v292 = vld [vmem:[%s122 + $0x468] sm:$0xff]
        %v293 = vld [vmem:[%s122 + $0x470] sm:$0xff]
        %v294 = vld [vmem:[%s122 + $0x478] sm:$0xff]
        %v295 = vld [vmem:[%s122 + $0x480] sm:$0xff]
        %v296 = vld [vmem:[%s122 + $0x488] sm:$0xff]
        %v297 = vld [vmem:[%s122 + $0x490] sm:$0xff]
        %v298 = vld [vmem:[%s122 + $0x498] sm:$0xff]
        %v299 = vld [vmem:[%s122 + $0x4a0] sm:$0xff]
        %v300 = vld [vmem:[%s122 + $0x4a8] sm:$0xff]
        %v301 = vld [vmem:[%s122 + $0x4b0] sm:$0xff]
        %v302 = vld [vmem:[%s122 + $0x4b8] sm:$0xff]
        %v303 = vld [vmem:[%s122 + $0x4c0] sm:$0xff]
        %v304 = vld [vmem:[%s122 + $0x4c8] sm:$0xff]
        %v305 = vld [vmem:[%s122 + $0x4d0] sm:$0xff]
        %v306 = vld [vmem:[%s122 + $0x4d8] sm:$0xff]
        %v307 = vld [vmem:[%s122 + $0x4e0] sm:$0xff]
        %v308 = vld [vmem:[%s122 + $0x4e8] sm:$0xff]
        %v309 = vld [vmem:[%s122 + $0x4f0] sm:$0xff]
        %v310 = vld [vmem:[%s122 + $0x4f8] sm:$0xff]
        %v311 = vld [vmem:[%s122 + $0x500] sm:$0xff]
        %v312 = vld [vmem:[%s122 + $0x508] sm:$0xff]
        %v313 = vld [vmem:[%s122 + $0x510] sm:$0xff]
        %v314 = vld [vmem:[%s122 + $0x518] sm:$0xff]
        %v315 = vld [vmem:[%s122 + $0x520] sm:$0xff]
        %v316 = vld [vmem:[%s122 + $0x528] sm:$0xff]
        %v317 = vld [vmem:[%s122 + $0x530] sm:$0xff]
        %v318 = vld [vmem:[%s122 + $0x538] sm:$0xff]
        %v319 = vld [vmem:[%s122 + $0x540] sm:$0xff]
        %v320 = vld [vmem:[%s122 + $0x548] sm:$0xff]
        %v321 = vld [vmem:[%s122 + $0x550] sm:$0xff]
        %v322 = vld [vmem:[%s122 + $0x558] sm:$0xff]
        %v323 = vld [vmem:[%s122 + $0x560] sm:$0xff]
        %v324 = vld [vmem:[%s122 + $0x568] sm:$0xff]
        %v325 = vld [vmem:[%s122 + $0x570] sm:$0xff]
        %v326 = vld [vmem:[%s122 + $0x578] sm:$0xff]
        %v327 = vld [vmem:[%s122 + $0x580] sm:$0xff]
        %v328 = vld [vmem:[%s122 + $0x588] sm:$0xff]
        %v329 = vld [vmem:[%s122 + $0x590] sm:$0xff]
        %v330 = vld [vmem:[%s122 + $0x598] sm:$0xff]
        %v331 = vld [vmem:[%s122 + $0x5a0] sm:$0xff]
        %v332 = vld [vmem:[%s122 + $0x5a8] sm:$0xff]
        %v333 = vld [vmem:[%s122 + $0x5b0] sm:$0xff]
        %v334 = vld [vmem:[%s122 + $0x5b8] sm:$0xff]
        %v335 = vld [vmem:[%s122 + $0x5c0] sm:$0xff]
        %v336 = vld [vmem:[%s122 + $0x5c8] sm:$0xff]
        %v337 = vld [vmem:[%s122 + $0x5d0] sm:$0xff]
        %v338 = vld [vmem:[%s122 + $0x5d8] sm:$0xff]
        %v339 = vld [vmem:[%s122 + $0x5e0] sm:$0xff]
        %v340 = vld [vmem:[%s122 + $0x5e8] sm:$0xff]
        %v341 = vld [vmem:[%s122 + $0x5f0] sm:$0xff]
        %v342 = vld [vmem:[%s122 + $0x5f8] sm:$0xff]
        %v343 = vld [vmem:[%s122 + $0x600] sm:$0xff]
        %v344 = vld [vmem:[%s122 + $0x608] sm:$0xff]
        %v345 = vld [vmem:[%s122 + $0x610] sm:$0xff]
        %v346 = vld [vmem:[%s122 + $0x618] sm:$0xff]
        %v347 = vld [vmem:[%s122 + $0x620] sm:$0xff]
        %v348 = vld [vmem:[%s122 + $0x628] sm:$0xff]
        %v349 = vld [vmem:[%s122 + $0x630] sm:$0xff]
        %v350 = vld [vmem:[%s122 + $0x638] sm:$0xff]
        %v351 = vld [vmem:[%s122 + $0x640] sm:$0xff]
        %v352 = vld [vmem:[%s122 + $0x648] sm:$0xff]
        %v353 = vld [vmem:[%s122 + $0x650] sm:$0xff]
        %v354 = vld [vmem:[%s122 + $0x658] sm:$0xff]
        %v355 = vld [vmem:[%s122 + $0x660] sm:$0xff]
        %v356 = vld [vmem:[%s122 + $0x668] sm:$0xff]
        %v357 = vld [vmem:[%s122 + $0x670] sm:$0xff]
        %v358 = vld [vmem:[%s122 + $0x678] sm:$0xff]
        %v359 = vld [vmem:[%s122 + $0x680] sm:$0xff]
        %v360 = vld [vmem:[%s122 + $0x688] sm:$0xff]
        %v361 = vld [vmem:[%s122 + $0x690] sm:$0xff]
        %v362 = vld [vmem:[%s122 + $0x698] sm:$0xff]
        %v363 = vld [vmem:[%s122 + $0x6a0] sm:$0xff]
        %v364 = vld [vmem:[%s122 + $0x6a8] sm:$0xff]
        %v365 = vld [vmem:[%s122 + $0x6b0] sm:$0xff]
        %v366 = vld [vmem:[%s122 + $0x6b8] sm:$0xff]
        %v367 = vld [vmem:[%s122 + $0x6c0] sm:$0xff]
        %v368 = vld [vmem:[%s122 + $0x6c8] sm:$0xff]
        %v369 = vld [vmem:[%s122 + $0x6d0] sm:$0xff]
        %v370 = vld [vmem:[%s122 + $0x6d8] sm:$0xff]
        %v371 = vld [vmem:[%s122 + $0x6e0] sm:$0xff]
        %v372 = vld [vmem:[%s122 + $0x6e8] sm:$0xff]
        %v373 = vld [vmem:[%s122 + $0x6f0] sm:$0xff]
        %v374 = vld [vmem:[%s122 + $0x6f8] sm:$0xff]
        %v375 = vld [vmem:[%s122 + $0x700] sm:$0xff]
        %v376 = vld [vmem:[%s122 + $0x708] sm:$0xff]
        %v377 = vld [vmem:[%s122 + $0x710] sm:$0xff]
        %v378 = vld [vmem:[%s122 + $0x718] sm:$0xff]
        %v379 = vld [vmem:[%s122 + $0x720] sm:$0xff]
        %v380 = vld [vmem:[%s122 + $0x728] sm:$0xff]
        %v381 = vld [vmem:[%s122 + $0x730] sm:$0xff]
        %v382 = vld [vmem:[%s122 + $0x738] sm:$0xff]
        %v383 = vld [vmem:[%s122 + $0x740] sm:$0xff]
        %v384 = vld [vmem:[%s122 + $0x748] sm:$0xff]
        %v385 = vld [vmem:[%s122 + $0x750] sm:$0xff]
        %v386 = vld [vmem:[%s122 + $0x758] sm:$0xff]
        %v387 = vld [vmem:[%s122 + $0x760] sm:$0xff]
        %v388 = vld [vmem:[%s122 + $0x768] sm:$0xff]
        %v389 = vld [vmem:[%s122 + $0x770] sm:$0xff]
        %v390 = vld [vmem:[%s122 + $0x778] sm:$0xff]
        %v391 = vld [vmem:[%s122 + $0x780] sm:$0xff]
        %v392 = vld [vmem:[%s122 + $0x788] sm:$0xff]
        %v393 = vld [vmem:[%s122 + $0x790] sm:$0xff]
        %v394 = vld [vmem:[%s122 + $0x798] sm:$0xff]
        %v395 = vld [vmem:[%s122 + $0x7a0] sm:$0xff]
        %v396 = vld [vmem:[%s122 + $0x7a8] sm:$0xff]
        %v397 = vld [vmem:[%s122 + $0x7b0] sm:$0xff]
        %v398 = vld [vmem:[%s122 + $0x7b8] sm:$0xff]
        %v399 = vld [vmem:[%s122 + $0x7c0] sm:$0xff]
        %v400 = vld [vmem:[%s122 + $0x7c8] sm:$0xff]
        %v401 = vld [vmem:[%s122 + $0x7d0] sm:$0xff]
        %v402 = vld [vmem:[%s122 + $0x7d8] sm:$0xff]
        %v403 = vld [vmem:[%s122 + $0x7e0] sm:$0xff]
        %v404 = vld [vmem:[%s122 + $0x7e8] sm:$0xff]
        %v405 = vld [vmem:[%s122 + $0x7f0] sm:$0xff]
        %v406 = vld [vmem:[%s122 + $0x7f8] sm:$0xff]
        %v407 = vld [vmem:[%s122 + $0x800] sm:$0xff]
        %v408 = vld [vmem:[%s122 + $0x808] sm:$0xff]
        %v409 = vld [vmem:[%s122 + $0x810] sm:$0xff]
        %v410 = vld [vmem:[%s122 + $0x818] sm:$0xff]
        %v411 = vld [vmem:[%s122 + $0x820] sm:$0xff]
        %v412 = vld [vmem:[%s122 + $0x828] sm:$0xff]
        %v413 = vld [vmem:[%s122 + $0x830] sm:$0xff]
        %v414 = vld [vmem:[%s122 + $0x838] sm:$0xff]
        %v415 = vld [vmem:[%s122 + $0x840] sm:$0xff]
        %v416 = vld [vmem:[%s122 + $0x848] sm:$0xff]
        %v417 = vld [vmem:[%s122 + $0x850] sm:$0xff]
        %v418 = vld [vmem:[%s122 + $0x858] sm:$0xff]
        %v419 = vld [vmem:[%s122 + $0x860] sm:$0xff]
        %v420 = vld [vmem:[%s122 + $0x868] sm:$0xff]
        %v421 = vld [vmem:[%s122 + $0x870] sm:$0xff]
        %v422 = vld [vmem:[%s122 + $0x878] sm:$0xff]
        %v423 = vld [vmem:[%s122 + $0x880] sm:$0xff]
        %v424 = vld [vmem:[%s122 + $0x888] sm:$0xff]
        %v425 = vld [vmem:[%s122 + $0x890] sm:$0xff]
        %v426 = vld [vmem:[%s122 + $0x898] sm:$0xff]
        %v427 = vld [vmem:[%s122 + $0x8a0] sm:$0xff]
        %v428 = vld [vmem:[%s122 + $0x8a8] sm:$0xff]
        %v429 = vld [vmem:[%s122 + $0x8b0] sm:$0xff]
        %v430 = vld [vmem:[%s122 + $0x8b8] sm:$0xff]
        %v431 = vld [vmem:[%s122 + $0x8c0] sm:$0xff]
        %v432 = vld [vmem:[%s122 + $0x8c8] sm:$0xff]
        %v433 = vld [vmem:[%s122 + $0x8d0] sm:$0xff]
        %v434 = vld [vmem:[%s122 + $0x8d8] sm:$0xff]
        %v435 = vld [vmem:[%s122 + $0x8e0] sm:$0xff]
        %v436 = vld [vmem:[%s122 + $0x8e8] sm:$0xff]
        %v437 = vld [vmem:[%s122 + $0x8f0] sm:$0xff]
        %v438 = vld [vmem:[%s122 + $0x8f8] sm:$0xff]
        %v439 = vld [vmem:[%s122 + $0x900] sm:$0xff]
        %v440 = vld [vmem:[%s122 + $0x908] sm:$0xff]
        %v441 = vld [vmem:[%s122 + $0x910] sm:$0xff]
        %v442 = vld [vmem:[%s122 + $0x918] sm:$0xff]
        %v443 = vld [vmem:[%s122 + $0x920] sm:$0xff]
        %v444 = vld [vmem:[%s122 + $0x928] sm:$0xff]
        %v445 = vld [vmem:[%s122 + $0x930] sm:$0xff]
        %v446 = vld [vmem:[%s122 + $0x938] sm:$0xff]
        %v447 = vld [vmem:[%s122 + $0x940] sm:$0xff]
        %v448 = vld [vmem:[%s122 + $0x948] sm:$0xff]
        %v449 = vld [vmem:[%s122 + $0x950] sm:$0xff]
        %v450 = vld [vmem:[%s122 + $0x958] sm:$0xff]
        %v451 = vld [vmem:[%s122 + $0x960] sm:$0xff]
        %v452 = vld [vmem:[%s122 + $0x968] sm:$0xff]
        %v453 = vld [vmem:[%s122 + $0x970] sm:$0xff]
        %v454 = vld [vmem:[%s122 + $0x978] sm:$0xff]
        %v455 = vld [vmem:[%s122 + $0x980] sm:$0xff]
        %v456 = vld [vmem:[%s122 + $0x988] sm:$0xff]
        %v457 = vld [vmem:[%s122 + $0x990] sm:$0xff]
        %v458 = vld [vmem:[%s122 + $0x998] sm:$0xff]
        %v459 = vld [vmem:[%s122 + $0x9a0] sm:$0xff]
        %v460 = vld [vmem:[%s122 + $0x9a8] sm:$0xff]
        %v461 = vld [vmem:[%s122 + $0x9b0] sm:$0xff]
        %v462 = vld [vmem:[%s122 + $0x9b8] sm:$0xff]
        %v463 = vld [vmem:[%s122 + $0x9c0] sm:$0xff]
        %v464 = vld [vmem:[%s122 + $0x9c8] sm:$0xff]
        %v465 = vld [vmem:[%s122 + $0x9d0] sm:$0xff]
        %v466 = vld [vmem:[%s122 + $0x9d8] sm:$0xff]
        %v467 = vld [vmem:[%s122 + $0x9e0] sm:$0xff]
        %v468 = vld [vmem:[%s122 + $0x9e8] sm:$0xff]
        %v469 = vld [vmem:[%s122 + $0x9f0] sm:$0xff]
        %v470 = vld [vmem:[%s122 + $0x9f8] sm:$0xff]
        %v471 = vld [vmem:[%s122 + $0xa00] sm:$0xff]
        %v472 = vld [vmem:[%s122 + $0xa08] sm:$0xff]
        %v473 = vld [vmem:[%s122 + $0xa10] sm:$0xff]
        %v474 = vld [vmem:[%s122 + $0xa18] sm:$0xff]
        %v475 = vld [vmem:[%s122 + $0xa20] sm:$0xff]
        %v476 = vld [vmem:[%s122 + $0xa28] sm:$0xff]
        %v477 = vld [vmem:[%s122 + $0xa30] sm:$0xff]
        %v478 = vld [vmem:[%s122 + $0xa38] sm:$0xff]
        %v479 = vld [vmem:[%s122 + $0xa40] sm:$0xff]
        %v480 = vld [vmem:[%s122 + $0xa48] sm:$0xff]
        %v481 = vld [vmem:[%s122 + $0xa50] sm:$0xff]
        %v482 = vld [vmem:[%s122 + $0xa58] sm:$0xff]
        %v483 = vld [vmem:[%s122 + $0xa60] sm:$0xff]
        %v484 = vld [vmem:[%s122 + $0xa68] sm:$0xff]
        %v485 = vld [vmem:[%s122 + $0xa70] sm:$0xff]
        %v486 = vld [vmem:[%s122 + $0xa78] sm:$0xff]
        %v487 = vld [vmem:[%s122 + $0xa80] sm:$0xff]
        %v488 = vld [vmem:[%s122 + $0xa88] sm:$0xff]
        %v489 = vld [vmem:[%s122 + $0xa90] sm:$0xff]
        %v490 = vld [vmem:[%s122 + $0xa98] sm:$0xff]
        %v491 = vld [vmem:[%s122 + $0xaa0] sm:$0xff]
        %v492 = vld [vmem:[%s122 + $0xaa8] sm:$0xff]
        %v493 = vld [vmem:[%s122 + $0xab0] sm:$0xff]
        %v494 = vld [vmem:[%s122 + $0xab8] sm:$0xff]
        %v495 = vld [vmem:[%s122 + $0xac0] sm:$0xff]
        %v496 = vld [vmem:[%s122 + $0xac8] sm:$0xff]
        %v497 = vld [vmem:[%s122 + $0xad0] sm:$0xff]
        %v498 = vld [vmem:[%s122 + $0xad8] sm:$0xff]
        %v499 = vld [vmem:[%s122 + $0xae0] sm:$0xff]
        %v500 = vld [vmem:[%s122 + $0xae8] sm:$0xff]
        %v501 = vld [vmem:[%s122 + $0xaf0] sm:$0xff]
        %v502 = vld [vmem:[%s122 + $0xaf8] sm:$0xff]
        %v503 = vld [vmem:[%s122 + $0xb00] sm:$0xff]
        %v504 = vld [vmem:[%s122 + $0xb08] sm:$0xff]
        %v505 = vld [vmem:[%s122 + $0xb10] sm:$0xff]
        %v506 = vld [vmem:[%s122 + $0xb18] sm:$0xff]
        %v507 = vld [vmem:[%s122 + $0xb20] sm:$0xff]
        %v508 = vld [vmem:[%s122 + $0xb28] sm:$0xff]
        %v509 = vld [vmem:[%s122 + $0xb30] sm:$0xff]
        %v510 = vld [vmem:[%s122 + $0xb38] sm:$0xff]
        %v511 = vld [vmem:[%s122 + $0xb40] sm:$0xff]
        %v512 = vld [vmem:[%s122 + $0xb48] sm:$0xff]
        %v513 = vld [vmem:[%s122 + $0xb50] sm:$0xff]
        %v514 = vld [vmem:[%s122 + $0xb58] sm:$0xff]
        %v515 = vld [vmem:[%s122 + $0xb60] sm:$0xff]
        %v516 = vld [vmem:[%s122 + $0xb68] sm:$0xff]
        %v517 = vld [vmem:[%s122 + $0xb70] sm:$0xff]
        %v518 = vld [vmem:[%s122 + $0xb78] sm:$0xff]
        %v519 = vld [vmem:[%s122 + $0xb80] sm:$0xff]
        %v520 = vld [vmem:[%s122 + $0xb88] sm:$0xff]
        %v521 = vld [vmem:[%s122 + $0xb90] sm:$0xff]
        %v522 = vld [vmem:[%s122 + $0xb98] sm:$0xff]
        %v523 = vld [vmem:[%s122 + $0xba0] sm:$0xff]
        %v524 = vld [vmem:[%s122 + $0xba8] sm:$0xff]
        %v525 = vld [vmem:[%s122 + $0xbb0] sm:$0xff]
        %v526 = vld [vmem:[%s122 + $0xbb8] sm:$0xff]
        %v527 = vld [vmem:[%s122 + $0xbc0] sm:$0xff]
        %v528 = vld [vmem:[%s122 + $0xbc8] sm:$0xff]
        %v529 = vld [vmem:[%s122 + $0xbd0] sm:$0xff]
        %v530 = vld [vmem:[%s122 + $0xbd8] sm:$0xff]
        %v531 = vld [vmem:[%s122 + $0xbe0] sm:$0xff]
        %v532 = vld [vmem:[%s122 + $0xbe8] sm:$0xff]
        %v533 = vld [vmem:[%s122 + $0xbf0] sm:$0xff]
        %v534 = vld [vmem:[%s122 + $0xbf8] sm:$0xff]
        %v535 = vld [vmem:[%s122 + $0xc00] sm:$0xff]
        %v536 = vld [vmem:[%s122 + $0xc08] sm:$0xff]
        %v537 = vld [vmem:[%s122 + $0xc10] sm:$0xff]
        %v538 = vld [vmem:[%s122 + $0xc18] sm:$0xff]
        %v539 = vld [vmem:[%s122 + $0xc20] sm:$0xff]
        %v540 = vld [vmem:[%s122 + $0xc28] sm:$0xff]
        %v541 = vld [vmem:[%s122 + $0xc30] sm:$0xff]
        %v542 = vld [vmem:[%s122 + $0xc38] sm:$0xff]
        %v543 = vld [vmem:[%s122 + $0xc40] sm:$0xff]
        %v544 = vld [vmem:[%s122 + $0xc48] sm:$0xff]
        %v545 = vld [vmem:[%s122 + $0xc50] sm:$0xff]
        %v546 = vld [vmem:[%s122 + $0xc58] sm:$0xff]
        %v547 = vld [vmem:[%s122 + $0xc60] sm:$0xff]
        %v548 = vld [vmem:[%s122 + $0xc68] sm:$0xff]
        %v549 = vld [vmem:[%s122 + $0xc70] sm:$0xff]
        %v550 = vld [vmem:[%s122 + $0xc78] sm:$0xff]
        %v551 = vld [vmem:[%s122 + $0xc80] sm:$0xff]
        %v552 = vld [vmem:[%s122 + $0xc88] sm:$0xff]
        %v553 = vld [vmem:[%s122 + $0xc90] sm:$0xff]
        %v554 = vld [vmem:[%s122 + $0xc98] sm:$0xff]
        %v555 = vld [vmem:[%s122 + $0xca0] sm:$0xff]
        %v556 = vld [vmem:[%s122 + $0xca8] sm:$0xff]
        %v557 = vld [vmem:[%s122 + $0xcb0] sm:$0xff]
        %v558 = vld [vmem:[%s122 + $0xcb8] sm:$0xff]
        %v559 = vld [vmem:[%s122 + $0xcc0] sm:$0xff]
        %v560 = vld [vmem:[%s122 + $0xcc8] sm:$0xff]
        %v561 = vld [vmem:[%s122 + $0xcd0] sm:$0xff]
        %v562 = vld [vmem:[%s122 + $0xcd8] sm:$0xff]
        %v563 = vld [vmem:[%s122 + $0xce0] sm:$0xff]
        %v564 = vld [vmem:[%s122 + $0xce8] sm:$0xff]
        %v565 = vld [vmem:[%s122 + $0xcf0] sm:$0xff]
        %v566 = vld [vmem:[%s122 + $0xcf8] sm:$0xff]
        %v567 = vld [vmem:[%s122 + $0xd00] sm:$0xff]
        %v568 = vld [vmem:[%s122 + $0xd08] sm:$0xff]
        %v569 = vld [vmem:[%s122 + $0xd10] sm:$0xff]
        %v570 = vld [vmem:[%s122 + $0xd18] sm:$0xff]
        %v571 = vld [vmem:[%s122 + $0xd20] sm:$0xff]
        %v572 = vld [vmem:[%s122 + $0xd28] sm:$0xff]
        %v573 = vld [vmem:[%s122 + $0xd30] sm:$0xff]
        %v574 = vld [vmem:[%s122 + $0xd38] sm:$0xff]
        %v575 = vld [vmem:[%s122 + $0xd40] sm:$0xff]
        %v576 = vld [vmem:[%s122 + $0xd48] sm:$0xff]
        %v577 = vld [vmem:[%s122 + $0xd50] sm:$0xff]
        %v578 = vld [vmem:[%s122 + $0xd58] sm:$0xff]
        %v579 = vld [vmem:[%s122 + $0xd60] sm:$0xff]
        %v580 = vld [vmem:[%s122 + $0xd68] sm:$0xff]
        %v581 = vld [vmem:[%s122 + $0xd70] sm:$0xff]
        %v582 = vld [vmem:[%s122 + $0xd78] sm:$0xff]
        %v583 = vld [vmem:[%s122 + $0xd80] sm:$0xff]
        %v584 = vld [vmem:[%s122 + $0xd88] sm:$0xff]
        %v585 = vld [vmem:[%s122 + $0xd90] sm:$0xff]
        %v586 = vld [vmem:[%s122 + $0xd98] sm:$0xff]
        %v587 = vld [vmem:[%s122 + $0xda0] sm:$0xff]
        %v588 = vld [vmem:[%s122 + $0xda8] sm:$0xff]
        %v589 = vld [vmem:[%s122 + $0xdb0] sm:$0xff]
        %v590 = vld [vmem:[%s122 + $0xdb8] sm:$0xff]
        %v591 = vld [vmem:[%s122 + $0xdc0] sm:$0xff]
        %v592 = vld [vmem:[%s122 + $0xdc8] sm:$0xff]
        %v593 = vld [vmem:[%s122 + $0xdd0] sm:$0xff]
        %v594 = vld [vmem:[%s122 + $0xdd8] sm:$0xff]
        %v595 = vld [vmem:[%s122 + $0xde0] sm:$0xff]
        %v596 = vld [vmem:[%s122 + $0xde8] sm:$0xff]
        %v597 = vld [vmem:[%s122 + $0xdf0] sm:$0xff]
        %v598 = vld [vmem:[%s122 + $0xdf8] sm:$0xff]
        %v599 = vld [vmem:[%s122 + $0xe00] sm:$0xff]
        %v600 = vld [vmem:[%s122 + $0xe08] sm:$0xff]
        %v601 = vld [vmem:[%s122 + $0xe10] sm:$0xff]
        %v602 = vld [vmem:[%s122 + $0xe18] sm:$0xff]
        %v603 = vld [vmem:[%s122 + $0xe20] sm:$0xff]
        %v604 = vld [vmem:[%s122 + $0xe28] sm:$0xff]
        %v605 = vld [vmem:[%s122 + $0xe30] sm:$0xff]
        %v606 = vld [vmem:[%s122 + $0xe38] sm:$0xff]
        %v607 = vld [vmem:[%s122 + $0xe40] sm:$0xff]
        %v608 = vld [vmem:[%s122 + $0xe48] sm:$0xff]
        %v609 = vld [vmem:[%s122 + $0xe50] sm:$0xff]
        %v610 = vld [vmem:[%s122 + $0xe58] sm:$0xff]
        %v611 = vld [vmem:[%s122 + $0xe60] sm:$0xff]
        %v612 = vld [vmem:[%s122 + $0xe68] sm:$0xff]
        %v613 = vld [vmem:[%s122 + $0xe70] sm:$0xff]
        %v614 = vld [vmem:[%s122 + $0xe78] sm:$0xff]
        %v615 = vld [vmem:[%s122 + $0xe80] sm:$0xff]
        %v616 = vld [vmem:[%s122 + $0xe88] sm:$0xff]
        %v617 = vld [vmem:[%s122 + $0xe90] sm:$0xff]
        %v618 = vld [vmem:[%s122 + $0xe98] sm:$0xff]
        %v619 = vld [vmem:[%s122 + $0xea0] sm:$0xff]
        %v620 = vld [vmem:[%s122 + $0xea8] sm:$0xff]
        %v621 = vld [vmem:[%s122 + $0xeb0] sm:$0xff]
        %v622 = vld [vmem:[%s122 + $0xeb8] sm:$0xff]
        %v623 = vld [vmem:[%s122 + $0xec0] sm:$0xff]
        %v624 = vld [vmem:[%s122 + $0xec8] sm:$0xff]
        %v625 = vld [vmem:[%s122 + $0xed0] sm:$0xff]
        %v626 = vld [vmem:[%s122 + $0xed8] sm:$0xff]
        %v627 = vld [vmem:[%s122 + $0xee0] sm:$0xff]
        %v628 = vld [vmem:[%s122 + $0xee8] sm:$0xff]
        %v629 = vld [vmem:[%s122 + $0xef0] sm:$0xff]
        %v630 = vld [vmem:[%s122 + $0xef8] sm:$0xff]
        %v631 = vld [vmem:[%s122 + $0xf00] sm:$0xff]
        %v632 = vld [vmem:[%s122 + $0xf08] sm:$0xff]
        %v633 = vld [vmem:[%s122 + $0xf10] sm:$0xff]
        %v634 = vld [vmem:[%s122 + $0xf18] sm:$0xff]
        %v635 = vld [vmem:[%s122 + $0xf20] sm:$0xff]
        %v636 = vld [vmem:[%s122 + $0xf28] sm:$0xff]
        %v637 = vld [vmem:[%s122 + $0xf30] sm:$0xff]
        %v638 = vld [vmem:[%s122 + $0xf38] sm:$0xff]
        %v639 = vld [vmem:[%s122 + $0xf40] sm:$0xff]
        %v640 = vld [vmem:[%s122 + $0xf48] sm:$0xff]
        %v641 = vld [vmem:[%s122 + $0xf50] sm:$0xff]
        %v642 = vld [vmem:[%s122 + $0xf58] sm:$0xff]
        %v643 = vld [vmem:[%s122 + $0xf60] sm:$0xff]
        %v644 = vld [vmem:[%s122 + $0xf68] sm:$0xff]
        %v645 = vld [vmem:[%s122 + $0xf70] sm:$0xff]
        %v646 = vld [vmem:[%s122 + $0xf78] sm:$0xff]
        %v647 = vld [vmem:[%s122 + $0xf80] sm:$0xff]
        %v648 = vld [vmem:[%s122 + $0xf88] sm:$0xff]
        %v649 = vld [vmem:[%s122 + $0xf90] sm:$0xff]
        %v650 = vld [vmem:[%s122 + $0xf98] sm:$0xff]
        %v651 = vld [vmem:[%s122 + $0xfa0] sm:$0xff]
        %v652 = vld [vmem:[%s122 + $0xfa8] sm:$0xff]
        %v653 = vld [vmem:[%s122 + $0xfb0] sm:$0xff]
        %v654 = vld [vmem:[%s122 + $0xfb8] sm:$0xff]
        %v655 = vld [vmem:[%s122 + $0xfc0] sm:$0xff]
        %v656 = vld [vmem:[%s122 + $0xfc8] sm:$0xff]
        %v657 = vld [vmem:[%s122 + $0xfd0] sm:$0xff]
        %v658 = vld [vmem:[%s122 + $0xfd8] sm:$0xff]
        %v659 = vld [vmem:[%s122 + $0xfe0] sm:$0xff]
        %v660 = vld [vmem:[%s122 + $0xfe8] sm:$0xff]
        %v661 = vld [vmem:[%s122 + $0xff0] sm:$0xff]
        %v662 = vld [vmem:[%s122 + $0xff8] sm:$0xff]
        %v663 = vld [vmem:[%s122 + $0x1000] sm:$0xff]
        %v664 = vld [vmem:[%s122 + $0x1008] sm:$0xff]
        %v665 = vld [vmem:[%s122 + $0x1010] sm:$0xff]
        %v666 = vld [vmem:[%s122 + $0x1018] sm:$0xff]
        %v667 = vld [vmem:[%s122 + $0x1020] sm:$0xff]
        %v668 = vld [vmem:[%s122 + $0x1028] sm:$0xff]
        %v669 = vld [vmem:[%s122 + $0x1030] sm:$0xff]
        %v670 = vld [vmem:[%s122 + $0x1038] sm:$0xff]
        %v671 = vld [vmem:[%s122 + $0x1040] sm:$0xff]
        %v672 = vld [vmem:[%s122 + $0x1048] sm:$0xff]
        %v673 = vld [vmem:[%s122 + $0x1050] sm:$0xff]
        %v674 = vld [vmem:[%s122 + $0x1058] sm:$0xff]
        %v675 = vld [vmem:[%s122 + $0x1060] sm:$0xff]
        %v676 = vld [vmem:[%s122 + $0x1068] sm:$0xff]
        %v677 = vld [vmem:[%s122 + $0x1070] sm:$0xff]
        %v678 = vld [vmem:[%s122 + $0x1078] sm:$0xff]
        %v679 = vld [vmem:[%s122 + $0x1080] sm:$0xff]
        %v680 = vld [vmem:[%s122 + $0x1088] sm:$0xff]
        %v681 = vld [vmem:[%s122 + $0x1090] sm:$0xff]
        %v682 = vld [vmem:[%s122 + $0x1098] sm:$0xff]
        %v683 = vld [vmem:[%s122 + $0x10a0] sm:$0xff]
        %v684 = vld [vmem:[%s122 + $0x10a8] sm:$0xff]
        %v685 = vld [vmem:[%s122 + $0x10b0] sm:$0xff]
        %v686 = vld [vmem:[%s122 + $0x10b8] sm:$0xff]
        %v687 = vld [vmem:[%s122 + $0x10c0] sm:$0xff]
        %v688 = vld [vmem:[%s122 + $0x10c8] sm:$0xff]
        %v689 = vld [vmem:[%s122 + $0x10d0] sm:$0xff]
        %v690 = vld [vmem:[%s122 + $0x10d8] sm:$0xff]
        %v691 = vld [vmem:[%s122 + $0x10e0] sm:$0xff]
        %v692 = vld [vmem:[%s122 + $0x10e8] sm:$0xff]
        %v693 = vld [vmem:[%s122 + $0x10f0] sm:$0xff]
        %v694 = vld [vmem:[%s122 + $0x10f8] sm:$0xff]
        %v695 = vld [vmem:[%s122 + $0x1100] sm:$0xff]
        %v696 = vld [vmem:[%s122 + $0x1108] sm:$0xff]
        %v697 = vld [vmem:[%s122 + $0x1110] sm:$0xff]
        %v698 = vld [vmem:[%s122 + $0x1118] sm:$0xff]
        %v699 = vld [vmem:[%s122 + $0x1120] sm:$0xff]
        %v700 = vld [vmem:[%s122 + $0x1128] sm:$0xff]
        %v701 = vld [vmem:[%s122 + $0x1130] sm:$0xff]
        %v702 = vld [vmem:[%s122 + $0x1138] sm:$0xff]
        %v703 = vld [vmem:[%s122 + $0x1140] sm:$0xff]
        %v704 = vld [vmem:[%s122 + $0x1148] sm:$0xff]
        %v705 = vld [vmem:[%s122 + $0x1150] sm:$0xff]
        %v706 = vld [vmem:[%s122 + $0x1158] sm:$0xff]
        %v707 = vld [vmem:[%s122 + $0x1160] sm:$0xff]
        %v708 = vld [vmem:[%s122 + $0x1168] sm:$0xff]
        %v709 = vld [vmem:[%s122 + $0x1170] sm:$0xff]
        %v710 = vld [vmem:[%s122 + $0x1178] sm:$0xff]
        %v711 = vld [vmem:[%s122 + $0x1180] sm:$0xff]
        %v712 = vld [vmem:[%s122 + $0x1188] sm:$0xff]
        %v713 = vld [vmem:[%s122 + $0x1190] sm:$0xff]
        %v714 = vld [vmem:[%s122 + $0x1198] sm:$0xff]
        %v715 = vld [vmem:[%s122 + $0x11a0] sm:$0xff]
        %v716 = vld [vmem:[%s122 + $0x11a8] sm:$0xff]
        %v717 = vld [vmem:[%s122 + $0x11b0] sm:$0xff]
        %v718 = vld [vmem:[%s122 + $0x11b8] sm:$0xff]
        %v719 = vld [vmem:[%s122 + $0x11c0] sm:$0xff]
        %v720 = vld [vmem:[%s122 + $0x11c8] sm:$0xff]
        %v721 = vld [vmem:[%s122 + $0x11d0] sm:$0xff]
        %v722 = vld [vmem:[%s122 + $0x11d8] sm:$0xff]
        %v723 = vld [vmem:[%s122 + $0x11e0] sm:$0xff]
        %v724 = vld [vmem:[%s122 + $0x11e8] sm:$0xff]
        %v725 = vld [vmem:[%s122 + $0x11f0] sm:$0xff]
        %v726 = vld [vmem:[%s122 + $0x11f8] sm:$0xff]
        %v727 = vld [vmem:[%s122 + $0x1200] sm:$0xff]
        %v728 = vld [vmem:[%s122 + $0x1208] sm:$0xff]
        %v729 = vld [vmem:[%s122 + $0x1210] sm:$0xff]
        %v730 = vld [vmem:[%s122 + $0x1218] sm:$0xff]
        %v731 = vld [vmem:[%s122 + $0x1220] sm:$0xff]
        %v732 = vld [vmem:[%s122 + $0x1228] sm:$0xff]
        %v733 = vld [vmem:[%s122 + $0x1230] sm:$0xff]
        %v734 = vld [vmem:[%s122 + $0x1238] sm:$0xff]
        %v735 = vld [vmem:[%s122 + $0x1240] sm:$0xff]
        %v736 = vld [vmem:[%s122 + $0x1248] sm:$0xff]
        %v737 = vld [vmem:[%s122 + $0x1250] sm:$0xff]
        %v738 = vld [vmem:[%s122 + $0x1258] sm:$0xff]
        %v739 = vld [vmem:[%s122 + $0x1260] sm:$0xff]
        %v740 = vld [vmem:[%s122 + $0x1268] sm:$0xff]
        %v741 = vld [vmem:[%s122 + $0x1270] sm:$0xff]
        %v742 = vld [vmem:[%s122 + $0x1278] sm:$0xff]
        %v743 = vld [vmem:[%s122 + $0x1280] sm:$0xff]
        %v744 = vld [vmem:[%s122 + $0x1288] sm:$0xff]
        %v745 = vld [vmem:[%s122 + $0x1290] sm:$0xff]
        %v746 = vld [vmem:[%s122 + $0x1298] sm:$0xff]
        %v747 = vld [vmem:[%s122 + $0x12a0] sm:$0xff]
        %v748 = vld [vmem:[%s122 + $0x12a8] sm:$0xff]
        %v749 = vld [vmem:[%s122 + $0x12b0] sm:$0xff]
        %v750 = vld [vmem:[%s122 + $0x12b8] sm:$0xff]
        %v751 = vld [vmem:[%s122 + $0x12c0] sm:$0xff]
        %v752 = vld [vmem:[%s122 + $0x12c8] sm:$0xff]
        %v753 = vld [vmem:[%s122 + $0x12d0] sm:$0xff]
        %v754 = vld [vmem:[%s122 + $0x12d8] sm:$0xff]
        %v755 = vld [vmem:[%s122 + $0x12e0] sm:$0xff]
        %v756 = vld [vmem:[%s122 + $0x12e8] sm:$0xff]
        %v757 = vld [vmem:[%s122 + $0x12f0] sm:$0xff]
        %v758 = vld [vmem:[%s122 + $0x12f8] sm:$0xff]
        %v759 = vld [vmem:[%s122 + $0x1300] sm:$0xff]
        %v760 = vld [vmem:[%s122 + $0x1308] sm:$0xff]
        %v761 = vld [vmem:[%s122 + $0x1310] sm:$0xff]
        %v762 = vld [vmem:[%s122 + $0x1318] sm:$0xff]
        %v763 = vld [vmem:[%s122 + $0x1320] sm:$0xff]
        %v764 = vld [vmem:[%s122 + $0x1328] sm:$0xff]
        %v765 = vld [vmem:[%s122 + $0x1330] sm:$0xff]
        %v766 = vld [vmem:[%s122 + $0x1338] sm:$0xff]
        %v767 = vld [vmem:[%s122 + $0x1340] sm:$0xff]
        %v768 = vld [vmem:[%s122 + $0x1348] sm:$0xff]
        %v769 = vld [vmem:[%s122 + $0x1350] sm:$0xff]
        %v770 = vld [vmem:[%s122 + $0x1358] sm:$0xff]
        %v771 = vld [vmem:[%s122 + $0x1360] sm:$0xff]
        %v772 = vld [vmem:[%s122 + $0x1368] sm:$0xff]
        %v773 = vld [vmem:[%s122 + $0x1370] sm:$0xff]
        %v774 = vld [vmem:[%s122 + $0x1378] sm:$0xff]
        %v775 = vld [vmem:[%s122 + $0x1380] sm:$0xff]
        %v776 = vld [vmem:[%s122 + $0x1388] sm:$0xff]
        %v777 = vld [vmem:[%s122 + $0x1390] sm:$0xff]
        %v778 = vld [vmem:[%s122 + $0x1398] sm:$0xff]
        %v779 = vld [vmem:[%s122 + $0x13a0] sm:$0xff]
        %v780 = vld [vmem:[%s122 + $0x13a8] sm:$0xff]
        %v781 = vld [vmem:[%s122 + $0x13b0] sm:$0xff]
        %v782 = vld [vmem:[%s122 + $0x13b8] sm:$0xff]
        %v783 = vld [vmem:[%s122 + $0x13c0] sm:$0xff]
        %v784 = vld [vmem:[%s122 + $0x13c8] sm:$0xff]
        %v785 = vld [vmem:[%s122 + $0x13d0] sm:$0xff]
        %v786 = vld [vmem:[%s122 + $0x13d8] sm:$0xff]
        %v787 = vld [vmem:[%s122 + $0x13e0] sm:$0xff]
        %v788 = vld [vmem:[%s122 + $0x13e8] sm:$0xff]
        %v789 = vld [vmem:[%s122 + $0x13f0] sm:$0xff]
        %v790 = vld [vmem:[%s122 + $0x13f8] sm:$0xff]
        %v791 = vld [vmem:[%s122 + $0x1400] sm:$0xff]
        %v792 = vld [vmem:[%s122 + $0x1408] sm:$0xff]
        %v793 = vld [vmem:[%s122 + $0x1410] sm:$0xff]
        %v794 = vld [vmem:[%s122 + $0x1418] sm:$0xff]
        %v795 = vld [vmem:[%s122 + $0x1420] sm:$0xff]
        %v796 = vld [vmem:[%s122 + $0x1428] sm:$0xff]
        %v797 = vld [vmem:[%s122 + $0x1430] sm:$0xff]
        %v798 = vld [vmem:[%s122 + $0x1438] sm:$0xff]
        %v799 = vld [vmem:[%s122 + $0x1440] sm:$0xff]
        %v800 = vld [vmem:[%s122 + $0x1448] sm:$0xff]
        %v801 = vld [vmem:[%s122 + $0x1450] sm:$0xff]
        %v802 = vld [vmem:[%s122 + $0x1458] sm:$0xff]
        %v803 = vld [vmem:[%s122 + $0x1460] sm:$0xff]
        %v804 = vld [vmem:[%s122 + $0x1468] sm:$0xff]
        %v805 = vld [vmem:[%s122 + $0x1470] sm:$0xff]
        %v806 = vld [vmem:[%s122 + $0x1478] sm:$0xff]
        %v807 = vld [vmem:[%s122 + $0x1480] sm:$0xff]
        %v808 = vld [vmem:[%s122 + $0x1488] sm:$0xff]
        %v809 = vld [vmem:[%s122 + $0x1490] sm:$0xff]
        %v810 = vld [vmem:[%s122 + $0x1498] sm:$0xff]
        %v811 = vld [vmem:[%s122 + $0x14a0] sm:$0xff]
        %v812 = vld [vmem:[%s122 + $0x14a8] sm:$0xff]
        %v813 = vld [vmem:[%s122 + $0x14b0] sm:$0xff]
        %v814 = vld [vmem:[%s122 + $0x14b8] sm:$0xff]
        %v815 = vld [vmem:[%s122 + $0x14c0] sm:$0xff]
        %v816 = vld [vmem:[%s122 + $0x14c8] sm:$0xff]
        %v817 = vld [vmem:[%s122 + $0x14d0] sm:$0xff]
        %v818 = vld [vmem:[%s122 + $0x14d8] sm:$0xff]
        %v819 = vld [vmem:[%s122 + $0x14e0] sm:$0xff]
        %v820 = vld [vmem:[%s122 + $0x14e8] sm:$0xff]
        %v821 = vld [vmem:[%s122 + $0x14f0] sm:$0xff]
        %v822 = vld [vmem:[%s122 + $0x14f8] sm:$0xff]
        %v823 = vld [vmem:[%s122 + $0x1500] sm:$0xff]
        %v824 = vld [vmem:[%s122 + $0x1508] sm:$0xff]
        %v825 = vld [vmem:[%s122 + $0x1510] sm:$0xff]
        %v826 = vld [vmem:[%s122 + $0x1518] sm:$0xff]
        %v827 = vld [vmem:[%s122 + $0x1520] sm:$0xff]
        %v828 = vld [vmem:[%s122 + $0x1528] sm:$0xff]
        %v829 = vld [vmem:[%s122 + $0x1530] sm:$0xff]
        %v830 = vld [vmem:[%s122 + $0x1538] sm:$0xff]
        %v831 = vld [vmem:[%s122 + $0x1540] sm:$0xff]
        %v832 = vld [vmem:[%s122 + $0x1548] sm:$0xff]
        %v833 = vld [vmem:[%s122 + $0x1550] sm:$0xff]
        %v834 = vld [vmem:[%s122 + $0x1558] sm:$0xff]
        %v835 = vld [vmem:[%s122 + $0x1560] sm:$0xff]
        %v836 = vld [vmem:[%s122 + $0x1568] sm:$0xff]
        %v837 = vld [vmem:[%s122 + $0x1570] sm:$0xff]
        %v838 = vld [vmem:[%s122 + $0x1578] sm:$0xff]
        %v839 = vld [vmem:[%s122 + $0x1580] sm:$0xff]
        %v840 = vld [vmem:[%s122 + $0x1588] sm:$0xff]
        %v841 = vld [vmem:[%s122 + $0x1590] sm:$0xff]
        %v842 = vld [vmem:[%s122 + $0x1598] sm:$0xff]
        %v843 = vld [vmem:[%s122 + $0x15a0] sm:$0xff]
        %v844 = vld [vmem:[%s122 + $0x15a8] sm:$0xff]
        %v845 = vld [vmem:[%s122 + $0x15b0] sm:$0xff]
        %v846 = vld [vmem:[%s122 + $0x15b8] sm:$0xff]
        %v847 = vld [vmem:[%s122 + $0x15c0] sm:$0xff]
        %v848 = vld [vmem:[%s122 + $0x15c8] sm:$0xff]
        %v849 = vld [vmem:[%s122 + $0x15d0] sm:$0xff]
        %v850 = vld [vmem:[%s122 + $0x15d8] sm:$0xff]
        %v851 = vld [vmem:[%s122 + $0x15e0] sm:$0xff]
        %v852 = vld [vmem:[%s122 + $0x15e8] sm:$0xff]
        %v853 = vld [vmem:[%s122 + $0x15f0] sm:$0xff]
        %v854 = vld [vmem:[%s122 + $0x15f8] sm:$0xff]
        %v855 = vld [vmem:[%s122 + $0x1600] sm:$0xff]
        %v856 = vld [vmem:[%s122 + $0x1608] sm:$0xff]
        %v857 = vld [vmem:[%s122 + $0x1610] sm:$0xff]
        %v858 = vld [vmem:[%s122 + $0x1618] sm:$0xff]
        %v859 = vld [vmem:[%s122 + $0x1620] sm:$0xff]
        %v860 = vld [vmem:[%s122 + $0x1628] sm:$0xff]
        %v861 = vld [vmem:[%s122 + $0x1630] sm:$0xff]
        %v862 = vld [vmem:[%s122 + $0x1638] sm:$0xff]
        %v863 = vld [vmem:[%s122 + $0x1640] sm:$0xff]
        %v864 = vld [vmem:[%s122 + $0x1648] sm:$0xff]
        %v865 = vld [vmem:[%s122 + $0x1650] sm:$0xff]
        %v866 = vld [vmem:[%s122 + $0x1658] sm:$0xff]
        %v867 = vld [vmem:[%s122 + $0x1660] sm:$0xff]
        %v868 = vld [vmem:[%s122 + $0x1668] sm:$0xff]
        %v869 = vld [vmem:[%s122 + $0x1670] sm:$0xff]
        %v870 = vld [vmem:[%s122 + $0x1678] sm:$0xff]
        %v871 = vld [vmem:[%s122 + $0x1680] sm:$0xff]
        %v872 = vld [vmem:[%s122 + $0x1688] sm:$0xff]
        %v873 = vld [vmem:[%s122 + $0x1690] sm:$0xff]
        %v874 = vld [vmem:[%s122 + $0x1698] sm:$0xff]
        %v875 = vld [vmem:[%s122 + $0x16a0] sm:$0xff]
        %v876 = vld [vmem:[%s122 + $0x16a8] sm:$0xff]
        %v877 = vld [vmem:[%s122 + $0x16b0] sm:$0xff]
        %v878 = vld [vmem:[%s122 + $0x16b8] sm:$0xff]
        %v879 = vld [vmem:[%s122 + $0x16c0] sm:$0xff]
        %v880 = vld [vmem:[%s122 + $0x16c8] sm:$0xff]
        %v881 = vld [vmem:[%s122 + $0x16d0] sm:$0xff]
        %v882 = vld [vmem:[%s122 + $0x16d8] sm:$0xff]
        %v883 = vld [vmem:[%s122 + $0x16e0] sm:$0xff]
        %v884 = vld [vmem:[%s122 + $0x16e8] sm:$0xff]
        %v885 = vld [vmem:[%s122 + $0x16f0] sm:$0xff]
        %v886 = vld [vmem:[%s122 + $0x16f8] sm:$0xff]
        %v887 = vld [vmem:[%s122 + $0x1700] sm:$0xff]
        %v888 = vld [vmem:[%s122 + $0x1708] sm:$0xff]
        %v889 = vld [vmem:[%s122 + $0x1710] sm:$0xff]
        %v890 = vld [vmem:[%s122 + $0x1718] sm:$0xff]
        %v891 = vld [vmem:[%s122 + $0x1720] sm:$0xff]
        %v892 = vld [vmem:[%s122 + $0x1728] sm:$0xff]
        %v893 = vld [vmem:[%s122 + $0x1730] sm:$0xff]
        %v894 = vld [vmem:[%s122 + $0x1738] sm:$0xff]
        %v895 = vld [vmem:[%s122 + $0x1740] sm:$0xff]
        %v896 = vld [vmem:[%s122 + $0x1748] sm:$0xff]
        %v897 = vld [vmem:[%s122 + $0x1750] sm:$0xff]
        %v898 = vld [vmem:[%s122 + $0x1758] sm:$0xff]
        %v899 = vld [vmem:[%s122 + $0x1760] sm:$0xff]
        %v900 = vld [vmem:[%s122 + $0x1768] sm:$0xff]
        %v901 = vld [vmem:[%s122 + $0x1770] sm:$0xff]
        %v902 = vld [vmem:[%s122 + $0x1778] sm:$0xff]
        %v903 = vld [vmem:[%s122 + $0x1780] sm:$0xff]
        %v904 = vld [vmem:[%s122 + $0x1788] sm:$0xff]
        %v905 = vld [vmem:[%s122 + $0x1790] sm:$0xff]
        %v906 = vld [vmem:[%s122 + $0x1798] sm:$0xff]
        %v907 = vld [vmem:[%s122 + $0x17a0] sm:$0xff]
        %v908 = vld [vmem:[%s122 + $0x17a8] sm:$0xff]
        %v909 = vld [vmem:[%s122 + $0x17b0] sm:$0xff]
        %v910 = vld [vmem:[%s122 + $0x17b8] sm:$0xff]
        %v911 = vld [vmem:[%s122 + $0x17c0] sm:$0xff]
        %v912 = vld [vmem:[%s122 + $0x17c8] sm:$0xff]
        %v913 = vld [vmem:[%s122 + $0x17d0] sm:$0xff]
        %v914 = vld [vmem:[%s122 + $0x17d8] sm:$0xff]
        %v915 = vld [vmem:[%s122 + $0x17e0] sm:$0xff]
        %v916 = vld [vmem:[%s122 + $0x17e8] sm:$0xff]
        %v917 = vld [vmem:[%s122 + $0x17f0] sm:$0xff]
        %v918 = vld [vmem:[%s122 + $0x17f8] sm:$0xff]
        %v919 = vld [vmem:[%s122 + $0x1800] sm:$0xff]
        %v920 = vld [vmem:[%s122 + $0x1808] sm:$0xff]
        %v921 = vld [vmem:[%s122 + $0x1810] sm:$0xff]
        %v922 = vld [vmem:[%s122 + $0x1818] sm:$0xff]
        %v923 = vld [vmem:[%s122 + $0x1820] sm:$0xff]
        %v924 = vld [vmem:[%s122 + $0x1828] sm:$0xff]
        %v925 = vld [vmem:[%s122 + $0x1830] sm:$0xff]
        %v926 = vld [vmem:[%s122 + $0x1838] sm:$0xff]
        %v927 = vld [vmem:[%s122 + $0x1840] sm:$0xff]
        %v928 = vld [vmem:[%s122 + $0x1848] sm:$0xff]
        %v929 = vld [vmem:[%s122 + $0x1850] sm:$0xff]
        %v930 = vld [vmem:[%s122 + $0x1858] sm:$0xff]
        %v931 = vld [vmem:[%s122 + $0x1860] sm:$0xff]
        %v932 = vld [vmem:[%s122 + $0x1868] sm:$0xff]
        %v933 = vld [vmem:[%s122 + $0x1870] sm:$0xff]
        %v934 = vld [vmem:[%s122 + $0x1878] sm:$0xff]
        %v935 = vld [vmem:[%s122 + $0x1880] sm:$0xff]
        %v936 = vld [vmem:[%s122 + $0x1888] sm:$0xff]
        %v937 = vld [vmem:[%s122 + $0x1890] sm:$0xff]
        %v938 = vld [vmem:[%s122 + $0x1898] sm:$0xff]
        %v939 = vld [vmem:[%s122 + $0x18a0] sm:$0xff]
        %v940 = vld [vmem:[%s122 + $0x18a8] sm:$0xff]
        %v941 = vld [vmem:[%s122 + $0x18b0] sm:$0xff]
        %v942 = vld [vmem:[%s122 + $0x18b8] sm:$0xff]
        %v943 = vld [vmem:[%s122 + $0x18c0] sm:$0xff]
        %v944 = vld [vmem:[%s122 + $0x18c8] sm:$0xff]
        %v945 = vld [vmem:[%s122 + $0x18d0] sm:$0xff]
        %v946 = vld [vmem:[%s122 + $0x18d8] sm:$0xff]
        %v947 = vld [vmem:[%s122 + $0x18e0] sm:$0xff]
        %v948 = vld [vmem:[%s122 + $0x18e8] sm:$0xff]
        %v949 = vld [vmem:[%s122 + $0x18f0] sm:$0xff]
        %v950 = vld [vmem:[%s122 + $0x18f8] sm:$0xff]
        %v951 = vld [vmem:[%s122 + $0x1900] sm:$0xff]
        %v952 = vld [vmem:[%s122 + $0x1908] sm:$0xff]
        %v953 = vld [vmem:[%s122 + $0x1910] sm:$0xff]
        %v954 = vld [vmem:[%s122 + $0x1918] sm:$0xff]
        %v955 = vld [vmem:[%s122 + $0x1920] sm:$0xff]
        %v956 = vld [vmem:[%s122 + $0x1928] sm:$0xff]
        %v957 = vld [vmem:[%s122 + $0x1930] sm:$0xff]
        %v958 = vld [vmem:[%s122 + $0x1938] sm:$0xff]
        %v959 = vld [vmem:[%s122 + $0x1940] sm:$0xff]
        %v960 = vld [vmem:[%s122 + $0x1948] sm:$0xff]
        %v961 = vld [vmem:[%s122 + $0x1950] sm:$0xff]
        %v962 = vld [vmem:[%s122 + $0x1958] sm:$0xff]
        %v963 = vld [vmem:[%s122 + $0x1960] sm:$0xff]
        %v964 = vld [vmem:[%s122 + $0x1968] sm:$0xff]
        %v965 = vld [vmem:[%s122 + $0x1970] sm:$0xff]
        %v966 = vld [vmem:[%s122 + $0x1978] sm:$0xff]
        %v967 = vld [vmem:[%s122 + $0x1980] sm:$0xff]
        %v968 = vld [vmem:[%s122 + $0x1988] sm:$0xff]
        %v969 = vld [vmem:[%s122 + $0x1990] sm:$0xff]
        %v970 = vld [vmem:[%s122 + $0x1998] sm:$0xff]
        %v971 = vld [vmem:[%s122 + $0x19a0] sm:$0xff]
        %v972 = vld [vmem:[%s122 + $0x19a8] sm:$0xff]
        %v973 = vld [vmem:[%s122 + $0x19b0] sm:$0xff]
        %v974 = vld [vmem:[%s122 + $0x19b8] sm:$0xff]
        %v975 = vld [vmem:[%s122 + $0x19c0] sm:$0xff]
        %v976 = vld [vmem:[%s122 + $0x19c8] sm:$0xff]
        %v977 = vld [vmem:[%s122 + $0x19d0] sm:$0xff]
        %v978 = vld [vmem:[%s122 + $0x19d8] sm:$0xff]
        %v979 = vld [vmem:[%s122 + $0x19e0] sm:$0xff]
        %v980 = vld [vmem:[%s122 + $0x19e8] sm:$0xff]
        %v981 = vld [vmem:[%s122 + $0x19f0] sm:$0xff]
        %v982 = vld [vmem:[%s122 + $0x19f8] sm:$0xff]
        %v983 = vld [vmem:[%s122 + $0x1a00] sm:$0xff]
        %v984 = vld [vmem:[%s122 + $0x1a08] sm:$0xff]
        %v985 = vld [vmem:[%s122 + $0x1a10] sm:$0xff]
        %v986 = vld [vmem:[%s122 + $0x1a18] sm:$0xff]
        %v987 = vld [vmem:[%s122 + $0x1a20] sm:$0xff]
        %v988 = vld [vmem:[%s122 + $0x1a28] sm:$0xff]
        %v989 = vld [vmem:[%s122 + $0x1a30] sm:$0xff]
        %v990 = vld [vmem:[%s122 + $0x1a38] sm:$0xff]
        %v991 = vld [vmem:[%s122 + $0x1a40] sm:$0xff]
        %v992 = vld [vmem:[%s122 + $0x1a48] sm:$0xff]
        %v993 = vld [vmem:[%s122 + $0x1a50] sm:$0xff]
        %v994 = vld [vmem:[%s122 + $0x1a58] sm:$0xff]
        %v995 = vld [vmem:[%s122 + $0x1a60] sm:$0xff]
        %v996 = vld [vmem:[%s122 + $0x1a68] sm:$0xff]
        %v997 = vld [vmem:[%s122 + $0x1a70] sm:$0xff]
        %v998 = vld [vmem:[%s122 + $0x1a78] sm:$0xff]
        %v999 = vld [vmem:[%s122 + $0x1a80] sm:$0xff]
        %v1000 = vld [vmem:[%s122 + $0x1a88] sm:$0xff]
        %v1001 = vld [vmem:[%s122 + $0x1a90] sm:$0xff]
        %v1002 = vld [vmem:[%s122 + $0x1a98] sm:$0xff]
        %v1003 = vld [vmem:[%s122 + $0x1aa0] sm:$0xff]
        %v1004 = vld [vmem:[%s122 + $0x1aa8] sm:$0xff]
        %v1005 = vld [vmem:[%s122 + $0x1ab0] sm:$0xff]
        %v1006 = vld [vmem:[%s122 + $0x1ab8] sm:$0xff]
        %v1007 = vld [vmem:[%s122 + $0x1ac0] sm:$0xff]
        %v1008 = vld [vmem:[%s122 + $0x1ac8] sm:$0xff]
        %v1009 = vld [vmem:[%s122 + $0x1ad0] sm:$0xff]
        %v1010 = vld [vmem:[%s122 + $0x1ad8] sm:$0xff]
        %v1011 = vld [vmem:[%s122 + $0x1ae0] sm:$0xff]
        %v1012 = vld [vmem:[%s122 + $0x1ae8] sm:$0xff]
        %v1013 = vld [vmem:[%s122 + $0x1af0] sm:$0xff]
        %v1014 = vld [vmem:[%s122 + $0x1af8] sm:$0xff]
        %v1015 = vld [vmem:[%s122 + $0x1b00] sm:$0xff]
        %v1016 = vld [vmem:[%s122 + $0x1b08] sm:$0xff]
        %v1017 = vld [vmem:[%s122 + $0x1b10] sm:$0xff]
        %v1018 = vld [vmem:[%s122 + $0x1b18] sm:$0xff]
        %v1019 = vld [vmem:[%s122 + $0x1b20] sm:$0xff]
        %v1020 = vld [vmem:[%s122 + $0x1b28] sm:$0xff]
        %v1021 = vld [vmem:[%s122 + $0x1b30] sm:$0xff]
        %v1022 = vld [vmem:[%s122 + $0x1b38] sm:$0xff]
        %v1023 = vld [vmem:[%s122 + $0x1b40] sm:$0xff]
        %v1024 = vld [vmem:[%s122 + $0x1b48] sm:$0xff]
        %v1025 = vld [vmem:[%s122 + $0x1b50] sm:$0xff]
        %v1026 = vld [vmem:[%s122 + $0x1b58] sm:$0xff]
        %v1027 = vld [vmem:[%s122 + $0x1b60] sm:$0xff]
        %v1028 = vld [vmem:[%s122 + $0x1b68] sm:$0xff]
        %v1029 = vld [vmem:[%s122 + $0x1b70] sm:$0xff]
        %v1030 = vld [vmem:[%s122 + $0x1b78] sm:$0xff]
        %v1031 = vld [vmem:[%s122 + $0x1b80] sm:$0xff]
        %v1032 = vld [vmem:[%s122 + $0x1b88] sm:$0xff]
        %v1033 = vld [vmem:[%s122 + $0x1b90] sm:$0xff]
        %v1034 = vld [vmem:[%s122 + $0x1b98] sm:$0xff]
        %v1035 = vld [vmem:[%s122 + $0x1ba0] sm:$0xff]
        %v1036 = vld [vmem:[%s122 + $0x1ba8] sm:$0xff]
        %v1037 = vld [vmem:[%s122 + $0x1bb0] sm:$0xff]
        %v1038 = vld [vmem:[%s122 + $0x1bb8] sm:$0xff]
        %v1039 = vld [vmem:[%s122 + $0x1bc0] sm:$0xff]
        %v1040 = vld [vmem:[%s122 + $0x1bc8] sm:$0xff]
        %v1041 = vld [vmem:[%s122 + $0x1bd0] sm:$0xff]
        %v1042 = vld [vmem:[%s122 + $0x1bd8] sm:$0xff]
        %v1043 = vld [vmem:[%s122 + $0x1be0] sm:$0xff]
        %v1044 = vld [vmem:[%s122 + $0x1be8] sm:$0xff]
        %v1045 = vld [vmem:[%s122 + $0x1bf0] sm:$0xff]
        %v1046 = vld [vmem:[%s122 + $0x1bf8] sm:$0xff]
        %v1047 = vld [vmem:[%s122 + $0x1c00] sm:$0xff]
        %v1048 = vld [vmem:[%s122 + $0x1c08] sm:$0xff]
        %v1049 = vld [vmem:[%s122 + $0x1c10] sm:$0xff]
        %v1050 = vld [vmem:[%s122 + $0x1c18] sm:$0xff]
        %v1051 = vld [vmem:[%s122 + $0x1c20] sm:$0xff]
        %v1052 = vld [vmem:[%s122 + $0x1c28] sm:$0xff]
        %v1053 = vld [vmem:[%s122 + $0x1c30] sm:$0xff]
        %v1054 = vld [vmem:[%s122 + $0x1c38] sm:$0xff]
        %v1055 = vld [vmem:[%s122 + $0x1c40] sm:$0xff]
        %v1056 = vld [vmem:[%s122 + $0x1c48] sm:$0xff]
        %v1057 = vld [vmem:[%s122 + $0x1c50] sm:$0xff]
        %v1058 = vld [vmem:[%s122 + $0x1c58] sm:$0xff]
        %v1059 = vld [vmem:[%s122 + $0x1c60] sm:$0xff]
        %v1060 = vld [vmem:[%s122 + $0x1c68] sm:$0xff]
        %v1061 = vld [vmem:[%s122 + $0x1c70] sm:$0xff]
        %v1062 = vld [vmem:[%s122 + $0x1c78] sm:$0xff]
        %v1063 = vld [vmem:[%s122 + $0x1c80] sm:$0xff]
        %v1064 = vld [vmem:[%s122 + $0x1c88] sm:$0xff]
        %v1065 = vld [vmem:[%s122 + $0x1c90] sm:$0xff]
        %v1066 = vld [vmem:[%s122 + $0x1c98] sm:$0xff]
        %v1067 = vld [vmem:[%s122 + $0x1ca0] sm:$0xff]
        %v1068 = vld [vmem:[%s122 + $0x1ca8] sm:$0xff]
        %v1069 = vld [vmem:[%s122 + $0x1cb0] sm:$0xff]
        %v1070 = vld [vmem:[%s122 + $0x1cb8] sm:$0xff]
        %v1071 = vld [vmem:[%s122 + $0x1cc0] sm:$0xff]
        %v1072 = vld [vmem:[%s122 + $0x1cc8] sm:$0xff]
        %v1073 = vld [vmem:[%s122 + $0x1cd0] sm:$0xff]
        %v1074 = vld [vmem:[%s122 + $0x1cd8] sm:$0xff]
        %v1075 = vld [vmem:[%s122 + $0x1ce0] sm:$0xff]
        %v1076 = vld [vmem:[%s122 + $0x1ce8] sm:$0xff]
        %v1077 = vld [vmem:[%s122 + $0x1cf0] sm:$0xff]
        %v1078 = vld [vmem:[%s122 + $0x1cf8] sm:$0xff]
        %v1079 = vld [vmem:[%s122 + $0x1d00] sm:$0xff]
        %v1080 = vld [vmem:[%s122 + $0x1d08] sm:$0xff]
        %v1081 = vld [vmem:[%s122 + $0x1d10] sm:$0xff]
        %v1082 = vld [vmem:[%s122 + $0x1d18] sm:$0xff]
        %v1083 = vld [vmem:[%s122 + $0x1d20] sm:$0xff]
        %v1084 = vld [vmem:[%s122 + $0x1d28] sm:$0xff]
        %v1085 = vld [vmem:[%s122 + $0x1d30] sm:$0xff]
        %v1086 = vld [vmem:[%s122 + $0x1d38] sm:$0xff]
        %v1087 = vld [vmem:[%s122 + $0x1d40] sm:$0xff]
        %v1088 = vld [vmem:[%s122 + $0x1d48] sm:$0xff]
        %v1089 = vld [vmem:[%s122 + $0x1d50] sm:$0xff]
        %v1090 = vld [vmem:[%s122 + $0x1d58] sm:$0xff]
        %v1091 = vld [vmem:[%s122 + $0x1d60] sm:$0xff]
        %v1092 = vld [vmem:[%s122 + $0x1d68] sm:$0xff]
        %v1093 = vld [vmem:[%s122 + $0x1d70] sm:$0xff]
        %v1094 = vld [vmem:[%s122 + $0x1d78] sm:$0xff]
        %v1095 = vld [vmem:[%s122 + $0x1d80] sm:$0xff]
        %v1096 = vld [vmem:[%s122 + $0x1d88] sm:$0xff]
        %v1097 = vld [vmem:[%s122 + $0x1d90] sm:$0xff]
        %v1098 = vld [vmem:[%s122 + $0x1d98] sm:$0xff]
        %v1099 = vld [vmem:[%s122 + $0x1da0] sm:$0xff]
        %v1100 = vld [vmem:[%s122 + $0x1da8] sm:$0xff]
        %v1101 = vld [vmem:[%s122 + $0x1db0] sm:$0xff]
        %v1102 = vld [vmem:[%s122 + $0x1db8] sm:$0xff]
        %v1103 = vld [vmem:[%s122 + $0x1dc0] sm:$0xff]
        %v1104 = vld [vmem:[%s122 + $0x1dc8] sm:$0xff]
        %v1105 = vld [vmem:[%s122 + $0x1dd0] sm:$0xff]
        %v1106 = vld [vmem:[%s122 + $0x1dd8] sm:$0xff]
        %v1107 = vld [vmem:[%s122 + $0x1de0] sm:$0xff]
        %v1108 = vld [vmem:[%s122 + $0x1de8] sm:$0xff]
        %v1109 = vld [vmem:[%s122 + $0x1df0] sm:$0xff]
        %v1110 = vld [vmem:[%s122 + $0x1df8] sm:$0xff]
        %v1111 = vld [vmem:[%s122 + $0x1e00] sm:$0xff]
        %v1112 = vld [vmem:[%s122 + $0x1e08] sm:$0xff]
        %v1113 = vld [vmem:[%s122 + $0x1e10] sm:$0xff]
        %v1114 = vld [vmem:[%s122 + $0x1e18] sm:$0xff]
        %v1115 = vld [vmem:[%s122 + $0x1e20] sm:$0xff]
        %v1116 = vld [vmem:[%s122 + $0x1e28] sm:$0xff]
        %v1117 = vld [vmem:[%s122 + $0x1e30] sm:$0xff]
        %v1118 = vld [vmem:[%s122 + $0x1e38] sm:$0xff]
        %v1119 = vld [vmem:[%s122 + $0x1e40] sm:$0xff]
        %v1120 = vld [vmem:[%s122 + $0x1e48] sm:$0xff]
        %v1121 = vld [vmem:[%s122 + $0x1e50] sm:$0xff]
        %v1122 = vld [vmem:[%s122 + $0x1e58] sm:$0xff]
        %v1123 = vld [vmem:[%s122 + $0x1e60] sm:$0xff]
        %v1124 = vld [vmem:[%s122 + $0x1e68] sm:$0xff]
        %v1125 = vld [vmem:[%s122 + $0x1e70] sm:$0xff]
        %v1126 = vld [vmem:[%s122 + $0x1e78] sm:$0xff]
        %v1127 = vld [vmem:[%s122 + $0x1e80] sm:$0xff]
        %v1128 = vld [vmem:[%s122 + $0x1e88] sm:$0xff]
        %v1129 = vld [vmem:[%s122 + $0x1e90] sm:$0xff]
        %v1130 = vld [vmem:[%s122 + $0x1e98] sm:$0xff]
        %v1131 = vld [vmem:[%s122 + $0x1ea0] sm:$0xff]
        %v1132 = vld [vmem:[%s122 + $0x1ea8] sm:$0xff]
        %v1133 = vld [vmem:[%s122 + $0x1eb0] sm:$0xff]
        %v1134 = vld [vmem:[%s122 + $0x1eb8] sm:$0xff]
        %v1135 = vld [vmem:[%s122 + $0x1ec0] sm:$0xff]
        %v1136 = vld [vmem:[%s122 + $0x1ec8] sm:$0xff]
        %v1137 = vld [vmem:[%s122 + $0x1ed0] sm:$0xff]
        %v1138 = vld [vmem:[%s122 + $0x1ed8] sm:$0xff]
        %v1139 = vld [vmem:[%s122 + $0x1ee0] sm:$0xff]
        %v1140 = vld [vmem:[%s122 + $0x1ee8] sm:$0xff]
        %v1141 = vld [vmem:[%s122 + $0x1ef0] sm:$0xff]
        %v1142 = vld [vmem:[%s122 + $0x1ef8] sm:$0xff]
        %v1143 = vld [vmem:[%s122 + $0x1f00] sm:$0xff]
        %v1144 = vld [vmem:[%s122 + $0x1f08] sm:$0xff]
        %v1145 = vld [vmem:[%s122 + $0x1f10] sm:$0xff]
        %v1146 = vld [vmem:[%s122 + $0x1f18] sm:$0xff]
        %v1147 = vld [vmem:[%s122 + $0x1f20] sm:$0xff]
        %v1148 = vld [vmem:[%s122 + $0x1f28] sm:$0xff]
        %v1149 = vld [vmem:[%s122 + $0x1f30] sm:$0xff]
        %v1150 = vld [vmem:[%s122 + $0x1f38] sm:$0xff]
        %v1151 = vld [vmem:[%s122 + $0x1f40] sm:$0xff]
        %v1152 = vld [vmem:[%s122 + $0x1f48] sm:$0xff]
        %v1153 = vld [vmem:[%s122 + $0x1f50] sm:$0xff]
        %v1154 = vld [vmem:[%s122 + $0x1f58] sm:$0xff]
        %v1155 = vld [vmem:[%s122 + $0x1f60] sm:$0xff]
        %v1156 = vld [vmem:[%s122 + $0x1f68] sm:$0xff]
        %v1157 = vld [vmem:[%s122 + $0x1f70] sm:$0xff]
        %v1158 = vld [vmem:[%s122 + $0x1f78] sm:$0xff]
        %v1159 = vld [vmem:[%s122 + $0x1f80] sm:$0xff]
        %v1160 = vld [vmem:[%s122 + $0x1f88] sm:$0xff]
        %v1161 = vld [vmem:[%s122 + $0x1f90] sm:$0xff]
        %v1162 = vld [vmem:[%s122 + $0x1f98] sm:$0xff]
        %v1163 = vld [vmem:[%s122 + $0x1fa0] sm:$0xff]
        %v1164 = vld [vmem:[%s122 + $0x1fa8] sm:$0xff]
        %v1165 = vld [vmem:[%s122 + $0x1fb0] sm:$0xff]
        %v1166 = vld [vmem:[%s122 + $0x1fb8] sm:$0xff]
        %v1167 = vld [vmem:[%s122 + $0x1fc0] sm:$0xff]
        %v1168 = vld [vmem:[%s122 + $0x1fc8] sm:$0xff]
        %v1169 = vld [vmem:[%s122 + $0x1fd0] sm:$0xff]
        %v1170 = vld [vmem:[%s122 + $0x1fd8] sm:$0xff]
        %v1171 = vld [vmem:[%s122 + $0x1fe0] sm:$0xff]
        %v1172 = vld [vmem:[%s122 + $0x1fe8] sm:$0xff]
        %v1173 = vld [vmem:[%s122 + $0x1ff0] sm:$0xff]
        %v1174 = vld [vmem:[%s122 + $0x1ff8] sm:$0xff]
        %v1175 = vmul.f32 %v151, 0.1
        %v1176 = vmul.f32 %v152, 0.1
        %v1177 = vmul.f32 %v153, 0.1
        %v1178 = vmul.f32 %v154, 0.1
        %v1179 = vmul.f32 %v155, 0.1
        %v1180 = vmul.f32 %v156, 0.1
        %v1181 = vmul.f32 %v157, 0.1
        %v1182 = vmul.f32 %v158, 0.1
        %v1183 = vmul.f32 %v159, 0.1
        %v1184 = vmul.f32 %v160, 0.1
        %v1185 = vmul.f32 %v161, 0.1
        %v1186 = vmul.f32 %v162, 0.1
        %v1187 = vmul.f32 %v163, 0.1
        %v1188 = vmul.f32 %v164, 0.1
        %v1189 = vmul.f32 %v165, 0.1
        %v1190 = vmul.f32 %v166, 0.1
        %v1191 = vmul.f32 %v167, 0.1
        %v1192 = vmul.f32 %v168, 0.1
        %v1193 = vmul.f32 %v169, 0.1
        %v1194 = vmul.f32 %v170, 0.1
        %v1195 = vmul.f32 %v171, 0.1
        %v1196 = vmul.f32 %v172, 0.1
        %v1197 = vmul.f32 %v173, 0.1
        %v1198 = vmul.f32 %v174, 0.1
        %v1199 = vmul.f32 %v175, 0.1
        %v1200 = vmul.f32 %v176, 0.1
        %v1201 = vmul.f32 %v177, 0.1
        %v1202 = vmul.f32 %v178, 0.1
        %v1203 = vmul.f32 %v179, 0.1
        %v1204 = vmul.f32 %v180, 0.1
        %v1205 = vmul.f32 %v181, 0.1
        %v1206 = vmul.f32 %v182, 0.1
        %v1207 = vmul.f32 %v183, 0.1
        %v1208 = vmul.f32 %v184, 0.1
        %v1209 = vmul.f32 %v185, 0.1
        %v1210 = vmul.f32 %v186, 0.1
        %v1211 = vmul.f32 %v187, 0.1
        %v1212 = vmul.f32 %v188, 0.1
        %v1213 = vmul.f32 %v189, 0.1
        %v1214 = vmul.f32 %v190, 0.1
        %v1215 = vmul.f32 %v191, 0.1
        %v1216 = vmul.f32 %v192, 0.1
        %v1217 = vmul.f32 %v193, 0.1
        %v1218 = vmul.f32 %v194, 0.1
        %v1219 = vmul.f32 %v195, 0.1
        %v1220 = vmul.f32 %v196, 0.1
        %v1221 = vmul.f32 %v197, 0.1
        %v1222 = vmul.f32 %v198, 0.1
        %v1223 = vmul.f32 %v199, 0.1
        %v1224 = vmul.f32 %v200, 0.1
        %v1225 = vmul.f32 %v201, 0.1
        %v1226 = vmul.f32 %v202, 0.1
        %v1227 = vmul.f32 %v203, 0.1
        %v1228 = vmul.f32 %v204, 0.1
        %v1229 = vmul.f32 %v205, 0.1
        %v1230 = vmul.f32 %v206, 0.1
        %v1231 = vmul.f32 %v207, 0.1
        %v1232 = vmul.f32 %v208, 0.1
        %v1233 = vmul.f32 %v209, 0.1
        %v1234 = vmul.f32 %v210, 0.1
        %v1235 = vmul.f32 %v211, 0.1
        %v1236 = vmul.f32 %v212, 0.1
        %v1237 = vmul.f32 %v213, 0.1
        %v1238 = vmul.f32 %v214, 0.1
        %v1239 = vmul.f32 %v215, 0.1
        %v1240 = vmul.f32 %v216, 0.1
        %v1241 = vmul.f32 %v217, 0.1
        %v1242 = vmul.f32 %v218, 0.1
        %v1243 = vmul.f32 %v219, 0.1
        %v1244 = vmul.f32 %v220, 0.1
        %v1245 = vmul.f32 %v221, 0.1
        %v1246 = vmul.f32 %v222, 0.1
        %v1247 = vmul.f32 %v223, 0.1
        %v1248 = vmul.f32 %v224, 0.1
        %v1249 = vmul.f32 %v225, 0.1
        %v1250 = vmul.f32 %v226, 0.1
        %v1251 = vmul.f32 %v227, 0.1
        %v1252 = vmul.f32 %v228, 0.1
        %v1253 = vmul.f32 %v229, 0.1
        %v1254 = vmul.f32 %v230, 0.1
        %v1255 = vmul.f32 %v231, 0.1
        %v1256 = vmul.f32 %v232, 0.1
        %v1257 = vmul.f32 %v233, 0.1
        %v1258 = vmul.f32 %v234, 0.1
        %v1259 = vmul.f32 %v235, 0.1
        %v1260 = vmul.f32 %v236, 0.1
        %v1261 = vmul.f32 %v237, 0.1
        %v1262 = vmul.f32 %v238, 0.1
        %v1263 = vmul.f32 %v239, 0.1
        %v1264 = vmul.f32 %v240, 0.1
        %v1265 = vmul.f32 %v241, 0.1
        %v1266 = vmul.f32 %v242, 0.1
        %v1267 = vmul.f32 %v243, 0.1
        %v1268 = vmul.f32 %v244, 0.1
        %v1269 = vmul.f32 %v245, 0.1
        %v1270 = vmul.f32 %v246, 0.1
        %v1271 = vmul.f32 %v247, 0.1
        %v1272 = vmul.f32 %v248, 0.1
        %v1273 = vmul.f32 %v249, 0.1
        %v1274 = vmul.f32 %v250, 0.1
        %v1275 = vmul.f32 %v251, 0.1
        %v1276 = vmul.f32 %v252, 0.1
        %v1277 = vmul.f32 %v253, 0.1
        %v1278 = vmul.f32 %v254, 0.1
        %v1279 = vmul.f32 %v255, 0.1
        %v1280 = vmul.f32 %v256, 0.1
        %v1281 = vmul.f32 %v257, 0.1
        %v1282 = vmul.f32 %v258, 0.1
        %v1283 = vmul.f32 %v259, 0.1
        %v1284 = vmul.f32 %v260, 0.1
        %v1285 = vmul.f32 %v261, 0.1
        %v1286 = vmul.f32 %v262, 0.1
        %v1287 = vmul.f32 %v263, 0.1
        %v1288 = vmul.f32 %v264, 0.1
        %v1289 = vmul.f32 %v265, 0.1
        %v1290 = vmul.f32 %v266, 0.1
        %v1291 = vmul.f32 %v267, 0.1
        %v1292 = vmul.f32 %v268, 0.1
        %v1293 = vmul.f32 %v269, 0.1
        %v1294 = vmul.f32 %v270, 0.1
        %v1295 = vmul.f32 %v271, 0.1
        %v1296 = vmul.f32 %v272, 0.1
        %v1297 = vmul.f32 %v273, 0.1
        %v1298 = vmul.f32 %v274, 0.1
        %v1299 = vmul.f32 %v275, 0.1
        %v1300 = vmul.f32 %v276, 0.1
        %v1301 = vmul.f32 %v277, 0.1
        %v1302 = vmul.f32 %v278, 0.1
        %v1303 = vmul.f32 %v279, 0.1
        %v1304 = vmul.f32 %v280, 0.1
        %v1305 = vmul.f32 %v281, 0.1
        %v1306 = vmul.f32 %v282, 0.1
        %v1307 = vmul.f32 %v283, 0.1
        %v1308 = vmul.f32 %v284, 0.1
        %v1309 = vmul.f32 %v285, 0.1
        %v1310 = vmul.f32 %v286, 0.1
        %v1311 = vmul.f32 %v287, 0.1
        %v1312 = vmul.f32 %v288, 0.1
        %v1313 = vmul.f32 %v289, 0.1
        %v1314 = vmul.f32 %v290, 0.1
        %v1315 = vmul.f32 %v291, 0.1
        %v1316 = vmul.f32 %v292, 0.1
        %v1317 = vmul.f32 %v293, 0.1
        %v1318 = vmul.f32 %v294, 0.1
        %v1319 = vmul.f32 %v295, 0.1
        %v1320 = vmul.f32 %v296, 0.1
        %v1321 = vmul.f32 %v297, 0.1
        %v1322 = vmul.f32 %v298, 0.1
        %v1323 = vmul.f32 %v299, 0.1
        %v1324 = vmul.f32 %v300, 0.1
        %v1325 = vmul.f32 %v301, 0.1
        %v1326 = vmul.f32 %v302, 0.1
        %v1327 = vmul.f32 %v303, 0.1
        %v1328 = vmul.f32 %v304, 0.1
        %v1329 = vmul.f32 %v305, 0.1
        %v1330 = vmul.f32 %v306, 0.1
        %v1331 = vmul.f32 %v307, 0.1
        %v1332 = vmul.f32 %v308, 0.1
        %v1333 = vmul.f32 %v309, 0.1
        %v1334 = vmul.f32 %v310, 0.1
        %v1335 = vmul.f32 %v311, 0.1
        %v1336 = vmul.f32 %v312, 0.1
        %v1337 = vmul.f32 %v313, 0.1
        %v1338 = vmul.f32 %v314, 0.1
        %v1339 = vmul.f32 %v315, 0.1
        %v1340 = vmul.f32 %v316, 0.1
        %v1341 = vmul.f32 %v317, 0.1
        %v1342 = vmul.f32 %v318, 0.1
        %v1343 = vmul.f32 %v319, 0.1
        %v1344 = vmul.f32 %v320, 0.1
        %v1345 = vmul.f32 %v321, 0.1
        %v1346 = vmul.f32 %v322, 0.1
        %v1347 = vmul.f32 %v323, 0.1
        %v1348 = vmul.f32 %v324, 0.1
        %v1349 = vmul.f32 %v325, 0.1
        %v1350 = vmul.f32 %v326, 0.1
        %v1351 = vmul.f32 %v327, 0.1
        %v1352 = vmul.f32 %v328, 0.1
        %v1353 = vmul.f32 %v329, 0.1
        %v1354 = vmul.f32 %v330, 0.1
        %v1355 = vmul.f32 %v331, 0.1
        %v1356 = vmul.f32 %v332, 0.1
        %v1357 = vmul.f32 %v333, 0.1
        %v1358 = vmul.f32 %v334, 0.1
        %v1359 = vmul.f32 %v335, 0.1
        %v1360 = vmul.f32 %v336, 0.1
        %v1361 = vmul.f32 %v337, 0.1
        %v1362 = vmul.f32 %v338, 0.1
        %v1363 = vmul.f32 %v339, 0.1
        %v1364 = vmul.f32 %v340, 0.1
        %v1365 = vmul.f32 %v341, 0.1
        %v1366 = vmul.f32 %v342, 0.1
        %v1367 = vmul.f32 %v343, 0.1
        %v1368 = vmul.f32 %v344, 0.1
        %v1369 = vmul.f32 %v345, 0.1
        %v1370 = vmul.f32 %v346, 0.1
        %v1371 = vmul.f32 %v347, 0.1
        %v1372 = vmul.f32 %v348, 0.1
        %v1373 = vmul.f32 %v349, 0.1
        %v1374 = vmul.f32 %v350, 0.1
        %v1375 = vmul.f32 %v351, 0.1
        %v1376 = vmul.f32 %v352, 0.1
        %v1377 = vmul.f32 %v353, 0.1
        %v1378 = vmul.f32 %v354, 0.1
        %v1379 = vmul.f32 %v355, 0.1
        %v1380 = vmul.f32 %v356, 0.1
        %v1381 = vmul.f32 %v357, 0.1
        %v1382 = vmul.f32 %v358, 0.1
        %v1383 = vmul.f32 %v359, 0.1
        %v1384 = vmul.f32 %v360, 0.1
        %v1385 = vmul.f32 %v361, 0.1
        %v1386 = vmul.f32 %v362, 0.1
        %v1387 = vmul.f32 %v363, 0.1
        %v1388 = vmul.f32 %v364, 0.1
        %v1389 = vmul.f32 %v365, 0.1
        %v1390 = vmul.f32 %v366, 0.1
        %v1391 = vmul.f32 %v367, 0.1
        %v1392 = vmul.f32 %v368, 0.1
        %v1393 = vmul.f32 %v369, 0.1
        %v1394 = vmul.f32 %v370, 0.1
        %v1395 = vmul.f32 %v371, 0.1
        %v1396 = vmul.f32 %v372, 0.1
        %v1397 = vmul.f32 %v373, 0.1
        %v1398 = vmul.f32 %v374, 0.1
        %v1399 = vmul.f32 %v375, 0.1
        %v1400 = vmul.f32 %v376, 0.1
        %v1401 = vmul.f32 %v377, 0.1
        %v1402 = vmul.f32 %v378, 0.1
        %v1403 = vmul.f32 %v379, 0.1
        %v1404 = vmul.f32 %v380, 0.1
        %v1405 = vmul.f32 %v381, 0.1
        %v1406 = vmul.f32 %v382, 0.1
        %v1407 = vmul.f32 %v383, 0.1
        %v1408 = vmul.f32 %v384, 0.1
        %v1409 = vmul.f32 %v385, 0.1
        %v1410 = vmul.f32 %v386, 0.1
        %v1411 = vmul.f32 %v387, 0.1
        %v1412 = vmul.f32 %v388, 0.1
        %v1413 = vmul.f32 %v389, 0.1
        %v1414 = vmul.f32 %v390, 0.1
        %v1415 = vmul.f32 %v391, 0.1
        %v1416 = vmul.f32 %v392, 0.1
        %v1417 = vmul.f32 %v393, 0.1
        %v1418 = vmul.f32 %v394, 0.1
        %v1419 = vmul.f32 %v395, 0.1
        %v1420 = vmul.f32 %v396, 0.1
        %v1421 = vmul.f32 %v397, 0.1
        %v1422 = vmul.f32 %v398, 0.1
        %v1423 = vmul.f32 %v399, 0.1
        %v1424 = vmul.f32 %v400, 0.1
        %v1425 = vmul.f32 %v401, 0.1
        %v1426 = vmul.f32 %v402, 0.1
        %v1427 = vmul.f32 %v403, 0.1
        %v1428 = vmul.f32 %v404, 0.1
        %v1429 = vmul.f32 %v405, 0.1
        %v1430 = vmul.f32 %v406, 0.1
        %v1431 = vmul.f32 %v407, 0.1
        %v1432 = vmul.f32 %v408, 0.1
        %v1433 = vmul.f32 %v409, 0.1
        %v1434 = vmul.f32 %v410, 0.1
        %v1435 = vmul.f32 %v411, 0.1
        %v1436 = vmul.f32 %v412, 0.1
        %v1437 = vmul.f32 %v413, 0.1
        %v1438 = vmul.f32 %v414, 0.1
        %v1439 = vmul.f32 %v415, 0.1
        %v1440 = vmul.f32 %v416, 0.1
        %v1441 = vmul.f32 %v417, 0.1
        %v1442 = vmul.f32 %v418, 0.1
        %v1443 = vmul.f32 %v419, 0.1
        %v1444 = vmul.f32 %v420, 0.1
        %v1445 = vmul.f32 %v421, 0.1
        %v1446 = vmul.f32 %v422, 0.1
        %v1447 = vmul.f32 %v423, 0.1
        %v1448 = vmul.f32 %v424, 0.1
        %v1449 = vmul.f32 %v425, 0.1
        %v1450 = vmul.f32 %v426, 0.1
        %v1451 = vmul.f32 %v427, 0.1
        %v1452 = vmul.f32 %v428, 0.1
        %v1453 = vmul.f32 %v429, 0.1
        %v1454 = vmul.f32 %v430, 0.1
        %v1455 = vmul.f32 %v431, 0.1
        %v1456 = vmul.f32 %v432, 0.1
        %v1457 = vmul.f32 %v433, 0.1
        %v1458 = vmul.f32 %v434, 0.1
        %v1459 = vmul.f32 %v435, 0.1
        %v1460 = vmul.f32 %v436, 0.1
        %v1461 = vmul.f32 %v437, 0.1
        %v1462 = vmul.f32 %v438, 0.1
        %v1463 = vmul.f32 %v439, 0.1
        %v1464 = vmul.f32 %v440, 0.1
        %v1465 = vmul.f32 %v441, 0.1
        %v1466 = vmul.f32 %v442, 0.1
        %v1467 = vmul.f32 %v443, 0.1
        %v1468 = vmul.f32 %v444, 0.1
        %v1469 = vmul.f32 %v445, 0.1
        %v1470 = vmul.f32 %v446, 0.1
        %v1471 = vmul.f32 %v447, 0.1
        %v1472 = vmul.f32 %v448, 0.1
        %v1473 = vmul.f32 %v449, 0.1
        %v1474 = vmul.f32 %v450, 0.1
        %v1475 = vmul.f32 %v451, 0.1
        %v1476 = vmul.f32 %v452, 0.1
        %v1477 = vmul.f32 %v453, 0.1
        %v1478 = vmul.f32 %v454, 0.1
        %v1479 = vmul.f32 %v455, 0.1
        %v1480 = vmul.f32 %v456, 0.1
        %v1481 = vmul.f32 %v457, 0.1
        %v1482 = vmul.f32 %v458, 0.1
        %v1483 = vmul.f32 %v459, 0.1
        %v1484 = vmul.f32 %v460, 0.1
        %v1485 = vmul.f32 %v461, 0.1
        %v1486 = vmul.f32 %v462, 0.1
        %v1487 = vmul.f32 %v463, 0.1
        %v1488 = vmul.f32 %v464, 0.1
        %v1489 = vmul.f32 %v465, 0.1
        %v1490 = vmul.f32 %v466, 0.1
        %v1491 = vmul.f32 %v467, 0.1
        %v1492 = vmul.f32 %v468, 0.1
        %v1493 = vmul.f32 %v469, 0.1
        %v1494 = vmul.f32 %v470, 0.1
        %v1495 = vmul.f32 %v471, 0.1
        %v1496 = vmul.f32 %v472, 0.1
        %v1497 = vmul.f32 %v473, 0.1
        %v1498 = vmul.f32 %v474, 0.1
        %v1499 = vmul.f32 %v475, 0.1
        %v1500 = vmul.f32 %v476, 0.1
        %v1501 = vmul.f32 %v477, 0.1
        %v1502 = vmul.f32 %v478, 0.1
        %v1503 = vmul.f32 %v479, 0.1
        %v1504 = vmul.f32 %v480, 0.1
        %v1505 = vmul.f32 %v481, 0.1
        %v1506 = vmul.f32 %v482, 0.1
        %v1507 = vmul.f32 %v483, 0.1
        %v1508 = vmul.f32 %v484, 0.1
        %v1509 = vmul.f32 %v485, 0.1
        %v1510 = vmul.f32 %v486, 0.1
        %v1511 = vmul.f32 %v487, 0.1
        %v1512 = vmul.f32 %v488, 0.1
        %v1513 = vmul.f32 %v489, 0.1
        %v1514 = vmul.f32 %v490, 0.1
        %v1515 = vmul.f32 %v491, 0.1
        %v1516 = vmul.f32 %v492, 0.1
        %v1517 = vmul.f32 %v493, 0.1
        %v1518 = vmul.f32 %v494, 0.1
        %v1519 = vmul.f32 %v495, 0.1
        %v1520 = vmul.f32 %v496, 0.1
        %v1521 = vmul.f32 %v497, 0.1
        %v1522 = vmul.f32 %v498, 0.1
        %v1523 = vmul.f32 %v499, 0.1
        %v1524 = vmul.f32 %v500, 0.1
        %v1525 = vmul.f32 %v501, 0.1
        %v1526 = vmul.f32 %v502, 0.1
        %v1527 = vmul.f32 %v503, 0.1
        %v1528 = vmul.f32 %v504, 0.1
        %v1529 = vmul.f32 %v505, 0.1
        %v1530 = vmul.f32 %v506, 0.1
        %v1531 = vmul.f32 %v507, 0.1
        %v1532 = vmul.f32 %v508, 0.1
        %v1533 = vmul.f32 %v509, 0.1
        %v1534 = vmul.f32 %v510, 0.1
        %v1535 = vmul.f32 %v511, 0.1
        %v1536 = vmul.f32 %v512, 0.1
        %v1537 = vmul.f32 %v513, 0.1
        %v1538 = vmul.f32 %v514, 0.1
        %v1539 = vmul.f32 %v515, 0.1
        %v1540 = vmul.f32 %v516, 0.1
        %v1541 = vmul.f32 %v517, 0.1
        %v1542 = vmul.f32 %v518, 0.1
        %v1543 = vmul.f32 %v519, 0.1
        %v1544 = vmul.f32 %v520, 0.1
        %v1545 = vmul.f32 %v521, 0.1
        %v1546 = vmul.f32 %v522, 0.1
        %v1547 = vmul.f32 %v523, 0.1
        %v1548 = vmul.f32 %v524, 0.1
        %v1549 = vmul.f32 %v525, 0.1
        %v1550 = vmul.f32 %v526, 0.1
        %v1551 = vmul.f32 %v527, 0.1
        %v1552 = vmul.f32 %v528, 0.1
        %v1553 = vmul.f32 %v529, 0.1
        %v1554 = vmul.f32 %v530, 0.1
        %v1555 = vmul.f32 %v531, 0.1
        %v1556 = vmul.f32 %v532, 0.1
        %v1557 = vmul.f32 %v533, 0.1
        %v1558 = vmul.f32 %v534, 0.1
        %v1559 = vmul.f32 %v535, 0.1
        %v1560 = vmul.f32 %v536, 0.1
        %v1561 = vmul.f32 %v537, 0.1
        %v1562 = vmul.f32 %v538, 0.1
        %v1563 = vmul.f32 %v539, 0.1
        %v1564 = vmul.f32 %v540, 0.1
        %v1565 = vmul.f32 %v541, 0.1
        %v1566 = vmul.f32 %v542, 0.1
        %v1567 = vmul.f32 %v543, 0.1
        %v1568 = vmul.f32 %v544, 0.1
        %v1569 = vmul.f32 %v545, 0.1
        %v1570 = vmul.f32 %v546, 0.1
        %v1571 = vmul.f32 %v547, 0.1
        %v1572 = vmul.f32 %v548, 0.1
        %v1573 = vmul.f32 %v549, 0.1
        %v1574 = vmul.f32 %v550, 0.1
        %v1575 = vmul.f32 %v551, 0.1
        %v1576 = vmul.f32 %v552, 0.1
        %v1577 = vmul.f32 %v553, 0.1
        %v1578 = vmul.f32 %v554, 0.1
        %v1579 = vmul.f32 %v555, 0.1
        %v1580 = vmul.f32 %v556, 0.1
        %v1581 = vmul.f32 %v557, 0.1
        %v1582 = vmul.f32 %v558, 0.1
        %v1583 = vmul.f32 %v559, 0.1
        %v1584 = vmul.f32 %v560, 0.1
        %v1585 = vmul.f32 %v561, 0.1
        %v1586 = vmul.f32 %v562, 0.1
        %v1587 = vmul.f32 %v563, 0.1
        %v1588 = vmul.f32 %v564, 0.1
        %v1589 = vmul.f32 %v565, 0.1
        %v1590 = vmul.f32 %v566, 0.1
        %v1591 = vmul.f32 %v567, 0.1
        %v1592 = vmul.f32 %v568, 0.1
        %v1593 = vmul.f32 %v569, 0.1
        %v1594 = vmul.f32 %v570, 0.1
        %v1595 = vmul.f32 %v571, 0.1
        %v1596 = vmul.f32 %v572, 0.1
        %v1597 = vmul.f32 %v573, 0.1
        %v1598 = vmul.f32 %v574, 0.1
        %v1599 = vmul.f32 %v575, 0.1
        %v1600 = vmul.f32 %v576, 0.1
        %v1601 = vmul.f32 %v577, 0.1
        %v1602 = vmul.f32 %v578, 0.1
        %v1603 = vmul.f32 %v579, 0.1
        %v1604 = vmul.f32 %v580, 0.1
        %v1605 = vmul.f32 %v581, 0.1
        %v1606 = vmul.f32 %v582, 0.1
        %v1607 = vmul.f32 %v583, 0.1
        %v1608 = vmul.f32 %v584, 0.1
        %v1609 = vmul.f32 %v585, 0.1
        %v1610 = vmul.f32 %v586, 0.1
        %v1611 = vmul.f32 %v587, 0.1
        %v1612 = vmul.f32 %v588, 0.1
        %v1613 = vmul.f32 %v589, 0.1
        %v1614 = vmul.f32 %v590, 0.1
        %v1615 = vmul.f32 %v591, 0.1
        %v1616 = vmul.f32 %v592, 0.1
        %v1617 = vmul.f32 %v593, 0.1
        %v1618 = vmul.f32 %v594, 0.1
        %v1619 = vmul.f32 %v595, 0.1
        %v1620 = vmul.f32 %v596, 0.1
        %v1621 = vmul.f32 %v597, 0.1
        %v1622 = vmul.f32 %v598, 0.1
        %v1623 = vmul.f32 %v599, 0.1
        %v1624 = vmul.f32 %v600, 0.1
        %v1625 = vmul.f32 %v601, 0.1
        %v1626 = vmul.f32 %v602, 0.1
        %v1627 = vmul.f32 %v603, 0.1
        %v1628 = vmul.f32 %v604, 0.1
        %v1629 = vmul.f32 %v605, 0.1
        %v1630 = vmul.f32 %v606, 0.1
        %v1631 = vmul.f32 %v607, 0.1
        %v1632 = vmul.f32 %v608, 0.1
        %v1633 = vmul.f32 %v609, 0.1
        %v1634 = vmul.f32 %v610, 0.1
        %v1635 = vmul.f32 %v611, 0.1
        %v1636 = vmul.f32 %v612, 0.1
        %v1637 = vmul.f32 %v613, 0.1
        %v1638 = vmul.f32 %v614, 0.1
        %v1639 = vmul.f32 %v615, 0.1
        %v1640 = vmul.f32 %v616, 0.1
        %v1641 = vmul.f32 %v617, 0.1
        %v1642 = vmul.f32 %v618, 0.1
        %v1643 = vmul.f32 %v619, 0.1
        %v1644 = vmul.f32 %v620, 0.1
        %v1645 = vmul.f32 %v621, 0.1
        %v1646 = vmul.f32 %v622, 0.1
        %v1647 = vmul.f32 %v623, 0.1
        %v1648 = vmul.f32 %v624, 0.1
        %v1649 = vmul.f32 %v625, 0.1
        %v1650 = vmul.f32 %v626, 0.1
        %v1651 = vmul.f32 %v627, 0.1
        %v1652 = vmul.f32 %v628, 0.1
        %v1653 = vmul.f32 %v629, 0.1
        %v1654 = vmul.f32 %v630, 0.1
        %v1655 = vmul.f32 %v631, 0.1
        %v1656 = vmul.f32 %v632, 0.1
        %v1657 = vmul.f32 %v633, 0.1
        %v1658 = vmul.f32 %v634, 0.1
        %v1659 = vmul.f32 %v635, 0.1
        %v1660 = vmul.f32 %v636, 0.1
        %v1661 = vmul.f32 %v637, 0.1
        %v1662 = vmul.f32 %v638, 0.1
        %v1663 = vmul.f32 %v639, 0.1
        %v1664 = vmul.f32 %v640, 0.1
        %v1665 = vmul.f32 %v641, 0.1
        %v1666 = vmul.f32 %v642, 0.1
        %v1667 = vmul.f32 %v643, 0.1
        %v1668 = vmul.f32 %v644, 0.1
        %v1669 = vmul.f32 %v645, 0.1
        %v1670 = vmul.f32 %v646, 0.1
        %v1671 = vmul.f32 %v647, 0.1
        %v1672 = vmul.f32 %v648, 0.1
        %v1673 = vmul.f32 %v649, 0.1
        %v1674 = vmul.f32 %v650, 0.1
        %v1675 = vmul.f32 %v651, 0.1
        %v1676 = vmul.f32 %v652, 0.1
        %v1677 = vmul.f32 %v653, 0.1
        %v1678 = vmul.f32 %v654, 0.1
        %v1679 = vmul.f32 %v655, 0.1
        %v1680 = vmul.f32 %v656, 0.1
        %v1681 = vmul.f32 %v657, 0.1
        %v1682 = vmul.f32 %v658, 0.1
        %v1683 = vmul.f32 %v659, 0.1
        %v1684 = vmul.f32 %v660, 0.1
        %v1685 = vmul.f32 %v661, 0.1
        %v1686 = vmul.f32 %v662, 0.1
        %v1687 = vmul.f32 %v663, 0.1
        %v1688 = vmul.f32 %v664, 0.1
        %v1689 = vmul.f32 %v665, 0.1
        %v1690 = vmul.f32 %v666, 0.1
        %v1691 = vmul.f32 %v667, 0.1
        %v1692 = vmul.f32 %v668, 0.1
        %v1693 = vmul.f32 %v669, 0.1
        %v1694 = vmul.f32 %v670, 0.1
        %v1695 = vmul.f32 %v671, 0.1
        %v1696 = vmul.f32 %v672, 0.1
        %v1697 = vmul.f32 %v673, 0.1
        %v1698 = vmul.f32 %v674, 0.1
        %v1699 = vmul.f32 %v675, 0.1
        %v1700 = vmul.f32 %v676, 0.1
        %v1701 = vmul.f32 %v677, 0.1
        %v1702 = vmul.f32 %v678, 0.1
        %v1703 = vmul.f32 %v679, 0.1
        %v1704 = vmul.f32 %v680, 0.1
        %v1705 = vmul.f32 %v681, 0.1
        %v1706 = vmul.f32 %v682, 0.1
        %v1707 = vmul.f32 %v683, 0.1
        %v1708 = vmul.f32 %v684, 0.1
        %v1709 = vmul.f32 %v685, 0.1
        %v1710 = vmul.f32 %v686, 0.1
        %v1711 = vmul.f32 %v687, 0.1
        %v1712 = vmul.f32 %v688, 0.1
        %v1713 = vmul.f32 %v689, 0.1
        %v1714 = vmul.f32 %v690, 0.1
        %v1715 = vmul.f32 %v691, 0.1
        %v1716 = vmul.f32 %v692, 0.1
        %v1717 = vmul.f32 %v693, 0.1
        %v1718 = vmul.f32 %v694, 0.1
        %v1719 = vmul.f32 %v695, 0.1
        %v1720 = vmul.f32 %v696, 0.1
        %v1721 = vmul.f32 %v697, 0.1
        %v1722 = vmul.f32 %v698, 0.1
        %v1723 = vmul.f32 %v699, 0.1
        %v1724 = vmul.f32 %v700, 0.1
        %v1725 = vmul.f32 %v701, 0.1
        %v1726 = vmul.f32 %v702, 0.1
        %v1727 = vmul.f32 %v703, 0.1
        %v1728 = vmul.f32 %v704, 0.1
        %v1729 = vmul.f32 %v705, 0.1
        %v1730 = vmul.f32 %v706, 0.1
        %v1731 = vmul.f32 %v707, 0.1
        %v1732 = vmul.f32 %v708, 0.1
        %v1733 = vmul.f32 %v709, 0.1
        %v1734 = vmul.f32 %v710, 0.1
        %v1735 = vmul.f32 %v711, 0.1
        %v1736 = vmul.f32 %v712, 0.1
        %v1737 = vmul.f32 %v713, 0.1
        %v1738 = vmul.f32 %v714, 0.1
        %v1739 = vmul.f32 %v715, 0.1
        %v1740 = vmul.f32 %v716, 0.1
        %v1741 = vmul.f32 %v717, 0.1
        %v1742 = vmul.f32 %v718, 0.1
        %v1743 = vmul.f32 %v719, 0.1
        %v1744 = vmul.f32 %v720, 0.1
        %v1745 = vmul.f32 %v721, 0.1
        %v1746 = vmul.f32 %v722, 0.1
        %v1747 = vmul.f32 %v723, 0.1
        %v1748 = vmul.f32 %v724, 0.1
        %v1749 = vmul.f32 %v725, 0.1
        %v1750 = vmul.f32 %v726, 0.1
        %v1751 = vmul.f32 %v727, 0.1
        %v1752 = vmul.f32 %v728, 0.1
        %v1753 = vmul.f32 %v729, 0.1
        %v1754 = vmul.f32 %v730, 0.1
        %v1755 = vmul.f32 %v731, 0.1
        %v1756 = vmul.f32 %v732, 0.1
        %v1757 = vmul.f32 %v733, 0.1
        %v1758 = vmul.f32 %v734, 0.1
        %v1759 = vmul.f32 %v735, 0.1
        %v1760 = vmul.f32 %v736, 0.1
        %v1761 = vmul.f32 %v737, 0.1
        %v1762 = vmul.f32 %v738, 0.1
        %v1763 = vmul.f32 %v739, 0.1
        %v1764 = vmul.f32 %v740, 0.1
        %v1765 = vmul.f32 %v741, 0.1
        %v1766 = vmul.f32 %v742, 0.1
        %v1767 = vmul.f32 %v743, 0.1
        %v1768 = vmul.f32 %v744, 0.1
        %v1769 = vmul.f32 %v745, 0.1
        %v1770 = vmul.f32 %v746, 0.1
        %v1771 = vmul.f32 %v747, 0.1
        %v1772 = vmul.f32 %v748, 0.1
        %v1773 = vmul.f32 %v749, 0.1
        %v1774 = vmul.f32 %v750, 0.1
        %v1775 = vmul.f32 %v751, 0.1
        %v1776 = vmul.f32 %v752, 0.1
        %v1777 = vmul.f32 %v753, 0.1
        %v1778 = vmul.f32 %v754, 0.1
        %v1779 = vmul.f32 %v755, 0.1
        %v1780 = vmul.f32 %v756, 0.1
        %v1781 = vmul.f32 %v757, 0.1
        %v1782 = vmul.f32 %v758, 0.1
        %v1783 = vmul.f32 %v759, 0.1
        %v1784 = vmul.f32 %v760, 0.1
        %v1785 = vmul.f32 %v761, 0.1
        %v1786 = vmul.f32 %v762, 0.1
        %v1787 = vmul.f32 %v763, 0.1
        %v1788 = vmul.f32 %v764, 0.1
        %v1789 = vmul.f32 %v765, 0.1
        %v1790 = vmul.f32 %v766, 0.1
        %v1791 = vmul.f32 %v767, 0.1
        %v1792 = vmul.f32 %v768, 0.1
        %v1793 = vmul.f32 %v769, 0.1
        %v1794 = vmul.f32 %v770, 0.1
        %v1795 = vmul.f32 %v771, 0.1
        %v1796 = vmul.f32 %v772, 0.1
        %v1797 = vmul.f32 %v773, 0.1
        %v1798 = vmul.f32 %v774, 0.1
        %v1799 = vmul.f32 %v775, 0.1
        %v1800 = vmul.f32 %v776, 0.1
        %v1801 = vmul.f32 %v777, 0.1
        %v1802 = vmul.f32 %v778, 0.1
        %v1803 = vmul.f32 %v779, 0.1
        %v1804 = vmul.f32 %v780, 0.1
        %v1805 = vmul.f32 %v781, 0.1
        %v1806 = vmul.f32 %v782, 0.1
        %v1807 = vmul.f32 %v783, 0.1
        %v1808 = vmul.f32 %v784, 0.1
        %v1809 = vmul.f32 %v785, 0.1
        %v1810 = vmul.f32 %v786, 0.1
        %v1811 = vmul.f32 %v787, 0.1
        %v1812 = vmul.f32 %v788, 0.1
        %v1813 = vmul.f32 %v789, 0.1
        %v1814 = vmul.f32 %v790, 0.1
        %v1815 = vmul.f32 %v791, 0.1
        %v1816 = vmul.f32 %v792, 0.1
        %v1817 = vmul.f32 %v793, 0.1
        %v1818 = vmul.f32 %v794, 0.1
        %v1819 = vmul.f32 %v795, 0.1
        %v1820 = vmul.f32 %v796, 0.1
        %v1821 = vmul.f32 %v797, 0.1
        %v1822 = vmul.f32 %v798, 0.1
        %v1823 = vmul.f32 %v799, 0.1
        %v1824 = vmul.f32 %v800, 0.1
        %v1825 = vmul.f32 %v801, 0.1
        %v1826 = vmul.f32 %v802, 0.1
        %v1827 = vmul.f32 %v803, 0.1
        %v1828 = vmul.f32 %v804, 0.1
        %v1829 = vmul.f32 %v805, 0.1
        %v1830 = vmul.f32 %v806, 0.1
        %v1831 = vmul.f32 %v807, 0.1
        %v1832 = vmul.f32 %v808, 0.1
        %v1833 = vmul.f32 %v809, 0.1
        %v1834 = vmul.f32 %v810, 0.1
        %v1835 = vmul.f32 %v811, 0.1
        %v1836 = vmul.f32 %v812, 0.1
        %v1837 = vmul.f32 %v813, 0.1
        %v1838 = vmul.f32 %v814, 0.1
        %v1839 = vmul.f32 %v815, 0.1
        %v1840 = vmul.f32 %v816, 0.1
        %v1841 = vmul.f32 %v817, 0.1
        %v1842 = vmul.f32 %v818, 0.1
        %v1843 = vmul.f32 %v819, 0.1
        %v1844 = vmul.f32 %v820, 0.1
        %v1845 = vmul.f32 %v821, 0.1
        %v1846 = vmul.f32 %v822, 0.1
        %v1847 = vmul.f32 %v823, 0.1
        %v1848 = vmul.f32 %v824, 0.1
        %v1849 = vmul.f32 %v825, 0.1
        %v1850 = vmul.f32 %v826, 0.1
        %v1851 = vmul.f32 %v827, 0.1
        %v1852 = vmul.f32 %v828, 0.1
        %v1853 = vmul.f32 %v829, 0.1
        %v1854 = vmul.f32 %v830, 0.1
        %v1855 = vmul.f32 %v831, 0.1
        %v1856 = vmul.f32 %v832, 0.1
        %v1857 = vmul.f32 %v833, 0.1
        %v1858 = vmul.f32 %v834, 0.1
        %v1859 = vmul.f32 %v835, 0.1
        %v1860 = vmul.f32 %v836, 0.1
        %v1861 = vmul.f32 %v837, 0.1
        %v1862 = vmul.f32 %v838, 0.1
        %v1863 = vmul.f32 %v839, 0.1
        %v1864 = vmul.f32 %v840, 0.1
        %v1865 = vmul.f32 %v841, 0.1
        %v1866 = vmul.f32 %v842, 0.1
        %v1867 = vmul.f32 %v843, 0.1
        %v1868 = vmul.f32 %v844, 0.1
        %v1869 = vmul.f32 %v845, 0.1
        %v1870 = vmul.f32 %v846, 0.1
        %v1871 = vmul.f32 %v847, 0.1
        %v1872 = vmul.f32 %v848, 0.1
        %v1873 = vmul.f32 %v849, 0.1
        %v1874 = vmul.f32 %v850, 0.1
        %v1875 = vmul.f32 %v851, 0.1
        %v1876 = vmul.f32 %v852, 0.1
        %v1877 = vmul.f32 %v853, 0.1
        %v1878 = vmul.f32 %v854, 0.1
        %v1879 = vmul.f32 %v855, 0.1
        %v1880 = vmul.f32 %v856, 0.1
        %v1881 = vmul.f32 %v857, 0.1
        %v1882 = vmul.f32 %v858, 0.1
        %v1883 = vmul.f32 %v859, 0.1
        %v1884 = vmul.f32 %v860, 0.1
        %v1885 = vmul.f32 %v861, 0.1
        %v1886 = vmul.f32 %v862, 0.1
        %v1887 = vmul.f32 %v863, 0.1
        %v1888 = vmul.f32 %v864, 0.1
        %v1889 = vmul.f32 %v865, 0.1
        %v1890 = vmul.f32 %v866, 0.1
        %v1891 = vmul.f32 %v867, 0.1
        %v1892 = vmul.f32 %v868, 0.1
        %v1893 = vmul.f32 %v869, 0.1
        %v1894 = vmul.f32 %v870, 0.1
        %v1895 = vmul.f32 %v871, 0.1
        %v1896 = vmul.f32 %v872, 0.1
        %v1897 = vmul.f32 %v873, 0.1
        %v1898 = vmul.f32 %v874, 0.1
        %v1899 = vmul.f32 %v875, 0.1
        %v1900 = vmul.f32 %v876, 0.1
        %v1901 = vmul.f32 %v877, 0.1
        %v1902 = vmul.f32 %v878, 0.1
        %v1903 = vmul.f32 %v879, 0.1
        %v1904 = vmul.f32 %v880, 0.1
        %v1905 = vmul.f32 %v881, 0.1
        %v1906 = vmul.f32 %v882, 0.1
        %v1907 = vmul.f32 %v883, 0.1
        %v1908 = vmul.f32 %v884, 0.1
        %v1909 = vmul.f32 %v885, 0.1
        %v1910 = vmul.f32 %v886, 0.1
        %v1911 = vmul.f32 %v887, 0.1
        %v1912 = vmul.f32 %v888, 0.1
        %v1913 = vmul.f32 %v889, 0.1
        %v1914 = vmul.f32 %v890, 0.1
        %v1915 = vmul.f32 %v891, 0.1
        %v1916 = vmul.f32 %v892, 0.1
        %v1917 = vmul.f32 %v893, 0.1
        %v1918 = vmul.f32 %v894, 0.1
        %v1919 = vmul.f32 %v895, 0.1
        %v1920 = vmul.f32 %v896, 0.1
        %v1921 = vmul.f32 %v897, 0.1
        %v1922 = vmul.f32 %v898, 0.1
        %v1923 = vmul.f32 %v899, 0.1
        %v1924 = vmul.f32 %v900, 0.1
        %v1925 = vmul.f32 %v901, 0.1
        %v1926 = vmul.f32 %v902, 0.1
        %v1927 = vmul.f32 %v903, 0.1
        %v1928 = vmul.f32 %v904, 0.1
        %v1929 = vmul.f32 %v905, 0.1
        %v1930 = vmul.f32 %v906, 0.1
        %v1931 = vmul.f32 %v907, 0.1
        %v1932 = vmul.f32 %v908, 0.1
        %v1933 = vmul.f32 %v909, 0.1
        %v1934 = vmul.f32 %v910, 0.1
        %v1935 = vmul.f32 %v911, 0.1
        %v1936 = vmul.f32 %v912, 0.1
        %v1937 = vmul.f32 %v913, 0.1
        %v1938 = vmul.f32 %v914, 0.1
        %v1939 = vmul.f32 %v915, 0.1
        %v1940 = vmul.f32 %v916, 0.1
        %v1941 = vmul.f32 %v917, 0.1
        %v1942 = vmul.f32 %v918, 0.1
        %v1943 = vmul.f32 %v919, 0.1
        %v1944 = vmul.f32 %v920, 0.1
        %v1945 = vmul.f32 %v921, 0.1
        %v1946 = vmul.f32 %v922, 0.1
        %v1947 = vmul.f32 %v923, 0.1
        %v1948 = vmul.f32 %v924, 0.1
        %v1949 = vmul.f32 %v925, 0.1
        %v1950 = vmul.f32 %v926, 0.1
        %v1951 = vmul.f32 %v927, 0.1
        %v1952 = vmul.f32 %v928, 0.1
        %v1953 = vmul.f32 %v929, 0.1
        %v1954 = vmul.f32 %v930, 0.1
        %v1955 = vmul.f32 %v931, 0.1
        %v1956 = vmul.f32 %v932, 0.1
        %v1957 = vmul.f32 %v933, 0.1
        %v1958 = vmul.f32 %v934, 0.1
        %v1959 = vmul.f32 %v935, 0.1
        %v1960 = vmul.f32 %v936, 0.1
        %v1961 = vmul.f32 %v937, 0.1
        %v1962 = vmul.f32 %v938, 0.1
        %v1963 = vmul.f32 %v939, 0.1
        %v1964 = vmul.f32 %v940, 0.1
        %v1965 = vmul.f32 %v941, 0.1
        %v1966 = vmul.f32 %v942, 0.1
        %v1967 = vmul.f32 %v943, 0.1
        %v1968 = vmul.f32 %v944, 0.1
        %v1969 = vmul.f32 %v945, 0.1
        %v1970 = vmul.f32 %v946, 0.1
        %v1971 = vmul.f32 %v947, 0.1
        %v1972 = vmul.f32 %v948, 0.1
        %v1973 = vmul.f32 %v949, 0.1
        %v1974 = vmul.f32 %v950, 0.1
        %v1975 = vmul.f32 %v951, 0.1
        %v1976 = vmul.f32 %v952, 0.1
        %v1977 = vmul.f32 %v953, 0.1
        %v1978 = vmul.f32 %v954, 0.1
        %v1979 = vmul.f32 %v955, 0.1
        %v1980 = vmul.f32 %v956, 0.1
        %v1981 = vmul.f32 %v957, 0.1
        %v1982 = vmul.f32 %v958, 0.1
        %v1983 = vmul.f32 %v959, 0.1
        %v1984 = vmul.f32 %v960, 0.1
        %v1985 = vmul.f32 %v961, 0.1
        %v1986 = vmul.f32 %v962, 0.1
        %v1987 = vmul.f32 %v963, 0.1
        %v1988 = vmul.f32 %v964, 0.1
        %v1989 = vmul.f32 %v965, 0.1
        %v1990 = vmul.f32 %v966, 0.1
        %v1991 = vmul.f32 %v967, 0.1
        %v1992 = vmul.f32 %v968, 0.1
        %v1993 = vmul.f32 %v969, 0.1
        %v1994 = vmul.f32 %v970, 0.1
        %v1995 = vmul.f32 %v971, 0.1
        %v1996 = vmul.f32 %v972, 0.1
        %v1997 = vmul.f32 %v973, 0.1
        %v1998 = vmul.f32 %v974, 0.1
        %v1999 = vmul.f32 %v975, 0.1
        %v2000 = vmul.f32 %v976, 0.1
        %v2001 = vmul.f32 %v977, 0.1
        %v2002 = vmul.f32 %v978, 0.1
        %v2003 = vmul.f32 %v979, 0.1
        %v2004 = vmul.f32 %v980, 0.1
        %v2005 = vmul.f32 %v981, 0.1
        %v2006 = vmul.f32 %v982, 0.1
        %v2007 = vmul.f32 %v983, 0.1
        %v2008 = vmul.f32 %v984, 0.1
        %v2009 = vmul.f32 %v985, 0.1
        %v2010 = vmul.f32 %v986, 0.1
        %v2011 = vmul.f32 %v987, 0.1
        %v2012 = vmul.f32 %v988, 0.1
        %v2013 = vmul.f32 %v989, 0.1
        %v2014 = vmul.f32 %v990, 0.1
        %v2015 = vmul.f32 %v991, 0.1
        %v2016 = vmul.f32 %v992, 0.1
        %v2017 = vmul.f32 %v993, 0.1
        %v2018 = vmul.f32 %v994, 0.1
        %v2019 = vmul.f32 %v995, 0.1
        %v2020 = vmul.f32 %v996, 0.1
        %v2021 = vmul.f32 %v997, 0.1
        %v2022 = vmul.f32 %v998, 0.1
        %v2023 = vmul.f32 %v999, 0.1
        %v2024 = vmul.f32 %v1000, 0.1
        %v2025 = vmul.f32 %v1001, 0.1
        %v2026 = vmul.f32 %v1002, 0.1
        %v2027 = vmul.f32 %v1003, 0.1
        %v2028 = vmul.f32 %v1004, 0.1
        %v2029 = vmul.f32 %v1005, 0.1
        %v2030 = vmul.f32 %v1006, 0.1
        %v2031 = vmul.f32 %v1007, 0.1
        %v2032 = vmul.f32 %v1008, 0.1
        %v2033 = vmul.f32 %v1009, 0.1
        %v2034 = vmul.f32 %v1010, 0.1
        %v2035 = vmul.f32 %v1011, 0.1
        %v2036 = vmul.f32 %v1012, 0.1
        %v2037 = vmul.f32 %v1013, 0.1
        %v2038 = vmul.f32 %v1014, 0.1
        %v2039 = vmul.f32 %v1015, 0.1
        %v2040 = vmul.f32 %v1016, 0.1
        %v2041 = vmul.f32 %v1017, 0.1
        %v2042 = vmul.f32 %v1018, 0.1
        %v2043 = vmul.f32 %v1019, 0.1
        %v2044 = vmul.f32 %v1020, 0.1
        %v2045 = vmul.f32 %v1021, 0.1
        %v2046 = vmul.f32 %v1022, 0.1
        %v2047 = vmul.f32 %v1023, 0.1
        %v2048 = vmul.f32 %v1024, 0.1
        %v2049 = vmul.f32 %v1025, 0.1
        %v2050 = vmul.f32 %v1026, 0.1
        %v2051 = vmul.f32 %v1027, 0.1
        %v2052 = vmul.f32 %v1028, 0.1
        %v2053 = vmul.f32 %v1029, 0.1
        %v2054 = vmul.f32 %v1030, 0.1
        %v2055 = vmul.f32 %v1031, 0.1
        %v2056 = vmul.f32 %v1032, 0.1
        %v2057 = vmul.f32 %v1033, 0.1
        %v2058 = vmul.f32 %v1034, 0.1
        %v2059 = vmul.f32 %v1035, 0.1
        %v2060 = vmul.f32 %v1036, 0.1
        %v2061 = vmul.f32 %v1037, 0.1
        %v2062 = vmul.f32 %v1038, 0.1
        %v2063 = vmul.f32 %v1039, 0.1
        %v2064 = vmul.f32 %v1040, 0.1
        %v2065 = vmul.f32 %v1041, 0.1
        %v2066 = vmul.f32 %v1042, 0.1
        %v2067 = vmul.f32 %v1043, 0.1
        %v2068 = vmul.f32 %v1044, 0.1
        %v2069 = vmul.f32 %v1045, 0.1
        %v2070 = vmul.f32 %v1046, 0.1
        %v2071 = vmul.f32 %v1047, 0.1
        %v2072 = vmul.f32 %v1048, 0.1
        %v2073 = vmul.f32 %v1049, 0.1
        %v2074 = vmul.f32 %v1050, 0.1
        %v2075 = vmul.f32 %v1051, 0.1
        %v2076 = vmul.f32 %v1052, 0.1
        %v2077 = vmul.f32 %v1053, 0.1
        %v2078 = vmul.f32 %v1054, 0.1
        %v2079 = vmul.f32 %v1055, 0.1
        %v2080 = vmul.f32 %v1056, 0.1
        %v2081 = vmul.f32 %v1057, 0.1
        %v2082 = vmul.f32 %v1058, 0.1
        %v2083 = vmul.f32 %v1059, 0.1
        %v2084 = vmul.f32 %v1060, 0.1
        %v2085 = vmul.f32 %v1061, 0.1
        %v2086 = vmul.f32 %v1062, 0.1
        %v2087 = vmul.f32 %v1063, 0.1
        %v2088 = vmul.f32 %v1064, 0.1
        %v2089 = vmul.f32 %v1065, 0.1
        %v2090 = vmul.f32 %v1066, 0.1
        %v2091 = vmul.f32 %v1067, 0.1
        %v2092 = vmul.f32 %v1068, 0.1
        %v2093 = vmul.f32 %v1069, 0.1
        %v2094 = vmul.f32 %v1070, 0.1
        %v2095 = vmul.f32 %v1071, 0.1
        %v2096 = vmul.f32 %v1072, 0.1
        %v2097 = vmul.f32 %v1073, 0.1
        %v2098 = vmul.f32 %v1074, 0.1
        %v2099 = vmul.f32 %v1075, 0.1
        %v2100 = vmul.f32 %v1076, 0.1
        %v2101 = vmul.f32 %v1077, 0.1
        %v2102 = vmul.f32 %v1078, 0.1
        %v2103 = vmul.f32 %v1079, 0.1
        %v2104 = vmul.f32 %v1080, 0.1
        %v2105 = vmul.f32 %v1081, 0.1
        %v2106 = vmul.f32 %v1082, 0.1
        %v2107 = vmul.f32 %v1083, 0.1
        %v2108 = vmul.f32 %v1084, 0.1
        %v2109 = vmul.f32 %v1085, 0.1
        %v2110 = vmul.f32 %v1086, 0.1
        %v2111 = vmul.f32 %v1087, 0.1
        %v2112 = vmul.f32 %v1088, 0.1
        %v2113 = vmul.f32 %v1089, 0.1
        %v2114 = vmul.f32 %v1090, 0.1
        %v2115 = vmul.f32 %v1091, 0.1
        %v2116 = vmul.f32 %v1092, 0.1
        %v2117 = vmul.f32 %v1093, 0.1
        %v2118 = vmul.f32 %v1094, 0.1
        %v2119 = vmul.f32 %v1095, 0.1
        %v2120 = vmul.f32 %v1096, 0.1
        %v2121 = vmul.f32 %v1097, 0.1
        %v2122 = vmul.f32 %v1098, 0.1
        %v2123 = vmul.f32 %v1099, 0.1
        %v2124 = vmul.f32 %v1100, 0.1
        %v2125 = vmul.f32 %v1101, 0.1
        %v2126 = vmul.f32 %v1102, 0.1
        %v2127 = vmul.f32 %v1103, 0.1
        %v2128 = vmul.f32 %v1104, 0.1
        %v2129 = vmul.f32 %v1105, 0.1
        %v2130 = vmul.f32 %v1106, 0.1
        %v2131 = vmul.f32 %v1107, 0.1
        %v2132 = vmul.f32 %v1108, 0.1
        %v2133 = vmul.f32 %v1109, 0.1
        %v2134 = vmul.f32 %v1110, 0.1
        %v2135 = vmul.f32 %v1111, 0.1
        %v2136 = vmul.f32 %v1112, 0.1
        %v2137 = vmul.f32 %v1113, 0.1
        %v2138 = vmul.f32 %v1114, 0.1
        %v2139 = vmul.f32 %v1115, 0.1
        %v2140 = vmul.f32 %v1116, 0.1
        %v2141 = vmul.f32 %v1117, 0.1
        %v2142 = vmul.f32 %v1118, 0.1
        %v2143 = vmul.f32 %v1119, 0.1
        %v2144 = vmul.f32 %v1120, 0.1
        %v2145 = vmul.f32 %v1121, 0.1
        %v2146 = vmul.f32 %v1122, 0.1
        %v2147 = vmul.f32 %v1123, 0.1
        %v2148 = vmul.f32 %v1124, 0.1
        %v2149 = vmul.f32 %v1125, 0.1
        %v2150 = vmul.f32 %v1126, 0.1
        %v2151 = vmul.f32 %v1127, 0.1
        %v2152 = vmul.f32 %v1128, 0.1
        %v2153 = vmul.f32 %v1129, 0.1
        %v2154 = vmul.f32 %v1130, 0.1
        %v2155 = vmul.f32 %v1131, 0.1
        %v2156 = vmul.f32 %v1132, 0.1
        %v2157 = vmul.f32 %v1133, 0.1
        %v2158 = vmul.f32 %v1134, 0.1
        %v2159 = vmul.f32 %v1135, 0.1
        %v2160 = vmul.f32 %v1136, 0.1
        %v2161 = vmul.f32 %v1137, 0.1
        %v2162 = vmul.f32 %v1138, 0.1
        %v2163 = vmul.f32 %v1139, 0.1
        %v2164 = vmul.f32 %v1140, 0.1
        %v2165 = vmul.f32 %v1141, 0.1
        %v2166 = vmul.f32 %v1142, 0.1
        %v2167 = vmul.f32 %v1143, 0.1
        %v2168 = vmul.f32 %v1144, 0.1
        %v2169 = vmul.f32 %v1145, 0.1
        %v2170 = vmul.f32 %v1146, 0.1
        %v2171 = vmul.f32 %v1147, 0.1
        %v2172 = vmul.f32 %v1148, 0.1
        %v2173 = vmul.f32 %v1149, 0.1
        %v2174 = vmul.f32 %v1150, 0.1
        %v2175 = vmul.f32 %v1151, 0.1
        %v2176 = vmul.f32 %v1152, 0.1
        %v2177 = vmul.f32 %v1153, 0.1
        %v2178 = vmul.f32 %v1154, 0.1
        %v2179 = vmul.f32 %v1155, 0.1
        %v2180 = vmul.f32 %v1156, 0.1
        %v2181 = vmul.f32 %v1157, 0.1
        %v2182 = vmul.f32 %v1158, 0.1
        %v2183 = vmul.f32 %v1159, 0.1
        %v2184 = vmul.f32 %v1160, 0.1
        %v2185 = vmul.f32 %v1161, 0.1
        %v2186 = vmul.f32 %v1162, 0.1
        %v2187 = vmul.f32 %v1163, 0.1
        %v2188 = vmul.f32 %v1164, 0.1
        %v2189 = vmul.f32 %v1165, 0.1
        %v2190 = vmul.f32 %v1166, 0.1
        %v2191 = vmul.f32 %v1167, 0.1
        %v2192 = vmul.f32 %v1168, 0.1
        %v2193 = vmul.f32 %v1169, 0.1
        %v2194 = vmul.f32 %v1170, 0.1
        %v2195 = vmul.f32 %v1171, 0.1
        %v2196 = vmul.f32 %v1172, 0.1
        %v2197 = vmul.f32 %v1173, 0.1
        %v2198 = vmul.f32 %v1174, 0.1
        %v2199 = vmax.f32 %v151, %v1175
        %v2200 = vmax.f32 %v152, %v1176
        %v2201 = vmax.f32 %v153, %v1177
        %v2202 = vmax.f32 %v154, %v1178
        %v2203 = vmax.f32 %v155, %v1179
        %v2204 = vmax.f32 %v156, %v1180
        %v2205 = vmax.f32 %v157, %v1181
        %v2206 = vmax.f32 %v158, %v1182
        %v2207 = vmax.f32 %v159, %v1183
        %v2208 = vmax.f32 %v160, %v1184
        %v2209 = vmax.f32 %v161, %v1185
        %v2210 = vmax.f32 %v162, %v1186
        %v2211 = vmax.f32 %v163, %v1187
        %v2212 = vmax.f32 %v164, %v1188
        %v2213 = vmax.f32 %v165, %v1189
        %v2214 = vmax.f32 %v166, %v1190
        %v2215 = vmax.f32 %v167, %v1191
        %v2216 = vmax.f32 %v168, %v1192
        %v2217 = vmax.f32 %v169, %v1193
        %v2218 = vmax.f32 %v170, %v1194
        %v2219 = vmax.f32 %v171, %v1195
        %v2220 = vmax.f32 %v172, %v1196
        %v2221 = vmax.f32 %v173, %v1197
        %v2222 = vmax.f32 %v174, %v1198
        %v2223 = vmax.f32 %v175, %v1199
        %v2224 = vmax.f32 %v176, %v1200
        %v2225 = vmax.f32 %v177, %v1201
        %v2226 = vmax.f32 %v178, %v1202
        %v2227 = vmax.f32 %v179, %v1203
        %v2228 = vmax.f32 %v180, %v1204
        %v2229 = vmax.f32 %v181, %v1205
        %v2230 = vmax.f32 %v182, %v1206
        %v2231 = vmax.f32 %v183, %v1207
        %v2232 = vmax.f32 %v184, %v1208
        %v2233 = vmax.f32 %v185, %v1209
        %v2234 = vmax.f32 %v186, %v1210
        %v2235 = vmax.f32 %v187, %v1211
        %v2236 = vmax.f32 %v188, %v1212
        %v2237 = vmax.f32 %v189, %v1213
        %v2238 = vmax.f32 %v190, %v1214
        %v2239 = vmax.f32 %v191, %v1215
        %v2240 = vmax.f32 %v192, %v1216
        %v2241 = vmax.f32 %v193, %v1217
        %v2242 = vmax.f32 %v194, %v1218
        %v2243 = vmax.f32 %v195, %v1219
        %v2244 = vmax.f32 %v196, %v1220
        %v2245 = vmax.f32 %v197, %v1221
        %v2246 = vmax.f32 %v198, %v1222
        %v2247 = vmax.f32 %v199, %v1223
        %v2248 = vmax.f32 %v200, %v1224
        %v2249 = vmax.f32 %v201, %v1225
        %v2250 = vmax.f32 %v202, %v1226
        %v2251 = vmax.f32 %v203, %v1227
        %v2252 = vmax.f32 %v204, %v1228
        %v2253 = vmax.f32 %v205, %v1229
        %v2254 = vmax.f32 %v206, %v1230
        %v2255 = vmax.f32 %v207, %v1231
        %v2256 = vmax.f32 %v208, %v1232
        %v2257 = vmax.f32 %v209, %v1233
        %v2258 = vmax.f32 %v210, %v1234
        %v2259 = vmax.f32 %v211, %v1235
        %v2260 = vmax.f32 %v212, %v1236
        %v2261 = vmax.f32 %v213, %v1237
        %v2262 = vmax.f32 %v214, %v1238
        %v2263 = vmax.f32 %v215, %v1239
        %v2264 = vmax.f32 %v216, %v1240
        %v2265 = vmax.f32 %v217, %v1241
        %v2266 = vmax.f32 %v218, %v1242
        %v2267 = vmax.f32 %v219, %v1243
        %v2268 = vmax.f32 %v220, %v1244
        %v2269 = vmax.f32 %v221, %v1245
        %v2270 = vmax.f32 %v222, %v1246
        %v2271 = vmax.f32 %v223, %v1247
        %v2272 = vmax.f32 %v224, %v1248
        %v2273 = vmax.f32 %v225, %v1249
        %v2274 = vmax.f32 %v226, %v1250
        %v2275 = vmax.f32 %v227, %v1251
        %v2276 = vmax.f32 %v228, %v1252
        %v2277 = vmax.f32 %v229, %v1253
        %v2278 = vmax.f32 %v230, %v1254
        %v2279 = vmax.f32 %v231, %v1255
        %v2280 = vmax.f32 %v232, %v1256
        %v2281 = vmax.f32 %v233, %v1257
        %v2282 = vmax.f32 %v234, %v1258
        %v2283 = vmax.f32 %v235, %v1259
        %v2284 = vmax.f32 %v236, %v1260
        %v2285 = vmax.f32 %v237, %v1261
        %v2286 = vmax.f32 %v238, %v1262
        %v2287 = vmax.f32 %v239, %v1263
        %v2288 = vmax.f32 %v240, %v1264
        %v2289 = vmax.f32 %v241, %v1265
        %v2290 = vmax.f32 %v242, %v1266
        %v2291 = vmax.f32 %v243, %v1267
        %v2292 = vmax.f32 %v244, %v1268
        %v2293 = vmax.f32 %v245, %v1269
        %v2294 = vmax.f32 %v246, %v1270
        %v2295 = vmax.f32 %v247, %v1271
        %v2296 = vmax.f32 %v248, %v1272
        %v2297 = vmax.f32 %v249, %v1273
        %v2298 = vmax.f32 %v250, %v1274
        %v2299 = vmax.f32 %v251, %v1275
        %v2300 = vmax.f32 %v252, %v1276
        %v2301 = vmax.f32 %v253, %v1277
        %v2302 = vmax.f32 %v254, %v1278
        %v2303 = vmax.f32 %v255, %v1279
        %v2304 = vmax.f32 %v256, %v1280
        %v2305 = vmax.f32 %v257, %v1281
        %v2306 = vmax.f32 %v258, %v1282
        %v2307 = vmax.f32 %v259, %v1283
        %v2308 = vmax.f32 %v260, %v1284
        %v2309 = vmax.f32 %v261, %v1285
        %v2310 = vmax.f32 %v262, %v1286
        %v2311 = vmax.f32 %v263, %v1287
        %v2312 = vmax.f32 %v264, %v1288
        %v2313 = vmax.f32 %v265, %v1289
        %v2314 = vmax.f32 %v266, %v1290
        %v2315 = vmax.f32 %v267, %v1291
        %v2316 = vmax.f32 %v268, %v1292
        %v2317 = vmax.f32 %v269, %v1293
        %v2318 = vmax.f32 %v270, %v1294
        %v2319 = vmax.f32 %v271, %v1295
        %v2320 = vmax.f32 %v272, %v1296
        %v2321 = vmax.f32 %v273, %v1297
        %v2322 = vmax.f32 %v274, %v1298
        %v2323 = vmax.f32 %v275, %v1299
        %v2324 = vmax.f32 %v276, %v1300
        %v2325 = vmax.f32 %v277, %v1301
        %v2326 = vmax.f32 %v278, %v1302
        %v2327 = vmax.f32 %v279, %v1303
        %v2328 = vmax.f32 %v280, %v1304
        %v2329 = vmax.f32 %v281, %v1305
        %v2330 = vmax.f32 %v282, %v1306
        %v2331 = vmax.f32 %v283, %v1307
        %v2332 = vmax.f32 %v284, %v1308
        %v2333 = vmax.f32 %v285, %v1309
        %v2334 = vmax.f32 %v286, %v1310
        %v2335 = vmax.f32 %v287, %v1311
        %v2336 = vmax.f32 %v288, %v1312
        %v2337 = vmax.f32 %v289, %v1313
        %v2338 = vmax.f32 %v290, %v1314
        %v2339 = vmax.f32 %v291, %v1315
        %v2340 = vmax.f32 %v292, %v1316
        %v2341 = vmax.f32 %v293, %v1317
        %v2342 = vmax.f32 %v294, %v1318
        %v2343 = vmax.f32 %v295, %v1319
        %v2344 = vmax.f32 %v296, %v1320
        %v2345 = vmax.f32 %v297, %v1321
        %v2346 = vmax.f32 %v298, %v1322
        %v2347 = vmax.f32 %v299, %v1323
        %v2348 = vmax.f32 %v300, %v1324
        %v2349 = vmax.f32 %v301, %v1325
        %v2350 = vmax.f32 %v302, %v1326
        %v2351 = vmax.f32 %v303, %v1327
        %v2352 = vmax.f32 %v304, %v1328
        %v2353 = vmax.f32 %v305, %v1329
        %v2354 = vmax.f32 %v306, %v1330
        %v2355 = vmax.f32 %v307, %v1331
        %v2356 = vmax.f32 %v308, %v1332
        %v2357 = vmax.f32 %v309, %v1333
        %v2358 = vmax.f32 %v310, %v1334
        %v2359 = vmax.f32 %v311, %v1335
        %v2360 = vmax.f32 %v312, %v1336
        %v2361 = vmax.f32 %v313, %v1337
        %v2362 = vmax.f32 %v314, %v1338
        %v2363 = vmax.f32 %v315, %v1339
        %v2364 = vmax.f32 %v316, %v1340
        %v2365 = vmax.f32 %v317, %v1341
        %v2366 = vmax.f32 %v318, %v1342
        %v2367 = vmax.f32 %v319, %v1343
        %v2368 = vmax.f32 %v320, %v1344
        %v2369 = vmax.f32 %v321, %v1345
        %v2370 = vmax.f32 %v322, %v1346
        %v2371 = vmax.f32 %v323, %v1347
        %v2372 = vmax.f32 %v324, %v1348
        %v2373 = vmax.f32 %v325, %v1349
        %v2374 = vmax.f32 %v326, %v1350
        %v2375 = vmax.f32 %v327, %v1351
        %v2376 = vmax.f32 %v328, %v1352
        %v2377 = vmax.f32 %v329, %v1353
        %v2378 = vmax.f32 %v330, %v1354
        %v2379 = vmax.f32 %v331, %v1355
        %v2380 = vmax.f32 %v332, %v1356
        %v2381 = vmax.f32 %v333, %v1357
        %v2382 = vmax.f32 %v334, %v1358
        %v2383 = vmax.f32 %v335, %v1359
        %v2384 = vmax.f32 %v336, %v1360
        %v2385 = vmax.f32 %v337, %v1361
        %v2386 = vmax.f32 %v338, %v1362
        %v2387 = vmax.f32 %v339, %v1363
        %v2388 = vmax.f32 %v340, %v1364
        %v2389 = vmax.f32 %v341, %v1365
        %v2390 = vmax.f32 %v342, %v1366
        %v2391 = vmax.f32 %v343, %v1367
        %v2392 = vmax.f32 %v344, %v1368
        %v2393 = vmax.f32 %v345, %v1369
        %v2394 = vmax.f32 %v346, %v1370
        %v2395 = vmax.f32 %v347, %v1371
        %v2396 = vmax.f32 %v348, %v1372
        %v2397 = vmax.f32 %v349, %v1373
        %v2398 = vmax.f32 %v350, %v1374
        %v2399 = vmax.f32 %v351, %v1375
        %v2400 = vmax.f32 %v352, %v1376
        %v2401 = vmax.f32 %v353, %v1377
        %v2402 = vmax.f32 %v354, %v1378
        %v2403 = vmax.f32 %v355, %v1379
        %v2404 = vmax.f32 %v356, %v1380
        %v2405 = vmax.f32 %v357, %v1381
        %v2406 = vmax.f32 %v358, %v1382
        %v2407 = vmax.f32 %v359, %v1383
        %v2408 = vmax.f32 %v360, %v1384
        %v2409 = vmax.f32 %v361, %v1385
        %v2410 = vmax.f32 %v362, %v1386
        %v2411 = vmax.f32 %v363, %v1387
        %v2412 = vmax.f32 %v364, %v1388
        %v2413 = vmax.f32 %v365, %v1389
        %v2414 = vmax.f32 %v366, %v1390
        %v2415 = vmax.f32 %v367, %v1391
        %v2416 = vmax.f32 %v368, %v1392
        %v2417 = vmax.f32 %v369, %v1393
        %v2418 = vmax.f32 %v370, %v1394
        %v2419 = vmax.f32 %v371, %v1395
        %v2420 = vmax.f32 %v372, %v1396
        %v2421 = vmax.f32 %v373, %v1397
        %v2422 = vmax.f32 %v374, %v1398
        %v2423 = vmax.f32 %v375, %v1399
        %v2424 = vmax.f32 %v376, %v1400
        %v2425 = vmax.f32 %v377, %v1401
        %v2426 = vmax.f32 %v378, %v1402
        %v2427 = vmax.f32 %v379, %v1403
        %v2428 = vmax.f32 %v380, %v1404
        %v2429 = vmax.f32 %v381, %v1405
        %v2430 = vmax.f32 %v382, %v1406
        %v2431 = vmax.f32 %v383, %v1407
        %v2432 = vmax.f32 %v384, %v1408
        %v2433 = vmax.f32 %v385, %v1409
        %v2434 = vmax.f32 %v386, %v1410
        %v2435 = vmax.f32 %v387, %v1411
        %v2436 = vmax.f32 %v388, %v1412
        %v2437 = vmax.f32 %v389, %v1413
        %v2438 = vmax.f32 %v390, %v1414
        %v2439 = vmax.f32 %v391, %v1415
        %v2440 = vmax.f32 %v392, %v1416
        %v2441 = vmax.f32 %v393, %v1417
        %v2442 = vmax.f32 %v394, %v1418
        %v2443 = vmax.f32 %v395, %v1419
        %v2444 = vmax.f32 %v396, %v1420
        %v2445 = vmax.f32 %v397, %v1421
        %v2446 = vmax.f32 %v398, %v1422
        %v2447 = vmax.f32 %v399, %v1423
        %v2448 = vmax.f32 %v400, %v1424
        %v2449 = vmax.f32 %v401, %v1425
        %v2450 = vmax.f32 %v402, %v1426
        %v2451 = vmax.f32 %v403, %v1427
        %v2452 = vmax.f32 %v404, %v1428
        %v2453 = vmax.f32 %v405, %v1429
        %v2454 = vmax.f32 %v406, %v1430
        %v2455 = vmax.f32 %v407, %v1431
        %v2456 = vmax.f32 %v408, %v1432
        %v2457 = vmax.f32 %v409, %v1433
        %v2458 = vmax.f32 %v410, %v1434
        %v2459 = vmax.f32 %v411, %v1435
        %v2460 = vmax.f32 %v412, %v1436
        %v2461 = vmax.f32 %v413, %v1437
        %v2462 = vmax.f32 %v414, %v1438
        %v2463 = vmax.f32 %v415, %v1439
        %v2464 = vmax.f32 %v416, %v1440
        %v2465 = vmax.f32 %v417, %v1441
        %v2466 = vmax.f32 %v418, %v1442
        %v2467 = vmax.f32 %v419, %v1443
        %v2468 = vmax.f32 %v420, %v1444
        %v2469 = vmax.f32 %v421, %v1445
        %v2470 = vmax.f32 %v422, %v1446
        %v2471 = vmax.f32 %v423, %v1447
        %v2472 = vmax.f32 %v424, %v1448
        %v2473 = vmax.f32 %v425, %v1449
        %v2474 = vmax.f32 %v426, %v1450
        %v2475 = vmax.f32 %v427, %v1451
        %v2476 = vmax.f32 %v428, %v1452
        %v2477 = vmax.f32 %v429, %v1453
        %v2478 = vmax.f32 %v430, %v1454
        %v2479 = vmax.f32 %v431, %v1455
        %v2480 = vmax.f32 %v432, %v1456
        %v2481 = vmax.f32 %v433, %v1457
        %v2482 = vmax.f32 %v434, %v1458
        %v2483 = vmax.f32 %v435, %v1459
        %v2484 = vmax.f32 %v436, %v1460
        %v2485 = vmax.f32 %v437, %v1461
        %v2486 = vmax.f32 %v438, %v1462
        %v2487 = vmax.f32 %v439, %v1463
        %v2488 = vmax.f32 %v440, %v1464
        %v2489 = vmax.f32 %v441, %v1465
        %v2490 = vmax.f32 %v442, %v1466
        %v2491 = vmax.f32 %v443, %v1467
        %v2492 = vmax.f32 %v444, %v1468
        %v2493 = vmax.f32 %v445, %v1469
        %v2494 = vmax.f32 %v446, %v1470
        %v2495 = vmax.f32 %v447, %v1471
        %v2496 = vmax.f32 %v448, %v1472
        %v2497 = vmax.f32 %v449, %v1473
        %v2498 = vmax.f32 %v450, %v1474
        %v2499 = vmax.f32 %v451, %v1475
        %v2500 = vmax.f32 %v452, %v1476
        %v2501 = vmax.f32 %v453, %v1477
        %v2502 = vmax.f32 %v454, %v1478
        %v2503 = vmax.f32 %v455, %v1479
        %v2504 = vmax.f32 %v456, %v1480
        %v2505 = vmax.f32 %v457, %v1481
        %v2506 = vmax.f32 %v458, %v1482
        %v2507 = vmax.f32 %v459, %v1483
        %v2508 = vmax.f32 %v460, %v1484
        %v2509 = vmax.f32 %v461, %v1485
        %v2510 = vmax.f32 %v462, %v1486
        %v2511 = vmax.f32 %v463, %v1487
        %v2512 = vmax.f32 %v464, %v1488
        %v2513 = vmax.f32 %v465, %v1489
        %v2514 = vmax.f32 %v466, %v1490
        %v2515 = vmax.f32 %v467, %v1491
        %v2516 = vmax.f32 %v468, %v1492
        %v2517 = vmax.f32 %v469, %v1493
        %v2518 = vmax.f32 %v470, %v1494
        %v2519 = vmax.f32 %v471, %v1495
        %v2520 = vmax.f32 %v472, %v1496
        %v2521 = vmax.f32 %v473, %v1497
        %v2522 = vmax.f32 %v474, %v1498
        %v2523 = vmax.f32 %v475, %v1499
        %v2524 = vmax.f32 %v476, %v1500
        %v2525 = vmax.f32 %v477, %v1501
        %v2526 = vmax.f32 %v478, %v1502
        %v2527 = vmax.f32 %v479, %v1503
        %v2528 = vmax.f32 %v480, %v1504
        %v2529 = vmax.f32 %v481, %v1505
        %v2530 = vmax.f32 %v482, %v1506
        %v2531 = vmax.f32 %v483, %v1507
        %v2532 = vmax.f32 %v484, %v1508
        %v2533 = vmax.f32 %v485, %v1509
        %v2534 = vmax.f32 %v486, %v1510
        %v2535 = vmax.f32 %v487, %v1511
        %v2536 = vmax.f32 %v488, %v1512
        %v2537 = vmax.f32 %v489, %v1513
        %v2538 = vmax.f32 %v490, %v1514
        %v2539 = vmax.f32 %v491, %v1515
        %v2540 = vmax.f32 %v492, %v1516
        %v2541 = vmax.f32 %v493, %v1517
        %v2542 = vmax.f32 %v494, %v1518
        %v2543 = vmax.f32 %v495, %v1519
        %v2544 = vmax.f32 %v496, %v1520
        %v2545 = vmax.f32 %v497, %v1521
        %v2546 = vmax.f32 %v498, %v1522
        %v2547 = vmax.f32 %v499, %v1523
        %v2548 = vmax.f32 %v500, %v1524
        %v2549 = vmax.f32 %v501, %v1525
        %v2550 = vmax.f32 %v502, %v1526
        %v2551 = vmax.f32 %v503, %v1527
        %v2552 = vmax.f32 %v504, %v1528
        %v2553 = vmax.f32 %v505, %v1529
        %v2554 = vmax.f32 %v506, %v1530
        %v2555 = vmax.f32 %v507, %v1531
        %v2556 = vmax.f32 %v508, %v1532
        %v2557 = vmax.f32 %v509, %v1533
        %v2558 = vmax.f32 %v510, %v1534
        %v2559 = vmax.f32 %v511, %v1535
        %v2560 = vmax.f32 %v512, %v1536
        %v2561 = vmax.f32 %v513, %v1537
        %v2562 = vmax.f32 %v514, %v1538
        %v2563 = vmax.f32 %v515, %v1539
        %v2564 = vmax.f32 %v516, %v1540
        %v2565 = vmax.f32 %v517, %v1541
        %v2566 = vmax.f32 %v518, %v1542
        %v2567 = vmax.f32 %v519, %v1543
        %v2568 = vmax.f32 %v520, %v1544
        %v2569 = vmax.f32 %v521, %v1545
        %v2570 = vmax.f32 %v522, %v1546
        %v2571 = vmax.f32 %v523, %v1547
        %v2572 = vmax.f32 %v524, %v1548
        %v2573 = vmax.f32 %v525, %v1549
        %v2574 = vmax.f32 %v526, %v1550
        %v2575 = vmax.f32 %v527, %v1551
        %v2576 = vmax.f32 %v528, %v1552
        %v2577 = vmax.f32 %v529, %v1553
        %v2578 = vmax.f32 %v530, %v1554
        %v2579 = vmax.f32 %v531, %v1555
        %v2580 = vmax.f32 %v532, %v1556
        %v2581 = vmax.f32 %v533, %v1557
        %v2582 = vmax.f32 %v534, %v1558
        %v2583 = vmax.f32 %v535, %v1559
        %v2584 = vmax.f32 %v536, %v1560
        %v2585 = vmax.f32 %v537, %v1561
        %v2586 = vmax.f32 %v538, %v1562
        %v2587 = vmax.f32 %v539, %v1563
        %v2588 = vmax.f32 %v540, %v1564
        %v2589 = vmax.f32 %v541, %v1565
        %v2590 = vmax.f32 %v542, %v1566
        %v2591 = vmax.f32 %v543, %v1567
        %v2592 = vmax.f32 %v544, %v1568
        %v2593 = vmax.f32 %v545, %v1569
        %v2594 = vmax.f32 %v546, %v1570
        %v2595 = vmax.f32 %v547, %v1571
        %v2596 = vmax.f32 %v548, %v1572
        %v2597 = vmax.f32 %v549, %v1573
        %v2598 = vmax.f32 %v550, %v1574
        %v2599 = vmax.f32 %v551, %v1575
        %v2600 = vmax.f32 %v552, %v1576
        %v2601 = vmax.f32 %v553, %v1577
        %v2602 = vmax.f32 %v554, %v1578
        %v2603 = vmax.f32 %v555, %v1579
        %v2604 = vmax.f32 %v556, %v1580
        %v2605 = vmax.f32 %v557, %v1581
        %v2606 = vmax.f32 %v558, %v1582
        %v2607 = vmax.f32 %v559, %v1583
        %v2608 = vmax.f32 %v560, %v1584
        %v2609 = vmax.f32 %v561, %v1585
        %v2610 = vmax.f32 %v562, %v1586
        %v2611 = vmax.f32 %v563, %v1587
        %v2612 = vmax.f32 %v564, %v1588
        %v2613 = vmax.f32 %v565, %v1589
        %v2614 = vmax.f32 %v566, %v1590
        %v2615 = vmax.f32 %v567, %v1591
        %v2616 = vmax.f32 %v568, %v1592
        %v2617 = vmax.f32 %v569, %v1593
        %v2618 = vmax.f32 %v570, %v1594
        %v2619 = vmax.f32 %v571, %v1595
        %v2620 = vmax.f32 %v572, %v1596
        %v2621 = vmax.f32 %v573, %v1597
        %v2622 = vmax.f32 %v574, %v1598
        %v2623 = vmax.f32 %v575, %v1599
        %v2624 = vmax.f32 %v576, %v1600
        %v2625 = vmax.f32 %v577, %v1601
        %v2626 = vmax.f32 %v578, %v1602
        %v2627 = vmax.f32 %v579, %v1603
        %v2628 = vmax.f32 %v580, %v1604
        %v2629 = vmax.f32 %v581, %v1605
        %v2630 = vmax.f32 %v582, %v1606
        %v2631 = vmax.f32 %v583, %v1607
        %v2632 = vmax.f32 %v584, %v1608
        %v2633 = vmax.f32 %v585, %v1609
        %v2634 = vmax.f32 %v586, %v1610
        %v2635 = vmax.f32 %v587, %v1611
        %v2636 = vmax.f32 %v588, %v1612
        %v2637 = vmax.f32 %v589, %v1613
        %v2638 = vmax.f32 %v590, %v1614
        %v2639 = vmax.f32 %v591, %v1615
        %v2640 = vmax.f32 %v592, %v1616
        %v2641 = vmax.f32 %v593, %v1617
        %v2642 = vmax.f32 %v594, %v1618
        %v2643 = vmax.f32 %v595, %v1619
        %v2644 = vmax.f32 %v596, %v1620
        %v2645 = vmax.f32 %v597, %v1621
        %v2646 = vmax.f32 %v598, %v1622
        %v2647 = vmax.f32 %v599, %v1623
        %v2648 = vmax.f32 %v600, %v1624
        %v2649 = vmax.f32 %v601, %v1625
        %v2650 = vmax.f32 %v602, %v1626
        %v2651 = vmax.f32 %v603, %v1627
        %v2652 = vmax.f32 %v604, %v1628
        %v2653 = vmax.f32 %v605, %v1629
        %v2654 = vmax.f32 %v606, %v1630
        %v2655 = vmax.f32 %v607, %v1631
        %v2656 = vmax.f32 %v608, %v1632
        %v2657 = vmax.f32 %v609, %v1633
        %v2658 = vmax.f32 %v610, %v1634
        %v2659 = vmax.f32 %v611, %v1635
        %v2660 = vmax.f32 %v612, %v1636
        %v2661 = vmax.f32 %v613, %v1637
        %v2662 = vmax.f32 %v614, %v1638
        %v2663 = vmax.f32 %v615, %v1639
        %v2664 = vmax.f32 %v616, %v1640
        %v2665 = vmax.f32 %v617, %v1641
        %v2666 = vmax.f32 %v618, %v1642
        %v2667 = vmax.f32 %v619, %v1643
        %v2668 = vmax.f32 %v620, %v1644
        %v2669 = vmax.f32 %v621, %v1645
        %v2670 = vmax.f32 %v622, %v1646
        %v2671 = vmax.f32 %v623, %v1647
        %v2672 = vmax.f32 %v624, %v1648
        %v2673 = vmax.f32 %v625, %v1649
        %v2674 = vmax.f32 %v626, %v1650
        %v2675 = vmax.f32 %v627, %v1651
        %v2676 = vmax.f32 %v628, %v1652
        %v2677 = vmax.f32 %v629, %v1653
        %v2678 = vmax.f32 %v630, %v1654
        %v2679 = vmax.f32 %v631, %v1655
        %v2680 = vmax.f32 %v632, %v1656
        %v2681 = vmax.f32 %v633, %v1657
        %v2682 = vmax.f32 %v634, %v1658
        %v2683 = vmax.f32 %v635, %v1659
        %v2684 = vmax.f32 %v636, %v1660
        %v2685 = vmax.f32 %v637, %v1661
        %v2686 = vmax.f32 %v638, %v1662
        %v2687 = vmax.f32 %v639, %v1663
        %v2688 = vmax.f32 %v640, %v1664
        %v2689 = vmax.f32 %v641, %v1665
        %v2690 = vmax.f32 %v642, %v1666
        %v2691 = vmax.f32 %v643, %v1667
        %v2692 = vmax.f32 %v644, %v1668
        %v2693 = vmax.f32 %v645, %v1669
        %v2694 = vmax.f32 %v646, %v1670
        %v2695 = vmax.f32 %v647, %v1671
        %v2696 = vmax.f32 %v648, %v1672
        %v2697 = vmax.f32 %v649, %v1673
        %v2698 = vmax.f32 %v650, %v1674
        %v2699 = vmax.f32 %v651, %v1675
        %v2700 = vmax.f32 %v652, %v1676
        %v2701 = vmax.f32 %v653, %v1677
        %v2702 = vmax.f32 %v654, %v1678
        %v2703 = vmax.f32 %v655, %v1679
        %v2704 = vmax.f32 %v656, %v1680
        %v2705 = vmax.f32 %v657, %v1681
        %v2706 = vmax.f32 %v658, %v1682
        %v2707 = vmax.f32 %v659, %v1683
        %v2708 = vmax.f32 %v660, %v1684
        %v2709 = vmax.f32 %v661, %v1685
        %v2710 = vmax.f32 %v662, %v1686
        %v2711 = vmax.f32 %v663, %v1687
        %v2712 = vmax.f32 %v664, %v1688
        %v2713 = vmax.f32 %v665, %v1689
        %v2714 = vmax.f32 %v666, %v1690
        %v2715 = vmax.f32 %v667, %v1691
        %v2716 = vmax.f32 %v668, %v1692
        %v2717 = vmax.f32 %v669, %v1693
        %v2718 = vmax.f32 %v670, %v1694
        %v2719 = vmax.f32 %v671, %v1695
        %v2720 = vmax.f32 %v672, %v1696
        %v2721 = vmax.f32 %v673, %v1697
        %v2722 = vmax.f32 %v674, %v1698
        %v2723 = vmax.f32 %v675, %v1699
        %v2724 = vmax.f32 %v676, %v1700
        %v2725 = vmax.f32 %v677, %v1701
        %v2726 = vmax.f32 %v678, %v1702
        %v2727 = vmax.f32 %v679, %v1703
        %v2728 = vmax.f32 %v680, %v1704
        %v2729 = vmax.f32 %v681, %v1705
        %v2730 = vmax.f32 %v682, %v1706
        %v2731 = vmax.f32 %v683, %v1707
        %v2732 = vmax.f32 %v684, %v1708
        %v2733 = vmax.f32 %v685, %v1709
        %v2734 = vmax.f32 %v686, %v1710
        %v2735 = vmax.f32 %v687, %v1711
        %v2736 = vmax.f32 %v688, %v1712
        %v2737 = vmax.f32 %v689, %v1713
        %v2738 = vmax.f32 %v690, %v1714
        %v2739 = vmax.f32 %v691, %v1715
        %v2740 = vmax.f32 %v692, %v1716
        %v2741 = vmax.f32 %v693, %v1717
        %v2742 = vmax.f32 %v694, %v1718
        %v2743 = vmax.f32 %v695, %v1719
        %v2744 = vmax.f32 %v696, %v1720
        %v2745 = vmax.f32 %v697, %v1721
        %v2746 = vmax.f32 %v698, %v1722
        %v2747 = vmax.f32 %v699, %v1723
        %v2748 = vmax.f32 %v700, %v1724
        %v2749 = vmax.f32 %v701, %v1725
        %v2750 = vmax.f32 %v702, %v1726
        %v2751 = vmax.f32 %v703, %v1727
        %v2752 = vmax.f32 %v704, %v1728
        %v2753 = vmax.f32 %v705, %v1729
        %v2754 = vmax.f32 %v706, %v1730
        %v2755 = vmax.f32 %v707, %v1731
        %v2756 = vmax.f32 %v708, %v1732
        %v2757 = vmax.f32 %v709, %v1733
        %v2758 = vmax.f32 %v710, %v1734
        %v2759 = vmax.f32 %v711, %v1735
        %v2760 = vmax.f32 %v712, %v1736
        %v2761 = vmax.f32 %v713, %v1737
        %v2762 = vmax.f32 %v714, %v1738
        %v2763 = vmax.f32 %v715, %v1739
        %v2764 = vmax.f32 %v716, %v1740
        %v2765 = vmax.f32 %v717, %v1741
        %v2766 = vmax.f32 %v718, %v1742
        %v2767 = vmax.f32 %v719, %v1743
        %v2768 = vmax.f32 %v720, %v1744
        %v2769 = vmax.f32 %v721, %v1745
        %v2770 = vmax.f32 %v722, %v1746
        %v2771 = vmax.f32 %v723, %v1747
        %v2772 = vmax.f32 %v724, %v1748
        %v2773 = vmax.f32 %v725, %v1749
        %v2774 = vmax.f32 %v726, %v1750
        %v2775 = vmax.f32 %v727, %v1751
        %v2776 = vmax.f32 %v728, %v1752
        %v2777 = vmax.f32 %v729, %v1753
        %v2778 = vmax.f32 %v730, %v1754
        %v2779 = vmax.f32 %v731, %v1755
        %v2780 = vmax.f32 %v732, %v1756
        %v2781 = vmax.f32 %v733, %v1757
        %v2782 = vmax.f32 %v734, %v1758
        %v2783 = vmax.f32 %v735, %v1759
        %v2784 = vmax.f32 %v736, %v1760
        %v2785 = vmax.f32 %v737, %v1761
        %v2786 = vmax.f32 %v738, %v1762
        %v2787 = vmax.f32 %v739, %v1763
        %v2788 = vmax.f32 %v740, %v1764
        %v2789 = vmax.f32 %v741, %v1765
        %v2790 = vmax.f32 %v742, %v1766
        %v2791 = vmax.f32 %v743, %v1767
        %v2792 = vmax.f32 %v744, %v1768
        %v2793 = vmax.f32 %v745, %v1769
        %v2794 = vmax.f32 %v746, %v1770
        %v2795 = vmax.f32 %v747, %v1771
        %v2796 = vmax.f32 %v748, %v1772
        %v2797 = vmax.f32 %v749, %v1773
        %v2798 = vmax.f32 %v750, %v1774
        %v2799 = vmax.f32 %v751, %v1775
        %v2800 = vmax.f32 %v752, %v1776
        %v2801 = vmax.f32 %v753, %v1777
        %v2802 = vmax.f32 %v754, %v1778
        %v2803 = vmax.f32 %v755, %v1779
        %v2804 = vmax.f32 %v756, %v1780
        %v2805 = vmax.f32 %v757, %v1781
        %v2806 = vmax.f32 %v758, %v1782
        %v2807 = vmax.f32 %v759, %v1783
        %v2808 = vmax.f32 %v760, %v1784
        %v2809 = vmax.f32 %v761, %v1785
        %v2810 = vmax.f32 %v762, %v1786
        %v2811 = vmax.f32 %v763, %v1787
        %v2812 = vmax.f32 %v764, %v1788
        %v2813 = vmax.f32 %v765, %v1789
        %v2814 = vmax.f32 %v766, %v1790
        %v2815 = vmax.f32 %v767, %v1791
        %v2816 = vmax.f32 %v768, %v1792
        %v2817 = vmax.f32 %v769, %v1793
        %v2818 = vmax.f32 %v770, %v1794
        %v2819 = vmax.f32 %v771, %v1795
        %v2820 = vmax.f32 %v772, %v1796
        %v2821 = vmax.f32 %v773, %v1797
        %v2822 = vmax.f32 %v774, %v1798
        %v2823 = vmax.f32 %v775, %v1799
        %v2824 = vmax.f32 %v776, %v1800
        %v2825 = vmax.f32 %v777, %v1801
        %v2826 = vmax.f32 %v778, %v1802
        %v2827 = vmax.f32 %v779, %v1803
        %v2828 = vmax.f32 %v780, %v1804
        %v2829 = vmax.f32 %v781, %v1805
        %v2830 = vmax.f32 %v782, %v1806
        %v2831 = vmax.f32 %v783, %v1807
        %v2832 = vmax.f32 %v784, %v1808
        %v2833 = vmax.f32 %v785, %v1809
        %v2834 = vmax.f32 %v786, %v1810
        %v2835 = vmax.f32 %v787, %v1811
        %v2836 = vmax.f32 %v788, %v1812
        %v2837 = vmax.f32 %v789, %v1813
        %v2838 = vmax.f32 %v790, %v1814
        %v2839 = vmax.f32 %v791, %v1815
        %v2840 = vmax.f32 %v792, %v1816
        %v2841 = vmax.f32 %v793, %v1817
        %v2842 = vmax.f32 %v794, %v1818
        %v2843 = vmax.f32 %v795, %v1819
        %v2844 = vmax.f32 %v796, %v1820
        %v2845 = vmax.f32 %v797, %v1821
        %v2846 = vmax.f32 %v798, %v1822
        %v2847 = vmax.f32 %v799, %v1823
        %v2848 = vmax.f32 %v800, %v1824
        %v2849 = vmax.f32 %v801, %v1825
        %v2850 = vmax.f32 %v802, %v1826
        %v2851 = vmax.f32 %v803, %v1827
        %v2852 = vmax.f32 %v804, %v1828
        %v2853 = vmax.f32 %v805, %v1829
        %v2854 = vmax.f32 %v806, %v1830
        %v2855 = vmax.f32 %v807, %v1831
        %v2856 = vmax.f32 %v808, %v1832
        %v2857 = vmax.f32 %v809, %v1833
        %v2858 = vmax.f32 %v810, %v1834
        %v2859 = vmax.f32 %v811, %v1835
        %v2860 = vmax.f32 %v812, %v1836
        %v2861 = vmax.f32 %v813, %v1837
        %v2862 = vmax.f32 %v814, %v1838
        %v2863 = vmax.f32 %v815, %v1839
        %v2864 = vmax.f32 %v816, %v1840
        %v2865 = vmax.f32 %v817, %v1841
        %v2866 = vmax.f32 %v818, %v1842
        %v2867 = vmax.f32 %v819, %v1843
        %v2868 = vmax.f32 %v820, %v1844
        %v2869 = vmax.f32 %v821, %v1845
        %v2870 = vmax.f32 %v822, %v1846
        %v2871 = vmax.f32 %v823, %v1847
        %v2872 = vmax.f32 %v824, %v1848
        %v2873 = vmax.f32 %v825, %v1849
        %v2874 = vmax.f32 %v826, %v1850
        %v2875 = vmax.f32 %v827, %v1851
        %v2876 = vmax.f32 %v828, %v1852
        %v2877 = vmax.f32 %v829, %v1853
        %v2878 = vmax.f32 %v830, %v1854
        %v2879 = vmax.f32 %v831, %v1855
        %v2880 = vmax.f32 %v832, %v1856
        %v2881 = vmax.f32 %v833, %v1857
        %v2882 = vmax.f32 %v834, %v1858
        %v2883 = vmax.f32 %v835, %v1859
        %v2884 = vmax.f32 %v836, %v1860
        %v2885 = vmax.f32 %v837, %v1861
        %v2886 = vmax.f32 %v838, %v1862
        %v2887 = vmax.f32 %v839, %v1863
        %v2888 = vmax.f32 %v840, %v1864
        %v2889 = vmax.f32 %v841, %v1865
        %v2890 = vmax.f32 %v842, %v1866
        %v2891 = vmax.f32 %v843, %v1867
        %v2892 = vmax.f32 %v844, %v1868
        %v2893 = vmax.f32 %v845, %v1869
        %v2894 = vmax.f32 %v846, %v1870
        %v2895 = vmax.f32 %v847, %v1871
        %v2896 = vmax.f32 %v848, %v1872
        %v2897 = vmax.f32 %v849, %v1873
        %v2898 = vmax.f32 %v850, %v1874
        %v2899 = vmax.f32 %v851, %v1875
        %v2900 = vmax.f32 %v852, %v1876
        %v2901 = vmax.f32 %v853, %v1877
        %v2902 = vmax.f32 %v854, %v1878
        %v2903 = vmax.f32 %v855, %v1879
        %v2904 = vmax.f32 %v856, %v1880
        %v2905 = vmax.f32 %v857, %v1881
        %v2906 = vmax.f32 %v858, %v1882
        %v2907 = vmax.f32 %v859, %v1883
        %v2908 = vmax.f32 %v860, %v1884
        %v2909 = vmax.f32 %v861, %v1885
        %v2910 = vmax.f32 %v862, %v1886
        %v2911 = vmax.f32 %v863, %v1887
        %v2912 = vmax.f32 %v864, %v1888
        %v2913 = vmax.f32 %v865, %v1889
        %v2914 = vmax.f32 %v866, %v1890
        %v2915 = vmax.f32 %v867, %v1891
        %v2916 = vmax.f32 %v868, %v1892
        %v2917 = vmax.f32 %v869, %v1893
        %v2918 = vmax.f32 %v870, %v1894
        %v2919 = vmax.f32 %v871, %v1895
        %v2920 = vmax.f32 %v872, %v1896
        %v2921 = vmax.f32 %v873, %v1897
        %v2922 = vmax.f32 %v874, %v1898
        %v2923 = vmax.f32 %v875, %v1899
        %v2924 = vmax.f32 %v876, %v1900
        %v2925 = vmax.f32 %v877, %v1901
        %v2926 = vmax.f32 %v878, %v1902
        %v2927 = vmax.f32 %v879, %v1903
        %v2928 = vmax.f32 %v880, %v1904
        %v2929 = vmax.f32 %v881, %v1905
        %v2930 = vmax.f32 %v882, %v1906
        %v2931 = vmax.f32 %v883, %v1907
        %v2932 = vmax.f32 %v884, %v1908
        %v2933 = vmax.f32 %v885, %v1909
        %v2934 = vmax.f32 %v886, %v1910
        %v2935 = vmax.f32 %v887, %v1911
        %v2936 = vmax.f32 %v888, %v1912
        %v2937 = vmax.f32 %v889, %v1913
        %v2938 = vmax.f32 %v890, %v1914
        %v2939 = vmax.f32 %v891, %v1915
        %v2940 = vmax.f32 %v892, %v1916
        %v2941 = vmax.f32 %v893, %v1917
        %v2942 = vmax.f32 %v894, %v1918
        %v2943 = vmax.f32 %v895, %v1919
        %v2944 = vmax.f32 %v896, %v1920
        %v2945 = vmax.f32 %v897, %v1921
        %v2946 = vmax.f32 %v898, %v1922
        %v2947 = vmax.f32 %v899, %v1923
        %v2948 = vmax.f32 %v900, %v1924
        %v2949 = vmax.f32 %v901, %v1925
        %v2950 = vmax.f32 %v902, %v1926
        %v2951 = vmax.f32 %v903, %v1927
        %v2952 = vmax.f32 %v904, %v1928
        %v2953 = vmax.f32 %v905, %v1929
        %v2954 = vmax.f32 %v906, %v1930
        %v2955 = vmax.f32 %v907, %v1931
        %v2956 = vmax.f32 %v908, %v1932
        %v2957 = vmax.f32 %v909, %v1933
        %v2958 = vmax.f32 %v910, %v1934
        %v2959 = vmax.f32 %v911, %v1935
        %v2960 = vmax.f32 %v912, %v1936
        %v2961 = vmax.f32 %v913, %v1937
        %v2962 = vmax.f32 %v914, %v1938
        %v2963 = vmax.f32 %v915, %v1939
        %v2964 = vmax.f32 %v916, %v1940
        %v2965 = vmax.f32 %v917, %v1941
        %v2966 = vmax.f32 %v918, %v1942
        %v2967 = vmax.f32 %v919, %v1943
        %v2968 = vmax.f32 %v920, %v1944
        %v2969 = vmax.f32 %v921, %v1945
        %v2970 = vmax.f32 %v922, %v1946
        %v2971 = vmax.f32 %v923, %v1947
        %v2972 = vmax.f32 %v924, %v1948
        %v2973 = vmax.f32 %v925, %v1949
        %v2974 = vmax.f32 %v926, %v1950
        %v2975 = vmax.f32 %v927, %v1951
        %v2976 = vmax.f32 %v928, %v1952
        %v2977 = vmax.f32 %v929, %v1953
        %v2978 = vmax.f32 %v930, %v1954
        %v2979 = vmax.f32 %v931, %v1955
        %v2980 = vmax.f32 %v932, %v1956
        %v2981 = vmax.f32 %v933, %v1957
        %v2982 = vmax.f32 %v934, %v1958
        %v2983 = vmax.f32 %v935, %v1959
        %v2984 = vmax.f32 %v936, %v1960
        %v2985 = vmax.f32 %v937, %v1961
        %v2986 = vmax.f32 %v938, %v1962
        %v2987 = vmax.f32 %v939, %v1963
        %v2988 = vmax.f32 %v940, %v1964
        %v2989 = vmax.f32 %v941, %v1965
        %v2990 = vmax.f32 %v942, %v1966
        %v2991 = vmax.f32 %v943, %v1967
        %v2992 = vmax.f32 %v944, %v1968
        %v2993 = vmax.f32 %v945, %v1969
        %v2994 = vmax.f32 %v946, %v1970
        %v2995 = vmax.f32 %v947, %v1971
        %v2996 = vmax.f32 %v948, %v1972
        %v2997 = vmax.f32 %v949, %v1973
        %v2998 = vmax.f32 %v950, %v1974
        %v2999 = vmax.f32 %v951, %v1975
        %v3000 = vmax.f32 %v952, %v1976
        %v3001 = vmax.f32 %v953, %v1977
        %v3002 = vmax.f32 %v954, %v1978
        %v3003 = vmax.f32 %v955, %v1979
        %v3004 = vmax.f32 %v956, %v1980
        %v3005 = vmax.f32 %v957, %v1981
        %v3006 = vmax.f32 %v958, %v1982
        %v3007 = vmax.f32 %v959, %v1983
        %v3008 = vmax.f32 %v960, %v1984
        %v3009 = vmax.f32 %v961, %v1985
        %v3010 = vmax.f32 %v962, %v1986
        %v3011 = vmax.f32 %v963, %v1987
        %v3012 = vmax.f32 %v964, %v1988
        %v3013 = vmax.f32 %v965, %v1989
        %v3014 = vmax.f32 %v966, %v1990
        %v3015 = vmax.f32 %v967, %v1991
        %v3016 = vmax.f32 %v968, %v1992
        %v3017 = vmax.f32 %v969, %v1993
        %v3018 = vmax.f32 %v970, %v1994
        %v3019 = vmax.f32 %v971, %v1995
        %v3020 = vmax.f32 %v972, %v1996
        %v3021 = vmax.f32 %v973, %v1997
        %v3022 = vmax.f32 %v974, %v1998
        %v3023 = vmax.f32 %v975, %v1999
        %v3024 = vmax.f32 %v976, %v2000
        %v3025 = vmax.f32 %v977, %v2001
        %v3026 = vmax.f32 %v978, %v2002
        %v3027 = vmax.f32 %v979, %v2003
        %v3028 = vmax.f32 %v980, %v2004
        %v3029 = vmax.f32 %v981, %v2005
        %v3030 = vmax.f32 %v982, %v2006
        %v3031 = vmax.f32 %v983, %v2007
        %v3032 = vmax.f32 %v984, %v2008
        %v3033 = vmax.f32 %v985, %v2009
        %v3034 = vmax.f32 %v986, %v2010
        %v3035 = vmax.f32 %v987, %v2011
        %v3036 = vmax.f32 %v988, %v2012
        %v3037 = vmax.f32 %v989, %v2013
        %v3038 = vmax.f32 %v990, %v2014
        %v3039 = vmax.f32 %v991, %v2015
        %v3040 = vmax.f32 %v992, %v2016
        %v3041 = vmax.f32 %v993, %v2017
        %v3042 = vmax.f32 %v994, %v2018
        %v3043 = vmax.f32 %v995, %v2019
        %v3044 = vmax.f32 %v996, %v2020
        %v3045 = vmax.f32 %v997, %v2021
        %v3046 = vmax.f32 %v998, %v2022
        %v3047 = vmax.f32 %v999, %v2023
        %v3048 = vmax.f32 %v1000, %v2024
        %v3049 = vmax.f32 %v1001, %v2025
        %v3050 = vmax.f32 %v1002, %v2026
        %v3051 = vmax.f32 %v1003, %v2027
        %v3052 = vmax.f32 %v1004, %v2028
        %v3053 = vmax.f32 %v1005, %v2029
        %v3054 = vmax.f32 %v1006, %v2030
        %v3055 = vmax.f32 %v1007, %v2031
        %v3056 = vmax.f32 %v1008, %v2032
        %v3057 = vmax.f32 %v1009, %v2033
        %v3058 = vmax.f32 %v1010, %v2034
        %v3059 = vmax.f32 %v1011, %v2035
        %v3060 = vmax.f32 %v1012, %v2036
        %v3061 = vmax.f32 %v1013, %v2037
        %v3062 = vmax.f32 %v1014, %v2038
        %v3063 = vmax.f32 %v1015, %v2039
        %v3064 = vmax.f32 %v1016, %v2040
        %v3065 = vmax.f32 %v1017, %v2041
        %v3066 = vmax.f32 %v1018, %v2042
        %v3067 = vmax.f32 %v1019, %v2043
        %v3068 = vmax.f32 %v1020, %v2044
        %v3069 = vmax.f32 %v1021, %v2045
        %v3070 = vmax.f32 %v1022, %v2046
        %v3071 = vmax.f32 %v1023, %v2047
        %v3072 = vmax.f32 %v1024, %v2048
        %v3073 = vmax.f32 %v1025, %v2049
        %v3074 = vmax.f32 %v1026, %v2050
        %v3075 = vmax.f32 %v1027, %v2051
        %v3076 = vmax.f32 %v1028, %v2052
        %v3077 = vmax.f32 %v1029, %v2053
        %v3078 = vmax.f32 %v1030, %v2054
        %v3079 = vmax.f32 %v1031, %v2055
        %v3080 = vmax.f32 %v1032, %v2056
        %v3081 = vmax.f32 %v1033, %v2057
        %v3082 = vmax.f32 %v1034, %v2058
        %v3083 = vmax.f32 %v1035, %v2059
        %v3084 = vmax.f32 %v1036, %v2060
        %v3085 = vmax.f32 %v1037, %v2061
        %v3086 = vmax.f32 %v1038, %v2062
        %v3087 = vmax.f32 %v1039, %v2063
        %v3088 = vmax.f32 %v1040, %v2064
        %v3089 = vmax.f32 %v1041, %v2065
        %v3090 = vmax.f32 %v1042, %v2066
        %v3091 = vmax.f32 %v1043, %v2067
        %v3092 = vmax.f32 %v1044, %v2068
        %v3093 = vmax.f32 %v1045, %v2069
        %v3094 = vmax.f32 %v1046, %v2070
        %v3095 = vmax.f32 %v1047, %v2071
        %v3096 = vmax.f32 %v1048, %v2072
        %v3097 = vmax.f32 %v1049, %v2073
        %v3098 = vmax.f32 %v1050, %v2074
        %v3099 = vmax.f32 %v1051, %v2075
        %v3100 = vmax.f32 %v1052, %v2076
        %v3101 = vmax.f32 %v1053, %v2077
        %v3102 = vmax.f32 %v1054, %v2078
        %v3103 = vmax.f32 %v1055, %v2079
        %v3104 = vmax.f32 %v1056, %v2080
        %v3105 = vmax.f32 %v1057, %v2081
        %v3106 = vmax.f32 %v1058, %v2082
        %v3107 = vmax.f32 %v1059, %v2083
        %v3108 = vmax.f32 %v1060, %v2084
        %v3109 = vmax.f32 %v1061, %v2085
        %v3110 = vmax.f32 %v1062, %v2086
        %v3111 = vmax.f32 %v1063, %v2087
        %v3112 = vmax.f32 %v1064, %v2088
        %v3113 = vmax.f32 %v1065, %v2089
        %v3114 = vmax.f32 %v1066, %v2090
        %v3115 = vmax.f32 %v1067, %v2091
        %v3116 = vmax.f32 %v1068, %v2092
        %v3117 = vmax.f32 %v1069, %v2093
        %v3118 = vmax.f32 %v1070, %v2094
        %v3119 = vmax.f32 %v1071, %v2095
        %v3120 = vmax.f32 %v1072, %v2096
        %v3121 = vmax.f32 %v1073, %v2097
        %v3122 = vmax.f32 %v1074, %v2098
        %v3123 = vmax.f32 %v1075, %v2099
        %v3124 = vmax.f32 %v1076, %v2100
        %v3125 = vmax.f32 %v1077, %v2101
        %v3126 = vmax.f32 %v1078, %v2102
        %v3127 = vmax.f32 %v1079, %v2103
        %v3128 = vmax.f32 %v1080, %v2104
        %v3129 = vmax.f32 %v1081, %v2105
        %v3130 = vmax.f32 %v1082, %v2106
        %v3131 = vmax.f32 %v1083, %v2107
        %v3132 = vmax.f32 %v1084, %v2108
        %v3133 = vmax.f32 %v1085, %v2109
        %v3134 = vmax.f32 %v1086, %v2110
        %v3135 = vmax.f32 %v1087, %v2111
        %v3136 = vmax.f32 %v1088, %v2112
        %v3137 = vmax.f32 %v1089, %v2113
        %v3138 = vmax.f32 %v1090, %v2114
        %v3139 = vmax.f32 %v1091, %v2115
        %v3140 = vmax.f32 %v1092, %v2116
        %v3141 = vmax.f32 %v1093, %v2117
        %v3142 = vmax.f32 %v1094, %v2118
        %v3143 = vmax.f32 %v1095, %v2119
        %v3144 = vmax.f32 %v1096, %v2120
        %v3145 = vmax.f32 %v1097, %v2121
        %v3146 = vmax.f32 %v1098, %v2122
        %v3147 = vmax.f32 %v1099, %v2123
        %v3148 = vmax.f32 %v1100, %v2124
        %v3149 = vmax.f32 %v1101, %v2125
        %v3150 = vmax.f32 %v1102, %v2126
        %v3151 = vmax.f32 %v1103, %v2127
        %v3152 = vmax.f32 %v1104, %v2128
        %v3153 = vmax.f32 %v1105, %v2129
        %v3154 = vmax.f32 %v1106, %v2130
        %v3155 = vmax.f32 %v1107, %v2131
        %v3156 = vmax.f32 %v1108, %v2132
        %v3157 = vmax.f32 %v1109, %v2133
        %v3158 = vmax.f32 %v1110, %v2134
        %v3159 = vmax.f32 %v1111, %v2135
        %v3160 = vmax.f32 %v1112, %v2136
        %v3161 = vmax.f32 %v1113, %v2137
        %v3162 = vmax.f32 %v1114, %v2138
        %v3163 = vmax.f32 %v1115, %v2139
        %v3164 = vmax.f32 %v1116, %v2140
        %v3165 = vmax.f32 %v1117, %v2141
        %v3166 = vmax.f32 %v1118, %v2142
        %v3167 = vmax.f32 %v1119, %v2143
        %v3168 = vmax.f32 %v1120, %v2144
        %v3169 = vmax.f32 %v1121, %v2145
        %v3170 = vmax.f32 %v1122, %v2146
        %v3171 = vmax.f32 %v1123, %v2147
        %v3172 = vmax.f32 %v1124, %v2148
        %v3173 = vmax.f32 %v1125, %v2149
        %v3174 = vmax.f32 %v1126, %v2150
        %v3175 = vmax.f32 %v1127, %v2151
        %v3176 = vmax.f32 %v1128, %v2152
        %v3177 = vmax.f32 %v1129, %v2153
        %v3178 = vmax.f32 %v1130, %v2154
        %v3179 = vmax.f32 %v1131, %v2155
        %v3180 = vmax.f32 %v1132, %v2156
        %v3181 = vmax.f32 %v1133, %v2157
        %v3182 = vmax.f32 %v1134, %v2158
        %v3183 = vmax.f32 %v1135, %v2159
        %v3184 = vmax.f32 %v1136, %v2160
        %v3185 = vmax.f32 %v1137, %v2161
        %v3186 = vmax.f32 %v1138, %v2162
        %v3187 = vmax.f32 %v1139, %v2163
        %v3188 = vmax.f32 %v1140, %v2164
        %v3189 = vmax.f32 %v1141, %v2165
        %v3190 = vmax.f32 %v1142, %v2166
        %v3191 = vmax.f32 %v1143, %v2167
        %v3192 = vmax.f32 %v1144, %v2168
        %v3193 = vmax.f32 %v1145, %v2169
        %v3194 = vmax.f32 %v1146, %v2170
        %v3195 = vmax.f32 %v1147, %v2171
        %v3196 = vmax.f32 %v1148, %v2172
        %v3197 = vmax.f32 %v1149, %v2173
        %v3198 = vmax.f32 %v1150, %v2174
        %v3199 = vmax.f32 %v1151, %v2175
        %v3200 = vmax.f32 %v1152, %v2176
        %v3201 = vmax.f32 %v1153, %v2177
        %v3202 = vmax.f32 %v1154, %v2178
        %v3203 = vmax.f32 %v1155, %v2179
        %v3204 = vmax.f32 %v1156, %v2180
        %v3205 = vmax.f32 %v1157, %v2181
        %v3206 = vmax.f32 %v1158, %v2182
        %v3207 = vmax.f32 %v1159, %v2183
        %v3208 = vmax.f32 %v1160, %v2184
        %v3209 = vmax.f32 %v1161, %v2185
        %v3210 = vmax.f32 %v1162, %v2186
        %v3211 = vmax.f32 %v1163, %v2187
        %v3212 = vmax.f32 %v1164, %v2188
        %v3213 = vmax.f32 %v1165, %v2189
        %v3214 = vmax.f32 %v1166, %v2190
        %v3215 = vmax.f32 %v1167, %v2191
        %v3216 = vmax.f32 %v1168, %v2192
        %v3217 = vmax.f32 %v1169, %v2193
        %v3218 = vmax.f32 %v1170, %v2194
        %v3219 = vmax.f32 %v1171, %v2195
        %v3220 = vmax.f32 %v1172, %v2196
        %v3221 = vmax.f32 %v1173, %v2197
        %v3222 = vmax.f32 %v1174, %v2198
        %v3223 = vmin.f32 %v2199, 20.0
        %v3224 = vmin.f32 %v2200, 20.0
        %v3225 = vmin.f32 %v2201, 20.0
        %v3226 = vmin.f32 %v2202, 20.0
        %v3227 = vmin.f32 %v2203, 20.0
        %v3228 = vmin.f32 %v2204, 20.0
        %v3229 = vmin.f32 %v2205, 20.0
        %v3230 = vmin.f32 %v2206, 20.0
        %v3231 = vmin.f32 %v2207, 20.0
        %v3232 = vmin.f32 %v2208, 20.0
        %v3233 = vmin.f32 %v2209, 20.0
        %v3234 = vmin.f32 %v2210, 20.0
        %v3235 = vmin.f32 %v2211, 20.0
        %v3236 = vmin.f32 %v2212, 20.0
        %v3237 = vmin.f32 %v2213, 20.0
        %v3238 = vmin.f32 %v2214, 20.0
        %v3239 = vmin.f32 %v2215, 20.0
        %v3240 = vmin.f32 %v2216, 20.0
        %v3241 = vmin.f32 %v2217, 20.0
        %v3242 = vmin.f32 %v2218, 20.0
        %v3243 = vmin.f32 %v2219, 20.0
        %v3244 = vmin.f32 %v2220, 20.0
        %v3245 = vmin.f32 %v2221, 20.0
        %v3246 = vmin.f32 %v2222, 20.0
        %v3247 = vmin.f32 %v2223, 20.0
        %v3248 = vmin.f32 %v2224, 20.0
        %v3249 = vmin.f32 %v2225, 20.0
        %v3250 = vmin.f32 %v2226, 20.0
        %v3251 = vmin.f32 %v2227, 20.0
        %v3252 = vmin.f32 %v2228, 20.0
        %v3253 = vmin.f32 %v2229, 20.0
        %v3254 = vmin.f32 %v2230, 20.0
        %v3255 = vmin.f32 %v2231, 20.0
        %v3256 = vmin.f32 %v2232, 20.0
        %v3257 = vmin.f32 %v2233, 20.0
        %v3258 = vmin.f32 %v2234, 20.0
        %v3259 = vmin.f32 %v2235, 20.0
        %v3260 = vmin.f32 %v2236, 20.0
        %v3261 = vmin.f32 %v2237, 20.0
        %v3262 = vmin.f32 %v2238, 20.0
        %v3263 = vmin.f32 %v2239, 20.0
        %v3264 = vmin.f32 %v2240, 20.0
        %v3265 = vmin.f32 %v2241, 20.0
        %v3266 = vmin.f32 %v2242, 20.0
        %v3267 = vmin.f32 %v2243, 20.0
        %v3268 = vmin.f32 %v2244, 20.0
        %v3269 = vmin.f32 %v2245, 20.0
        %v3270 = vmin.f32 %v2246, 20.0
        %v3271 = vmin.f32 %v2247, 20.0
        %v3272 = vmin.f32 %v2248, 20.0
        %v3273 = vmin.f32 %v2249, 20.0
        %v3274 = vmin.f32 %v2250, 20.0
        %v3275 = vmin.f32 %v2251, 20.0
        %v3276 = vmin.f32 %v2252, 20.0
        %v3277 = vmin.f32 %v2253, 20.0
        %v3278 = vmin.f32 %v2254, 20.0
        %v3279 = vmin.f32 %v2255, 20.0
        %v3280 = vmin.f32 %v2256, 20.0
        %v3281 = vmin.f32 %v2257, 20.0
        %v3282 = vmin.f32 %v2258, 20.0
        %v3283 = vmin.f32 %v2259, 20.0
        %v3284 = vmin.f32 %v2260, 20.0
        %v3285 = vmin.f32 %v2261, 20.0
        %v3286 = vmin.f32 %v2262, 20.0
        %v3287 = vmin.f32 %v2263, 20.0
        %v3288 = vmin.f32 %v2264, 20.0
        %v3289 = vmin.f32 %v2265, 20.0
        %v3290 = vmin.f32 %v2266, 20.0
        %v3291 = vmin.f32 %v2267, 20.0
        %v3292 = vmin.f32 %v2268, 20.0
        %v3293 = vmin.f32 %v2269, 20.0
        %v3294 = vmin.f32 %v2270, 20.0
        %v3295 = vmin.f32 %v2271, 20.0
        %v3296 = vmin.f32 %v2272, 20.0
        %v3297 = vmin.f32 %v2273, 20.0
        %v3298 = vmin.f32 %v2274, 20.0
        %v3299 = vmin.f32 %v2275, 20.0
        %v3300 = vmin.f32 %v2276, 20.0
        %v3301 = vmin.f32 %v2277, 20.0
        %v3302 = vmin.f32 %v2278, 20.0
        %v3303 = vmin.f32 %v2279, 20.0
        %v3304 = vmin.f32 %v2280, 20.0
        %v3305 = vmin.f32 %v2281, 20.0
        %v3306 = vmin.f32 %v2282, 20.0
        %v3307 = vmin.f32 %v2283, 20.0
        %v3308 = vmin.f32 %v2284, 20.0
        %v3309 = vmin.f32 %v2285, 20.0
        %v3310 = vmin.f32 %v2286, 20.0
        %v3311 = vmin.f32 %v2287, 20.0
        %v3312 = vmin.f32 %v2288, 20.0
        %v3313 = vmin.f32 %v2289, 20.0
        %v3314 = vmin.f32 %v2290, 20.0
        %v3315 = vmin.f32 %v2291, 20.0
        %v3316 = vmin.f32 %v2292, 20.0
        %v3317 = vmin.f32 %v2293, 20.0
        %v3318 = vmin.f32 %v2294, 20.0
        %v3319 = vmin.f32 %v2295, 20.0
        %v3320 = vmin.f32 %v2296, 20.0
        %v3321 = vmin.f32 %v2297, 20.0
        %v3322 = vmin.f32 %v2298, 20.0
        %v3323 = vmin.f32 %v2299, 20.0
        %v3324 = vmin.f32 %v2300, 20.0
        %v3325 = vmin.f32 %v2301, 20.0
        %v3326 = vmin.f32 %v2302, 20.0
        %v3327 = vmin.f32 %v2303, 20.0
        %v3328 = vmin.f32 %v2304, 20.0
        %v3329 = vmin.f32 %v2305, 20.0
        %v3330 = vmin.f32 %v2306, 20.0
        %v3331 = vmin.f32 %v2307, 20.0
        %v3332 = vmin.f32 %v2308, 20.0
        %v3333 = vmin.f32 %v2309, 20.0
        %v3334 = vmin.f32 %v2310, 20.0
        %v3335 = vmin.f32 %v2311, 20.0
        %v3336 = vmin.f32 %v2312, 20.0
        %v3337 = vmin.f32 %v2313, 20.0
        %v3338 = vmin.f32 %v2314, 20.0
        %v3339 = vmin.f32 %v2315, 20.0
        %v3340 = vmin.f32 %v2316, 20.0
        %v3341 = vmin.f32 %v2317, 20.0
        %v3342 = vmin.f32 %v2318, 20.0
        %v3343 = vmin.f32 %v2319, 20.0
        %v3344 = vmin.f32 %v2320, 20.0
        %v3345 = vmin.f32 %v2321, 20.0
        %v3346 = vmin.f32 %v2322, 20.0
        %v3347 = vmin.f32 %v2323, 20.0
        %v3348 = vmin.f32 %v2324, 20.0
        %v3349 = vmin.f32 %v2325, 20.0
        %v3350 = vmin.f32 %v2326, 20.0
        %v3351 = vmin.f32 %v2327, 20.0
        %v3352 = vmin.f32 %v2328, 20.0
        %v3353 = vmin.f32 %v2329, 20.0
        %v3354 = vmin.f32 %v2330, 20.0
        %v3355 = vmin.f32 %v2331, 20.0
        %v3356 = vmin.f32 %v2332, 20.0
        %v3357 = vmin.f32 %v2333, 20.0
        %v3358 = vmin.f32 %v2334, 20.0
        %v3359 = vmin.f32 %v2335, 20.0
        %v3360 = vmin.f32 %v2336, 20.0
        %v3361 = vmin.f32 %v2337, 20.0
        %v3362 = vmin.f32 %v2338, 20.0
        %v3363 = vmin.f32 %v2339, 20.0
        %v3364 = vmin.f32 %v2340, 20.0
        %v3365 = vmin.f32 %v2341, 20.0
        %v3366 = vmin.f32 %v2342, 20.0
        %v3367 = vmin.f32 %v2343, 20.0
        %v3368 = vmin.f32 %v2344, 20.0
        %v3369 = vmin.f32 %v2345, 20.0
        %v3370 = vmin.f32 %v2346, 20.0
        %v3371 = vmin.f32 %v2347, 20.0
        %v3372 = vmin.f32 %v2348, 20.0
        %v3373 = vmin.f32 %v2349, 20.0
        %v3374 = vmin.f32 %v2350, 20.0
        %v3375 = vmin.f32 %v2351, 20.0
        %v3376 = vmin.f32 %v2352, 20.0
        %v3377 = vmin.f32 %v2353, 20.0
        %v3378 = vmin.f32 %v2354, 20.0
        %v3379 = vmin.f32 %v2355, 20.0
        %v3380 = vmin.f32 %v2356, 20.0
        %v3381 = vmin.f32 %v2357, 20.0
        %v3382 = vmin.f32 %v2358, 20.0
        %v3383 = vmin.f32 %v2359, 20.0
        %v3384 = vmin.f32 %v2360, 20.0
        %v3385 = vmin.f32 %v2361, 20.0
        %v3386 = vmin.f32 %v2362, 20.0
        %v3387 = vmin.f32 %v2363, 20.0
        %v3388 = vmin.f32 %v2364, 20.0
        %v3389 = vmin.f32 %v2365, 20.0
        %v3390 = vmin.f32 %v2366, 20.0
        %v3391 = vmin.f32 %v2367, 20.0
        %v3392 = vmin.f32 %v2368, 20.0
        %v3393 = vmin.f32 %v2369, 20.0
        %v3394 = vmin.f32 %v2370, 20.0
        %v3395 = vmin.f32 %v2371, 20.0
        %v3396 = vmin.f32 %v2372, 20.0
        %v3397 = vmin.f32 %v2373, 20.0
        %v3398 = vmin.f32 %v2374, 20.0
        %v3399 = vmin.f32 %v2375, 20.0
        %v3400 = vmin.f32 %v2376, 20.0
        %v3401 = vmin.f32 %v2377, 20.0
        %v3402 = vmin.f32 %v2378, 20.0
        %v3403 = vmin.f32 %v2379, 20.0
        %v3404 = vmin.f32 %v2380, 20.0
        %v3405 = vmin.f32 %v2381, 20.0
        %v3406 = vmin.f32 %v2382, 20.0
        %v3407 = vmin.f32 %v2383, 20.0
        %v3408 = vmin.f32 %v2384, 20.0
        %v3409 = vmin.f32 %v2385, 20.0
        %v3410 = vmin.f32 %v2386, 20.0
        %v3411 = vmin.f32 %v2387, 20.0
        %v3412 = vmin.f32 %v2388, 20.0
        %v3413 = vmin.f32 %v2389, 20.0
        %v3414 = vmin.f32 %v2390, 20.0
        %v3415 = vmin.f32 %v2391, 20.0
        %v3416 = vmin.f32 %v2392, 20.0
        %v3417 = vmin.f32 %v2393, 20.0
        %v3418 = vmin.f32 %v2394, 20.0
        %v3419 = vmin.f32 %v2395, 20.0
        %v3420 = vmin.f32 %v2396, 20.0
        %v3421 = vmin.f32 %v2397, 20.0
        %v3422 = vmin.f32 %v2398, 20.0
        %v3423 = vmin.f32 %v2399, 20.0
        %v3424 = vmin.f32 %v2400, 20.0
        %v3425 = vmin.f32 %v2401, 20.0
        %v3426 = vmin.f32 %v2402, 20.0
        %v3427 = vmin.f32 %v2403, 20.0
        %v3428 = vmin.f32 %v2404, 20.0
        %v3429 = vmin.f32 %v2405, 20.0
        %v3430 = vmin.f32 %v2406, 20.0
        %v3431 = vmin.f32 %v2407, 20.0
        %v3432 = vmin.f32 %v2408, 20.0
        %v3433 = vmin.f32 %v2409, 20.0
        %v3434 = vmin.f32 %v2410, 20.0
        %v3435 = vmin.f32 %v2411, 20.0
        %v3436 = vmin.f32 %v2412, 20.0
        %v3437 = vmin.f32 %v2413, 20.0
        %v3438 = vmin.f32 %v2414, 20.0
        %v3439 = vmin.f32 %v2415, 20.0
        %v3440 = vmin.f32 %v2416, 20.0
        %v3441 = vmin.f32 %v2417, 20.0
        %v3442 = vmin.f32 %v2418, 20.0
        %v3443 = vmin.f32 %v2419, 20.0
        %v3444 = vmin.f32 %v2420, 20.0
        %v3445 = vmin.f32 %v2421, 20.0
        %v3446 = vmin.f32 %v2422, 20.0
        %v3447 = vmin.f32 %v2423, 20.0
        %v3448 = vmin.f32 %v2424, 20.0
        %v3449 = vmin.f32 %v2425, 20.0
        %v3450 = vmin.f32 %v2426, 20.0
        %v3451 = vmin.f32 %v2427, 20.0
        %v3452 = vmin.f32 %v2428, 20.0
        %v3453 = vmin.f32 %v2429, 20.0
        %v3454 = vmin.f32 %v2430, 20.0
        %v3455 = vmin.f32 %v2431, 20.0
        %v3456 = vmin.f32 %v2432, 20.0
        %v3457 = vmin.f32 %v2433, 20.0
        %v3458 = vmin.f32 %v2434, 20.0
        %v3459 = vmin.f32 %v2435, 20.0
        %v3460 = vmin.f32 %v2436, 20.0
        %v3461 = vmin.f32 %v2437, 20.0
        %v3462 = vmin.f32 %v2438, 20.0
        %v3463 = vmin.f32 %v2439, 20.0
        %v3464 = vmin.f32 %v2440, 20.0
        %v3465 = vmin.f32 %v2441, 20.0
        %v3466 = vmin.f32 %v2442, 20.0
        %v3467 = vmin.f32 %v2443, 20.0
        %v3468 = vmin.f32 %v2444, 20.0
        %v3469 = vmin.f32 %v2445, 20.0
        %v3470 = vmin.f32 %v2446, 20.0
        %v3471 = vmin.f32 %v2447, 20.0
        %v3472 = vmin.f32 %v2448, 20.0
        %v3473 = vmin.f32 %v2449, 20.0
        %v3474 = vmin.f32 %v2450, 20.0
        %v3475 = vmin.f32 %v2451, 20.0
        %v3476 = vmin.f32 %v2452, 20.0
        %v3477 = vmin.f32 %v2453, 20.0
        %v3478 = vmin.f32 %v2454, 20.0
        %v3479 = vmin.f32 %v2455, 20.0
        %v3480 = vmin.f32 %v2456, 20.0
        %v3481 = vmin.f32 %v2457, 20.0
        %v3482 = vmin.f32 %v2458, 20.0
        %v3483 = vmin.f32 %v2459, 20.0
        %v3484 = vmin.f32 %v2460, 20.0
        %v3485 = vmin.f32 %v2461, 20.0
        %v3486 = vmin.f32 %v2462, 20.0
        %v3487 = vmin.f32 %v2463, 20.0
        %v3488 = vmin.f32 %v2464, 20.0
        %v3489 = vmin.f32 %v2465, 20.0
        %v3490 = vmin.f32 %v2466, 20.0
        %v3491 = vmin.f32 %v2467, 20.0
        %v3492 = vmin.f32 %v2468, 20.0
        %v3493 = vmin.f32 %v2469, 20.0
        %v3494 = vmin.f32 %v2470, 20.0
        %v3495 = vmin.f32 %v2471, 20.0
        %v3496 = vmin.f32 %v2472, 20.0
        %v3497 = vmin.f32 %v2473, 20.0
        %v3498 = vmin.f32 %v2474, 20.0
        %v3499 = vmin.f32 %v2475, 20.0
        %v3500 = vmin.f32 %v2476, 20.0
        %v3501 = vmin.f32 %v2477, 20.0
        %v3502 = vmin.f32 %v2478, 20.0
        %v3503 = vmin.f32 %v2479, 20.0
        %v3504 = vmin.f32 %v2480, 20.0
        %v3505 = vmin.f32 %v2481, 20.0
        %v3506 = vmin.f32 %v2482, 20.0
        %v3507 = vmin.f32 %v2483, 20.0
        %v3508 = vmin.f32 %v2484, 20.0
        %v3509 = vmin.f32 %v2485, 20.0
        %v3510 = vmin.f32 %v2486, 20.0
        %v3511 = vmin.f32 %v2487, 20.0
        %v3512 = vmin.f32 %v2488, 20.0
        %v3513 = vmin.f32 %v2489, 20.0
        %v3514 = vmin.f32 %v2490, 20.0
        %v3515 = vmin.f32 %v2491, 20.0
        %v3516 = vmin.f32 %v2492, 20.0
        %v3517 = vmin.f32 %v2493, 20.0
        %v3518 = vmin.f32 %v2494, 20.0
        %v3519 = vmin.f32 %v2495, 20.0
        %v3520 = vmin.f32 %v2496, 20.0
        %v3521 = vmin.f32 %v2497, 20.0
        %v3522 = vmin.f32 %v2498, 20.0
        %v3523 = vmin.f32 %v2499, 20.0
        %v3524 = vmin.f32 %v2500, 20.0
        %v3525 = vmin.f32 %v2501, 20.0
        %v3526 = vmin.f32 %v2502, 20.0
        %v3527 = vmin.f32 %v2503, 20.0
        %v3528 = vmin.f32 %v2504, 20.0
        %v3529 = vmin.f32 %v2505, 20.0
        %v3530 = vmin.f32 %v2506, 20.0
        %v3531 = vmin.f32 %v2507, 20.0
        %v3532 = vmin.f32 %v2508, 20.0
        %v3533 = vmin.f32 %v2509, 20.0
        %v3534 = vmin.f32 %v2510, 20.0
        %v3535 = vmin.f32 %v2511, 20.0
        %v3536 = vmin.f32 %v2512, 20.0
        %v3537 = vmin.f32 %v2513, 20.0
        %v3538 = vmin.f32 %v2514, 20.0
        %v3539 = vmin.f32 %v2515, 20.0
        %v3540 = vmin.f32 %v2516, 20.0
        %v3541 = vmin.f32 %v2517, 20.0
        %v3542 = vmin.f32 %v2518, 20.0
        %v3543 = vmin.f32 %v2519, 20.0
        %v3544 = vmin.f32 %v2520, 20.0
        %v3545 = vmin.f32 %v2521, 20.0
        %v3546 = vmin.f32 %v2522, 20.0
        %v3547 = vmin.f32 %v2523, 20.0
        %v3548 = vmin.f32 %v2524, 20.0
        %v3549 = vmin.f32 %v2525, 20.0
        %v3550 = vmin.f32 %v2526, 20.0
        %v3551 = vmin.f32 %v2527, 20.0
        %v3552 = vmin.f32 %v2528, 20.0
        %v3553 = vmin.f32 %v2529, 20.0
        %v3554 = vmin.f32 %v2530, 20.0
        %v3555 = vmin.f32 %v2531, 20.0
        %v3556 = vmin.f32 %v2532, 20.0
        %v3557 = vmin.f32 %v2533, 20.0
        %v3558 = vmin.f32 %v2534, 20.0
        %v3559 = vmin.f32 %v2535, 20.0
        %v3560 = vmin.f32 %v2536, 20.0
        %v3561 = vmin.f32 %v2537, 20.0
        %v3562 = vmin.f32 %v2538, 20.0
        %v3563 = vmin.f32 %v2539, 20.0
        %v3564 = vmin.f32 %v2540, 20.0
        %v3565 = vmin.f32 %v2541, 20.0
        %v3566 = vmin.f32 %v2542, 20.0
        %v3567 = vmin.f32 %v2543, 20.0
        %v3568 = vmin.f32 %v2544, 20.0
        %v3569 = vmin.f32 %v2545, 20.0
        %v3570 = vmin.f32 %v2546, 20.0
        %v3571 = vmin.f32 %v2547, 20.0
        %v3572 = vmin.f32 %v2548, 20.0
        %v3573 = vmin.f32 %v2549, 20.0
        %v3574 = vmin.f32 %v2550, 20.0
        %v3575 = vmin.f32 %v2551, 20.0
        %v3576 = vmin.f32 %v2552, 20.0
        %v3577 = vmin.f32 %v2553, 20.0
        %v3578 = vmin.f32 %v2554, 20.0
        %v3579 = vmin.f32 %v2555, 20.0
        %v3580 = vmin.f32 %v2556, 20.0
        %v3581 = vmin.f32 %v2557, 20.0
        %v3582 = vmin.f32 %v2558, 20.0
        %v3583 = vmin.f32 %v2559, 20.0
        %v3584 = vmin.f32 %v2560, 20.0
        %v3585 = vmin.f32 %v2561, 20.0
        %v3586 = vmin.f32 %v2562, 20.0
        %v3587 = vmin.f32 %v2563, 20.0
        %v3588 = vmin.f32 %v2564, 20.0
        %v3589 = vmin.f32 %v2565, 20.0
        %v3590 = vmin.f32 %v2566, 20.0
        %v3591 = vmin.f32 %v2567, 20.0
        %v3592 = vmin.f32 %v2568, 20.0
        %v3593 = vmin.f32 %v2569, 20.0
        %v3594 = vmin.f32 %v2570, 20.0
        %v3595 = vmin.f32 %v2571, 20.0
        %v3596 = vmin.f32 %v2572, 20.0
        %v3597 = vmin.f32 %v2573, 20.0
        %v3598 = vmin.f32 %v2574, 20.0
        %v3599 = vmin.f32 %v2575, 20.0
        %v3600 = vmin.f32 %v2576, 20.0
        %v3601 = vmin.f32 %v2577, 20.0
        %v3602 = vmin.f32 %v2578, 20.0
        %v3603 = vmin.f32 %v2579, 20.0
        %v3604 = vmin.f32 %v2580, 20.0
        %v3605 = vmin.f32 %v2581, 20.0
        %v3606 = vmin.f32 %v2582, 20.0
        %v3607 = vmin.f32 %v2583, 20.0
        %v3608 = vmin.f32 %v2584, 20.0
        %v3609 = vmin.f32 %v2585, 20.0
        %v3610 = vmin.f32 %v2586, 20.0
        %v3611 = vmin.f32 %v2587, 20.0
        %v3612 = vmin.f32 %v2588, 20.0
        %v3613 = vmin.f32 %v2589, 20.0
        %v3614 = vmin.f32 %v2590, 20.0
        %v3615 = vmin.f32 %v2591, 20.0
        %v3616 = vmin.f32 %v2592, 20.0
        %v3617 = vmin.f32 %v2593, 20.0
        %v3618 = vmin.f32 %v2594, 20.0
        %v3619 = vmin.f32 %v2595, 20.0
        %v3620 = vmin.f32 %v2596, 20.0
        %v3621 = vmin.f32 %v2597, 20.0
        %v3622 = vmin.f32 %v2598, 20.0
        %v3623 = vmin.f32 %v2599, 20.0
        %v3624 = vmin.f32 %v2600, 20.0
        %v3625 = vmin.f32 %v2601, 20.0
        %v3626 = vmin.f32 %v2602, 20.0
        %v3627 = vmin.f32 %v2603, 20.0
        %v3628 = vmin.f32 %v2604, 20.0
        %v3629 = vmin.f32 %v2605, 20.0
        %v3630 = vmin.f32 %v2606, 20.0
        %v3631 = vmin.f32 %v2607, 20.0
        %v3632 = vmin.f32 %v2608, 20.0
        %v3633 = vmin.f32 %v2609, 20.0
        %v3634 = vmin.f32 %v2610, 20.0
        %v3635 = vmin.f32 %v2611, 20.0
        %v3636 = vmin.f32 %v2612, 20.0
        %v3637 = vmin.f32 %v2613, 20.0
        %v3638 = vmin.f32 %v2614, 20.0
        %v3639 = vmin.f32 %v2615, 20.0
        %v3640 = vmin.f32 %v2616, 20.0
        %v3641 = vmin.f32 %v2617, 20.0
        %v3642 = vmin.f32 %v2618, 20.0
        %v3643 = vmin.f32 %v2619, 20.0
        %v3644 = vmin.f32 %v2620, 20.0
        %v3645 = vmin.f32 %v2621, 20.0
        %v3646 = vmin.f32 %v2622, 20.0
        %v3647 = vmin.f32 %v2623, 20.0
        %v3648 = vmin.f32 %v2624, 20.0
        %v3649 = vmin.f32 %v2625, 20.0
        %v3650 = vmin.f32 %v2626, 20.0
        %v3651 = vmin.f32 %v2627, 20.0
        %v3652 = vmin.f32 %v2628, 20.0
        %v3653 = vmin.f32 %v2629, 20.0
        %v3654 = vmin.f32 %v2630, 20.0
        %v3655 = vmin.f32 %v2631, 20.0
        %v3656 = vmin.f32 %v2632, 20.0
        %v3657 = vmin.f32 %v2633, 20.0
        %v3658 = vmin.f32 %v2634, 20.0
        %v3659 = vmin.f32 %v2635, 20.0
        %v3660 = vmin.f32 %v2636, 20.0
        %v3661 = vmin.f32 %v2637, 20.0
        %v3662 = vmin.f32 %v2638, 20.0
        %v3663 = vmin.f32 %v2639, 20.0
        %v3664 = vmin.f32 %v2640, 20.0
        %v3665 = vmin.f32 %v2641, 20.0
        %v3666 = vmin.f32 %v2642, 20.0
        %v3667 = vmin.f32 %v2643, 20.0
        %v3668 = vmin.f32 %v2644, 20.0
        %v3669 = vmin.f32 %v2645, 20.0
        %v3670 = vmin.f32 %v2646, 20.0
        %v3671 = vmin.f32 %v2647, 20.0
        %v3672 = vmin.f32 %v2648, 20.0
        %v3673 = vmin.f32 %v2649, 20.0
        %v3674 = vmin.f32 %v2650, 20.0
        %v3675 = vmin.f32 %v2651, 20.0
        %v3676 = vmin.f32 %v2652, 20.0
        %v3677 = vmin.f32 %v2653, 20.0
        %v3678 = vmin.f32 %v2654, 20.0
        %v3679 = vmin.f32 %v2655, 20.0
        %v3680 = vmin.f32 %v2656, 20.0
        %v3681 = vmin.f32 %v2657, 20.0
        %v3682 = vmin.f32 %v2658, 20.0
        %v3683 = vmin.f32 %v2659, 20.0
        %v3684 = vmin.f32 %v2660, 20.0
        %v3685 = vmin.f32 %v2661, 20.0
        %v3686 = vmin.f32 %v2662, 20.0
        %v3687 = vmin.f32 %v2663, 20.0
        %v3688 = vmin.f32 %v2664, 20.0
        %v3689 = vmin.f32 %v2665, 20.0
        %v3690 = vmin.f32 %v2666, 20.0
        %v3691 = vmin.f32 %v2667, 20.0
        %v3692 = vmin.f32 %v2668, 20.0
        %v3693 = vmin.f32 %v2669, 20.0
        %v3694 = vmin.f32 %v2670, 20.0
        %v3695 = vmin.f32 %v2671, 20.0
        %v3696 = vmin.f32 %v2672, 20.0
        %v3697 = vmin.f32 %v2673, 20.0
        %v3698 = vmin.f32 %v2674, 20.0
        %v3699 = vmin.f32 %v2675, 20.0
        %v3700 = vmin.f32 %v2676, 20.0
        %v3701 = vmin.f32 %v2677, 20.0
        %v3702 = vmin.f32 %v2678, 20.0
        %v3703 = vmin.f32 %v2679, 20.0
        %v3704 = vmin.f32 %v2680, 20.0
        %v3705 = vmin.f32 %v2681, 20.0
        %v3706 = vmin.f32 %v2682, 20.0
        %v3707 = vmin.f32 %v2683, 20.0
        %v3708 = vmin.f32 %v2684, 20.0
        %v3709 = vmin.f32 %v2685, 20.0
        %v3710 = vmin.f32 %v2686, 20.0
        %v3711 = vmin.f32 %v2687, 20.0
        %v3712 = vmin.f32 %v2688, 20.0
        %v3713 = vmin.f32 %v2689, 20.0
        %v3714 = vmin.f32 %v2690, 20.0
        %v3715 = vmin.f32 %v2691, 20.0
        %v3716 = vmin.f32 %v2692, 20.0
        %v3717 = vmin.f32 %v2693, 20.0
        %v3718 = vmin.f32 %v2694, 20.0
        %v3719 = vmin.f32 %v2695, 20.0
        %v3720 = vmin.f32 %v2696, 20.0
        %v3721 = vmin.f32 %v2697, 20.0
        %v3722 = vmin.f32 %v2698, 20.0
        %v3723 = vmin.f32 %v2699, 20.0
        %v3724 = vmin.f32 %v2700, 20.0
        %v3725 = vmin.f32 %v2701, 20.0
        %v3726 = vmin.f32 %v2702, 20.0
        %v3727 = vmin.f32 %v2703, 20.0
        %v3728 = vmin.f32 %v2704, 20.0
        %v3729 = vmin.f32 %v2705, 20.0
        %v3730 = vmin.f32 %v2706, 20.0
        %v3731 = vmin.f32 %v2707, 20.0
        %v3732 = vmin.f32 %v2708, 20.0
        %v3733 = vmin.f32 %v2709, 20.0
        %v3734 = vmin.f32 %v2710, 20.0
        %v3735 = vmin.f32 %v2711, 20.0
        %v3736 = vmin.f32 %v2712, 20.0
        %v3737 = vmin.f32 %v2713, 20.0
        %v3738 = vmin.f32 %v2714, 20.0
        %v3739 = vmin.f32 %v2715, 20.0
        %v3740 = vmin.f32 %v2716, 20.0
        %v3741 = vmin.f32 %v2717, 20.0
        %v3742 = vmin.f32 %v2718, 20.0
        %v3743 = vmin.f32 %v2719, 20.0
        %v3744 = vmin.f32 %v2720, 20.0
        %v3745 = vmin.f32 %v2721, 20.0
        %v3746 = vmin.f32 %v2722, 20.0
        %v3747 = vmin.f32 %v2723, 20.0
        %v3748 = vmin.f32 %v2724, 20.0
        %v3749 = vmin.f32 %v2725, 20.0
        %v3750 = vmin.f32 %v2726, 20.0
        %v3751 = vmin.f32 %v2727, 20.0
        %v3752 = vmin.f32 %v2728, 20.0
        %v3753 = vmin.f32 %v2729, 20.0
        %v3754 = vmin.f32 %v2730, 20.0
        %v3755 = vmin.f32 %v2731, 20.0
        %v3756 = vmin.f32 %v2732, 20.0
        %v3757 = vmin.f32 %v2733, 20.0
        %v3758 = vmin.f32 %v2734, 20.0
        %v3759 = vmin.f32 %v2735, 20.0
        %v3760 = vmin.f32 %v2736, 20.0
        %v3761 = vmin.f32 %v2737, 20.0
        %v3762 = vmin.f32 %v2738, 20.0
        %v3763 = vmin.f32 %v2739, 20.0
        %v3764 = vmin.f32 %v2740, 20.0
        %v3765 = vmin.f32 %v2741, 20.0
        %v3766 = vmin.f32 %v2742, 20.0
        %v3767 = vmin.f32 %v2743, 20.0
        %v3768 = vmin.f32 %v2744, 20.0
        %v3769 = vmin.f32 %v2745, 20.0
        %v3770 = vmin.f32 %v2746, 20.0
        %v3771 = vmin.f32 %v2747, 20.0
        %v3772 = vmin.f32 %v2748, 20.0
        %v3773 = vmin.f32 %v2749, 20.0
        %v3774 = vmin.f32 %v2750, 20.0
        %v3775 = vmin.f32 %v2751, 20.0
        %v3776 = vmin.f32 %v2752, 20.0
        %v3777 = vmin.f32 %v2753, 20.0
        %v3778 = vmin.f32 %v2754, 20.0
        %v3779 = vmin.f32 %v2755, 20.0
        %v3780 = vmin.f32 %v2756, 20.0
        %v3781 = vmin.f32 %v2757, 20.0
        %v3782 = vmin.f32 %v2758, 20.0
        %v3783 = vmin.f32 %v2759, 20.0
        %v3784 = vmin.f32 %v2760, 20.0
        %v3785 = vmin.f32 %v2761, 20.0
        %v3786 = vmin.f32 %v2762, 20.0
        %v3787 = vmin.f32 %v2763, 20.0
        %v3788 = vmin.f32 %v2764, 20.0
        %v3789 = vmin.f32 %v2765, 20.0
        %v3790 = vmin.f32 %v2766, 20.0
        %v3791 = vmin.f32 %v2767, 20.0
        %v3792 = vmin.f32 %v2768, 20.0
        %v3793 = vmin.f32 %v2769, 20.0
        %v3794 = vmin.f32 %v2770, 20.0
        %v3795 = vmin.f32 %v2771, 20.0
        %v3796 = vmin.f32 %v2772, 20.0
        %v3797 = vmin.f32 %v2773, 20.0
        %v3798 = vmin.f32 %v2774, 20.0
        %v3799 = vmin.f32 %v2775, 20.0
        %v3800 = vmin.f32 %v2776, 20.0
        %v3801 = vmin.f32 %v2777, 20.0
        %v3802 = vmin.f32 %v2778, 20.0
        %v3803 = vmin.f32 %v2779, 20.0
        %v3804 = vmin.f32 %v2780, 20.0
        %v3805 = vmin.f32 %v2781, 20.0
        %v3806 = vmin.f32 %v2782, 20.0
        %v3807 = vmin.f32 %v2783, 20.0
        %v3808 = vmin.f32 %v2784, 20.0
        %v3809 = vmin.f32 %v2785, 20.0
        %v3810 = vmin.f32 %v2786, 20.0
        %v3811 = vmin.f32 %v2787, 20.0
        %v3812 = vmin.f32 %v2788, 20.0
        %v3813 = vmin.f32 %v2789, 20.0
        %v3814 = vmin.f32 %v2790, 20.0
        %v3815 = vmin.f32 %v2791, 20.0
        %v3816 = vmin.f32 %v2792, 20.0
        %v3817 = vmin.f32 %v2793, 20.0
        %v3818 = vmin.f32 %v2794, 20.0
        %v3819 = vmin.f32 %v2795, 20.0
        %v3820 = vmin.f32 %v2796, 20.0
        %v3821 = vmin.f32 %v2797, 20.0
        %v3822 = vmin.f32 %v2798, 20.0
        %v3823 = vmin.f32 %v2799, 20.0
        %v3824 = vmin.f32 %v2800, 20.0
        %v3825 = vmin.f32 %v2801, 20.0
        %v3826 = vmin.f32 %v2802, 20.0
        %v3827 = vmin.f32 %v2803, 20.0
        %v3828 = vmin.f32 %v2804, 20.0
        %v3829 = vmin.f32 %v2805, 20.0
        %v3830 = vmin.f32 %v2806, 20.0
        %v3831 = vmin.f32 %v2807, 20.0
        %v3832 = vmin.f32 %v2808, 20.0
        %v3833 = vmin.f32 %v2809, 20.0
        %v3834 = vmin.f32 %v2810, 20.0
        %v3835 = vmin.f32 %v2811, 20.0
        %v3836 = vmin.f32 %v2812, 20.0
        %v3837 = vmin.f32 %v2813, 20.0
        %v3838 = vmin.f32 %v2814, 20.0
        %v3839 = vmin.f32 %v2815, 20.0
        %v3840 = vmin.f32 %v2816, 20.0
        %v3841 = vmin.f32 %v2817, 20.0
        %v3842 = vmin.f32 %v2818, 20.0
        %v3843 = vmin.f32 %v2819, 20.0
        %v3844 = vmin.f32 %v2820, 20.0
        %v3845 = vmin.f32 %v2821, 20.0
        %v3846 = vmin.f32 %v2822, 20.0
        %v3847 = vmin.f32 %v2823, 20.0
        %v3848 = vmin.f32 %v2824, 20.0
        %v3849 = vmin.f32 %v2825, 20.0
        %v3850 = vmin.f32 %v2826, 20.0
        %v3851 = vmin.f32 %v2827, 20.0
        %v3852 = vmin.f32 %v2828, 20.0
        %v3853 = vmin.f32 %v2829, 20.0
        %v3854 = vmin.f32 %v2830, 20.0
        %v3855 = vmin.f32 %v2831, 20.0
        %v3856 = vmin.f32 %v2832, 20.0
        %v3857 = vmin.f32 %v2833, 20.0
        %v3858 = vmin.f32 %v2834, 20.0
        %v3859 = vmin.f32 %v2835, 20.0
        %v3860 = vmin.f32 %v2836, 20.0
        %v3861 = vmin.f32 %v2837, 20.0
        %v3862 = vmin.f32 %v2838, 20.0
        %v3863 = vmin.f32 %v2839, 20.0
        %v3864 = vmin.f32 %v2840, 20.0
        %v3865 = vmin.f32 %v2841, 20.0
        %v3866 = vmin.f32 %v2842, 20.0
        %v3867 = vmin.f32 %v2843, 20.0
        %v3868 = vmin.f32 %v2844, 20.0
        %v3869 = vmin.f32 %v2845, 20.0
        %v3870 = vmin.f32 %v2846, 20.0
        %v3871 = vmin.f32 %v2847, 20.0
        %v3872 = vmin.f32 %v2848, 20.0
        %v3873 = vmin.f32 %v2849, 20.0
        %v3874 = vmin.f32 %v2850, 20.0
        %v3875 = vmin.f32 %v2851, 20.0
        %v3876 = vmin.f32 %v2852, 20.0
        %v3877 = vmin.f32 %v2853, 20.0
        %v3878 = vmin.f32 %v2854, 20.0
        %v3879 = vmin.f32 %v2855, 20.0
        %v3880 = vmin.f32 %v2856, 20.0
        %v3881 = vmin.f32 %v2857, 20.0
        %v3882 = vmin.f32 %v2858, 20.0
        %v3883 = vmin.f32 %v2859, 20.0
        %v3884 = vmin.f32 %v2860, 20.0
        %v3885 = vmin.f32 %v2861, 20.0
        %v3886 = vmin.f32 %v2862, 20.0
        %v3887 = vmin.f32 %v2863, 20.0
        %v3888 = vmin.f32 %v2864, 20.0
        %v3889 = vmin.f32 %v2865, 20.0
        %v3890 = vmin.f32 %v2866, 20.0
        %v3891 = vmin.f32 %v2867, 20.0
        %v3892 = vmin.f32 %v2868, 20.0
        %v3893 = vmin.f32 %v2869, 20.0
        %v3894 = vmin.f32 %v2870, 20.0
        %v3895 = vmin.f32 %v2871, 20.0
        %v3896 = vmin.f32 %v2872, 20.0
        %v3897 = vmin.f32 %v2873, 20.0
        %v3898 = vmin.f32 %v2874, 20.0
        %v3899 = vmin.f32 %v2875, 20.0
        %v3900 = vmin.f32 %v2876, 20.0
        %v3901 = vmin.f32 %v2877, 20.0
        %v3902 = vmin.f32 %v2878, 20.0
        %v3903 = vmin.f32 %v2879, 20.0
        %v3904 = vmin.f32 %v2880, 20.0
        %v3905 = vmin.f32 %v2881, 20.0
        %v3906 = vmin.f32 %v2882, 20.0
        %v3907 = vmin.f32 %v2883, 20.0
        %v3908 = vmin.f32 %v2884, 20.0
        %v3909 = vmin.f32 %v2885, 20.0
        %v3910 = vmin.f32 %v2886, 20.0
        %v3911 = vmin.f32 %v2887, 20.0
        %v3912 = vmin.f32 %v2888, 20.0
        %v3913 = vmin.f32 %v2889, 20.0
        %v3914 = vmin.f32 %v2890, 20.0
        %v3915 = vmin.f32 %v2891, 20.0
        %v3916 = vmin.f32 %v2892, 20.0
        %v3917 = vmin.f32 %v2893, 20.0
        %v3918 = vmin.f32 %v2894, 20.0
        %v3919 = vmin.f32 %v2895, 20.0
        %v3920 = vmin.f32 %v2896, 20.0
        %v3921 = vmin.f32 %v2897, 20.0
        %v3922 = vmin.f32 %v2898, 20.0
        %v3923 = vmin.f32 %v2899, 20.0
        %v3924 = vmin.f32 %v2900, 20.0
        %v3925 = vmin.f32 %v2901, 20.0
        %v3926 = vmin.f32 %v2902, 20.0
        %v3927 = vmin.f32 %v2903, 20.0
        %v3928 = vmin.f32 %v2904, 20.0
        %v3929 = vmin.f32 %v2905, 20.0
        %v3930 = vmin.f32 %v2906, 20.0
        %v3931 = vmin.f32 %v2907, 20.0
        %v3932 = vmin.f32 %v2908, 20.0
        %v3933 = vmin.f32 %v2909, 20.0
        %v3934 = vmin.f32 %v2910, 20.0
        %v3935 = vmin.f32 %v2911, 20.0
        %v3936 = vmin.f32 %v2912, 20.0
        %v3937 = vmin.f32 %v2913, 20.0
        %v3938 = vmin.f32 %v2914, 20.0
        %v3939 = vmin.f32 %v2915, 20.0
        %v3940 = vmin.f32 %v2916, 20.0
        %v3941 = vmin.f32 %v2917, 20.0
        %v3942 = vmin.f32 %v2918, 20.0
        %v3943 = vmin.f32 %v2919, 20.0
        %v3944 = vmin.f32 %v2920, 20.0
        %v3945 = vmin.f32 %v2921, 20.0
        %v3946 = vmin.f32 %v2922, 20.0
        %v3947 = vmin.f32 %v2923, 20.0
        %v3948 = vmin.f32 %v2924, 20.0
        %v3949 = vmin.f32 %v2925, 20.0
        %v3950 = vmin.f32 %v2926, 20.0
        %v3951 = vmin.f32 %v2927, 20.0
        %v3952 = vmin.f32 %v2928, 20.0
        %v3953 = vmin.f32 %v2929, 20.0
        %v3954 = vmin.f32 %v2930, 20.0
        %v3955 = vmin.f32 %v2931, 20.0
        %v3956 = vmin.f32 %v2932, 20.0
        %v3957 = vmin.f32 %v2933, 20.0
        %v3958 = vmin.f32 %v2934, 20.0
        %v3959 = vmin.f32 %v2935, 20.0
        %v3960 = vmin.f32 %v2936, 20.0
        %v3961 = vmin.f32 %v2937, 20.0
        %v3962 = vmin.f32 %v2938, 20.0
        %v3963 = vmin.f32 %v2939, 20.0
        %v3964 = vmin.f32 %v2940, 20.0
        %v3965 = vmin.f32 %v2941, 20.0
        %v3966 = vmin.f32 %v2942, 20.0
        %v3967 = vmin.f32 %v2943, 20.0
        %v3968 = vmin.f32 %v2944, 20.0
        %v3969 = vmin.f32 %v2945, 20.0
        %v3970 = vmin.f32 %v2946, 20.0
        %v3971 = vmin.f32 %v2947, 20.0
        %v3972 = vmin.f32 %v2948, 20.0
        %v3973 = vmin.f32 %v2949, 20.0
        %v3974 = vmin.f32 %v2950, 20.0
        %v3975 = vmin.f32 %v2951, 20.0
        %v3976 = vmin.f32 %v2952, 20.0
        %v3977 = vmin.f32 %v2953, 20.0
        %v3978 = vmin.f32 %v2954, 20.0
        %v3979 = vmin.f32 %v2955, 20.0
        %v3980 = vmin.f32 %v2956, 20.0
        %v3981 = vmin.f32 %v2957, 20.0
        %v3982 = vmin.f32 %v2958, 20.0
        %v3983 = vmin.f32 %v2959, 20.0
        %v3984 = vmin.f32 %v2960, 20.0
        %v3985 = vmin.f32 %v2961, 20.0
        %v3986 = vmin.f32 %v2962, 20.0
        %v3987 = vmin.f32 %v2963, 20.0
        %v3988 = vmin.f32 %v2964, 20.0
        %v3989 = vmin.f32 %v2965, 20.0
        %v3990 = vmin.f32 %v2966, 20.0
        %v3991 = vmin.f32 %v2967, 20.0
        %v3992 = vmin.f32 %v2968, 20.0
        %v3993 = vmin.f32 %v2969, 20.0
        %v3994 = vmin.f32 %v2970, 20.0
        %v3995 = vmin.f32 %v2971, 20.0
        %v3996 = vmin.f32 %v2972, 20.0
        %v3997 = vmin.f32 %v2973, 20.0
        %v3998 = vmin.f32 %v2974, 20.0
        %v3999 = vmin.f32 %v2975, 20.0
        %v4000 = vmin.f32 %v2976, 20.0
        %v4001 = vmin.f32 %v2977, 20.0
        %v4002 = vmin.f32 %v2978, 20.0
        %v4003 = vmin.f32 %v2979, 20.0
        %v4004 = vmin.f32 %v2980, 20.0
        %v4005 = vmin.f32 %v2981, 20.0
        %v4006 = vmin.f32 %v2982, 20.0
        %v4007 = vmin.f32 %v2983, 20.0
        %v4008 = vmin.f32 %v2984, 20.0
        %v4009 = vmin.f32 %v2985, 20.0
        %v4010 = vmin.f32 %v2986, 20.0
        %v4011 = vmin.f32 %v2987, 20.0
        %v4012 = vmin.f32 %v2988, 20.0
        %v4013 = vmin.f32 %v2989, 20.0
        %v4014 = vmin.f32 %v2990, 20.0
        %v4015 = vmin.f32 %v2991, 20.0
        %v4016 = vmin.f32 %v2992, 20.0
        %v4017 = vmin.f32 %v2993, 20.0
        %v4018 = vmin.f32 %v2994, 20.0
        %v4019 = vmin.f32 %v2995, 20.0
        %v4020 = vmin.f32 %v2996, 20.0
        %v4021 = vmin.f32 %v2997, 20.0
        %v4022 = vmin.f32 %v2998, 20.0
        %v4023 = vmin.f32 %v2999, 20.0
        %v4024 = vmin.f32 %v3000, 20.0
        %v4025 = vmin.f32 %v3001, 20.0
        %v4026 = vmin.f32 %v3002, 20.0
        %v4027 = vmin.f32 %v3003, 20.0
        %v4028 = vmin.f32 %v3004, 20.0
        %v4029 = vmin.f32 %v3005, 20.0
        %v4030 = vmin.f32 %v3006, 20.0
        %v4031 = vmin.f32 %v3007, 20.0
        %v4032 = vmin.f32 %v3008, 20.0
        %v4033 = vmin.f32 %v3009, 20.0
        %v4034 = vmin.f32 %v3010, 20.0
        %v4035 = vmin.f32 %v3011, 20.0
        %v4036 = vmin.f32 %v3012, 20.0
        %v4037 = vmin.f32 %v3013, 20.0
        %v4038 = vmin.f32 %v3014, 20.0
        %v4039 = vmin.f32 %v3015, 20.0
        %v4040 = vmin.f32 %v3016, 20.0
        %v4041 = vmin.f32 %v3017, 20.0
        %v4042 = vmin.f32 %v3018, 20.0
        %v4043 = vmin.f32 %v3019, 20.0
        %v4044 = vmin.f32 %v3020, 20.0
        %v4045 = vmin.f32 %v3021, 20.0
        %v4046 = vmin.f32 %v3022, 20.0
        %v4047 = vmin.f32 %v3023, 20.0
        %v4048 = vmin.f32 %v3024, 20.0
        %v4049 = vmin.f32 %v3025, 20.0
        %v4050 = vmin.f32 %v3026, 20.0
        %v4051 = vmin.f32 %v3027, 20.0
        %v4052 = vmin.f32 %v3028, 20.0
        %v4053 = vmin.f32 %v3029, 20.0
        %v4054 = vmin.f32 %v3030, 20.0
        %v4055 = vmin.f32 %v3031, 20.0
        %v4056 = vmin.f32 %v3032, 20.0
        %v4057 = vmin.f32 %v3033, 20.0
        %v4058 = vmin.f32 %v3034, 20.0
        %v4059 = vmin.f32 %v3035, 20.0
        %v4060 = vmin.f32 %v3036, 20.0
        %v4061 = vmin.f32 %v3037, 20.0
        %v4062 = vmin.f32 %v3038, 20.0
        %v4063 = vmin.f32 %v3039, 20.0
        %v4064 = vmin.f32 %v3040, 20.0
        %v4065 = vmin.f32 %v3041, 20.0
        %v4066 = vmin.f32 %v3042, 20.0
        %v4067 = vmin.f32 %v3043, 20.0
        %v4068 = vmin.f32 %v3044, 20.0
        %v4069 = vmin.f32 %v3045, 20.0
        %v4070 = vmin.f32 %v3046, 20.0
        %v4071 = vmin.f32 %v3047, 20.0
        %v4072 = vmin.f32 %v3048, 20.0
        %v4073 = vmin.f32 %v3049, 20.0
        %v4074 = vmin.f32 %v3050, 20.0
        %v4075 = vmin.f32 %v3051, 20.0
        %v4076 = vmin.f32 %v3052, 20.0
        %v4077 = vmin.f32 %v3053, 20.0
        %v4078 = vmin.f32 %v3054, 20.0
        %v4079 = vmin.f32 %v3055, 20.0
        %v4080 = vmin.f32 %v3056, 20.0
        %v4081 = vmin.f32 %v3057, 20.0
        %v4082 = vmin.f32 %v3058, 20.0
        %v4083 = vmin.f32 %v3059, 20.0
        %v4084 = vmin.f32 %v3060, 20.0
        %v4085 = vmin.f32 %v3061, 20.0
        %v4086 = vmin.f32 %v3062, 20.0
        %v4087 = vmin.f32 %v3063, 20.0
        %v4088 = vmin.f32 %v3064, 20.0
        %v4089 = vmin.f32 %v3065, 20.0
        %v4090 = vmin.f32 %v3066, 20.0
        %v4091 = vmin.f32 %v3067, 20.0
        %v4092 = vmin.f32 %v3068, 20.0
        %v4093 = vmin.f32 %v3069, 20.0
        %v4094 = vmin.f32 %v3070, 20.0
        %v4095 = vmin.f32 %v3071, 20.0
        %v4096 = vmin.f32 %v3072, 20.0
        %v4097 = vmin.f32 %v3073, 20.0
        %v4098 = vmin.f32 %v3074, 20.0
        %v4099 = vmin.f32 %v3075, 20.0
        %v4100 = vmin.f32 %v3076, 20.0
        %v4101 = vmin.f32 %v3077, 20.0
        %v4102 = vmin.f32 %v3078, 20.0
        %v4103 = vmin.f32 %v3079, 20.0
        %v4104 = vmin.f32 %v3080, 20.0
        %v4105 = vmin.f32 %v3081, 20.0
        %v4106 = vmin.f32 %v3082, 20.0
        %v4107 = vmin.f32 %v3083, 20.0
        %v4108 = vmin.f32 %v3084, 20.0
        %v4109 = vmin.f32 %v3085, 20.0
        %v4110 = vmin.f32 %v3086, 20.0
        %v4111 = vmin.f32 %v3087, 20.0
        %v4112 = vmin.f32 %v3088, 20.0
        %v4113 = vmin.f32 %v3089, 20.0
        %v4114 = vmin.f32 %v3090, 20.0
        %v4115 = vmin.f32 %v3091, 20.0
        %v4116 = vmin.f32 %v3092, 20.0
        %v4117 = vmin.f32 %v3093, 20.0
        %v4118 = vmin.f32 %v3094, 20.0
        %v4119 = vmin.f32 %v3095, 20.0
        %v4120 = vmin.f32 %v3096, 20.0
        %v4121 = vmin.f32 %v3097, 20.0
        %v4122 = vmin.f32 %v3098, 20.0
        %v4123 = vmin.f32 %v3099, 20.0
        %v4124 = vmin.f32 %v3100, 20.0
        %v4125 = vmin.f32 %v3101, 20.0
        %v4126 = vmin.f32 %v3102, 20.0
        %v4127 = vmin.f32 %v3103, 20.0
        %v4128 = vmin.f32 %v3104, 20.0
        %v4129 = vmin.f32 %v3105, 20.0
        %v4130 = vmin.f32 %v3106, 20.0
        %v4131 = vmin.f32 %v3107, 20.0
        %v4132 = vmin.f32 %v3108, 20.0
        %v4133 = vmin.f32 %v3109, 20.0
        %v4134 = vmin.f32 %v3110, 20.0
        %v4135 = vmin.f32 %v3111, 20.0
        %v4136 = vmin.f32 %v3112, 20.0
        %v4137 = vmin.f32 %v3113, 20.0
        %v4138 = vmin.f32 %v3114, 20.0
        %v4139 = vmin.f32 %v3115, 20.0
        %v4140 = vmin.f32 %v3116, 20.0
        %v4141 = vmin.f32 %v3117, 20.0
        %v4142 = vmin.f32 %v3118, 20.0
        %v4143 = vmin.f32 %v3119, 20.0
        %v4144 = vmin.f32 %v3120, 20.0
        %v4145 = vmin.f32 %v3121, 20.0
        %v4146 = vmin.f32 %v3122, 20.0
        %v4147 = vmin.f32 %v3123, 20.0
        %v4148 = vmin.f32 %v3124, 20.0
        %v4149 = vmin.f32 %v3125, 20.0
        %v4150 = vmin.f32 %v3126, 20.0
        %v4151 = vmin.f32 %v3127, 20.0
        %v4152 = vmin.f32 %v3128, 20.0
        %v4153 = vmin.f32 %v3129, 20.0
        %v4154 = vmin.f32 %v3130, 20.0
        %v4155 = vmin.f32 %v3131, 20.0
        %v4156 = vmin.f32 %v3132, 20.0
        %v4157 = vmin.f32 %v3133, 20.0
        %v4158 = vmin.f32 %v3134, 20.0
        %v4159 = vmin.f32 %v3135, 20.0
        %v4160 = vmin.f32 %v3136, 20.0
        %v4161 = vmin.f32 %v3137, 20.0
        %v4162 = vmin.f32 %v3138, 20.0
        %v4163 = vmin.f32 %v3139, 20.0
        %v4164 = vmin.f32 %v3140, 20.0
        %v4165 = vmin.f32 %v3141, 20.0
        %v4166 = vmin.f32 %v3142, 20.0
        %v4167 = vmin.f32 %v3143, 20.0
        %v4168 = vmin.f32 %v3144, 20.0
        %v4169 = vmin.f32 %v3145, 20.0
        %v4170 = vmin.f32 %v3146, 20.0
        %v4171 = vmin.f32 %v3147, 20.0
        %v4172 = vmin.f32 %v3148, 20.0
        %v4173 = vmin.f32 %v3149, 20.0
        %v4174 = vmin.f32 %v3150, 20.0
        %v4175 = vmin.f32 %v3151, 20.0
        %v4176 = vmin.f32 %v3152, 20.0
        %v4177 = vmin.f32 %v3153, 20.0
        %v4178 = vmin.f32 %v3154, 20.0
        %v4179 = vmin.f32 %v3155, 20.0
        %v4180 = vmin.f32 %v3156, 20.0
        %v4181 = vmin.f32 %v3157, 20.0
        %v4182 = vmin.f32 %v3158, 20.0
        %v4183 = vmin.f32 %v3159, 20.0
        %v4184 = vmin.f32 %v3160, 20.0
        %v4185 = vmin.f32 %v3161, 20.0
        %v4186 = vmin.f32 %v3162, 20.0
        %v4187 = vmin.f32 %v3163, 20.0
        %v4188 = vmin.f32 %v3164, 20.0
        %v4189 = vmin.f32 %v3165, 20.0
        %v4190 = vmin.f32 %v3166, 20.0
        %v4191 = vmin.f32 %v3167, 20.0
        %v4192 = vmin.f32 %v3168, 20.0
        %v4193 = vmin.f32 %v3169, 20.0
        %v4194 = vmin.f32 %v3170, 20.0
        %v4195 = vmin.f32 %v3171, 20.0
        %v4196 = vmin.f32 %v3172, 20.0
        %v4197 = vmin.f32 %v3173, 20.0
        %v4198 = vmin.f32 %v3174, 20.0
        %v4199 = vmin.f32 %v3175, 20.0
        %v4200 = vmin.f32 %v3176, 20.0
        %v4201 = vmin.f32 %v3177, 20.0
        %v4202 = vmin.f32 %v3178, 20.0
        %v4203 = vmin.f32 %v3179, 20.0
        %v4204 = vmin.f32 %v3180, 20.0
        %v4205 = vmin.f32 %v3181, 20.0
        %v4206 = vmin.f32 %v3182, 20.0
        %v4207 = vmin.f32 %v3183, 20.0
        %v4208 = vmin.f32 %v3184, 20.0
        %v4209 = vmin.f32 %v3185, 20.0
        %v4210 = vmin.f32 %v3186, 20.0
        %v4211 = vmin.f32 %v3187, 20.0
        %v4212 = vmin.f32 %v3188, 20.0
        %v4213 = vmin.f32 %v3189, 20.0
        %v4214 = vmin.f32 %v3190, 20.0
        %v4215 = vmin.f32 %v3191, 20.0
        %v4216 = vmin.f32 %v3192, 20.0
        %v4217 = vmin.f32 %v3193, 20.0
        %v4218 = vmin.f32 %v3194, 20.0
        %v4219 = vmin.f32 %v3195, 20.0
        %v4220 = vmin.f32 %v3196, 20.0
        %v4221 = vmin.f32 %v3197, 20.0
        %v4222 = vmin.f32 %v3198, 20.0
        %v4223 = vmin.f32 %v3199, 20.0
        %v4224 = vmin.f32 %v3200, 20.0
        %v4225 = vmin.f32 %v3201, 20.0
        %v4226 = vmin.f32 %v3202, 20.0
        %v4227 = vmin.f32 %v3203, 20.0
        %v4228 = vmin.f32 %v3204, 20.0
        %v4229 = vmin.f32 %v3205, 20.0
        %v4230 = vmin.f32 %v3206, 20.0
        %v4231 = vmin.f32 %v3207, 20.0
        %v4232 = vmin.f32 %v3208, 20.0
        %v4233 = vmin.f32 %v3209, 20.0
        %v4234 = vmin.f32 %v3210, 20.0
        %v4235 = vmin.f32 %v3211, 20.0
        %v4236 = vmin.f32 %v3212, 20.0
        %v4237 = vmin.f32 %v3213, 20.0
        %v4238 = vmin.f32 %v3214, 20.0
        %v4239 = vmin.f32 %v3215, 20.0
        %v4240 = vmin.f32 %v3216, 20.0
        %v4241 = vmin.f32 %v3217, 20.0
        %v4242 = vmin.f32 %v3218, 20.0
        %v4243 = vmin.f32 %v3219, 20.0
        %v4244 = vmin.f32 %v3220, 20.0
        %v4245 = vmin.f32 %v3221, 20.0
        %v4246 = vmin.f32 %v3222, 20.0
        %4247 = vst [vmem:[%s140] sm:$0xff] %v3223
        %4248 = vst [vmem:[%s140 + $0x8] sm:$0xff] %v3224
        %4249 = vst [vmem:[%s140 + $0x10] sm:$0xff] %v3225
        %4250 = vst [vmem:[%s140 + $0x18] sm:$0xff] %v3226
        %4251 = vst [vmem:[%s140 + $0x20] sm:$0xff] %v3227
        %4252 = vst [vmem:[%s140 + $0x28] sm:$0xff] %v3228
        %4253 = vst [vmem:[%s140 + $0x30] sm:$0xff] %v3229
        %4254 = vst [vmem:[%s140 + $0x38] sm:$0xff] %v3230
        %4255 = vst [vmem:[%s140 + $0x40] sm:$0xff] %v3231
        %4256 = vst [vmem:[%s140 + $0x48] sm:$0xff] %v3232
        %4257 = vst [vmem:[%s140 + $0x50] sm:$0xff] %v3233
        %4258 = vst [vmem:[%s140 + $0x58] sm:$0xff] %v3234
        %4259 = vst [vmem:[%s140 + $0x60] sm:$0xff] %v3235
        %4260 = vst [vmem:[%s140 + $0x68] sm:$0xff] %v3236
        %4261 = vst [vmem:[%s140 + $0x70] sm:$0xff] %v3237
        %4262 = vst [vmem:[%s140 + $0x78] sm:$0xff] %v3238
        %4263 = vst [vmem:[%s140 + $0x80] sm:$0xff] %v3239
        %4264 = vst [vmem:[%s140 + $0x88] sm:$0xff] %v3240
        %4265 = vst [vmem:[%s140 + $0x90] sm:$0xff] %v3241
        %4266 = vst [vmem:[%s140 + $0x98] sm:$0xff] %v3242
        %4267 = vst [vmem:[%s140 + $0xa0] sm:$0xff] %v3243
        %4268 = vst [vmem:[%s140 + $0xa8] sm:$0xff] %v3244
        %4269 = vst [vmem:[%s140 + $0xb0] sm:$0xff] %v3245
        %4270 = vst [vmem:[%s140 + $0xb8] sm:$0xff] %v3246
        %4271 = vst [vmem:[%s140 + $0xc0] sm:$0xff] %v3247
        %4272 = vst [vmem:[%s140 + $0xc8] sm:$0xff] %v3248
        %4273 = vst [vmem:[%s140 + $0xd0] sm:$0xff] %v3249
        %4274 = vst [vmem:[%s140 + $0xd8] sm:$0xff] %v3250
        %4275 = vst [vmem:[%s140 + $0xe0] sm:$0xff] %v3251
        %4276 = vst [vmem:[%s140 + $0xe8] sm:$0xff] %v3252
        %4277 = vst [vmem:[%s140 + $0xf0] sm:$0xff] %v3253
        %4278 = vst [vmem:[%s140 + $0xf8] sm:$0xff] %v3254
        %4279 = vst [vmem:[%s140 + $0x100] sm:$0xff] %v3255
        %4280 = vst [vmem:[%s140 + $0x108] sm:$0xff] %v3256
        %4281 = vst [vmem:[%s140 + $0x110] sm:$0xff] %v3257
        %4282 = vst [vmem:[%s140 + $0x118] sm:$0xff] %v3258
        %4283 = vst [vmem:[%s140 + $0x120] sm:$0xff] %v3259
        %4284 = vst [vmem:[%s140 + $0x128] sm:$0xff] %v3260
        %4285 = vst [vmem:[%s140 + $0x130] sm:$0xff] %v3261
        %4286 = vst [vmem:[%s140 + $0x138] sm:$0xff] %v3262
        %4287 = vst [vmem:[%s140 + $0x140] sm:$0xff] %v3263
        %4288 = vst [vmem:[%s140 + $0x148] sm:$0xff] %v3264
        %4289 = vst [vmem:[%s140 + $0x150] sm:$0xff] %v3265
        %4290 = vst [vmem:[%s140 + $0x158] sm:$0xff] %v3266
        %4291 = vst [vmem:[%s140 + $0x160] sm:$0xff] %v3267
        %4292 = vst [vmem:[%s140 + $0x168] sm:$0xff] %v3268
        %4293 = vst [vmem:[%s140 + $0x170] sm:$0xff] %v3269
        %4294 = vst [vmem:[%s140 + $0x178] sm:$0xff] %v3270
        %4295 = vst [vmem:[%s140 + $0x180] sm:$0xff] %v3271
        %4296 = vst [vmem:[%s140 + $0x188] sm:$0xff] %v3272
        %4297 = vst [vmem:[%s140 + $0x190] sm:$0xff] %v3273
        %4298 = vst [vmem:[%s140 + $0x198] sm:$0xff] %v3274
        %4299 = vst [vmem:[%s140 + $0x1a0] sm:$0xff] %v3275
        %4300 = vst [vmem:[%s140 + $0x1a8] sm:$0xff] %v3276
        %4301 = vst [vmem:[%s140 + $0x1b0] sm:$0xff] %v3277
        %4302 = vst [vmem:[%s140 + $0x1b8] sm:$0xff] %v3278
        %4303 = vst [vmem:[%s140 + $0x1c0] sm:$0xff] %v3279
        %4304 = vst [vmem:[%s140 + $0x1c8] sm:$0xff] %v3280
        %4305 = vst [vmem:[%s140 + $0x1d0] sm:$0xff] %v3281
        %4306 = vst [vmem:[%s140 + $0x1d8] sm:$0xff] %v3282
        %4307 = vst [vmem:[%s140 + $0x1e0] sm:$0xff] %v3283
        %4308 = vst [vmem:[%s140 + $0x1e8] sm:$0xff] %v3284
        %4309 = vst [vmem:[%s140 + $0x1f0] sm:$0xff] %v3285
        %4310 = vst [vmem:[%s140 + $0x1f8] sm:$0xff] %v3286
        %4311 = vst [vmem:[%s140 + $0x200] sm:$0xff] %v3287
        %4312 = vst [vmem:[%s140 + $0x208] sm:$0xff] %v3288
        %4313 = vst [vmem:[%s140 + $0x210] sm:$0xff] %v3289
        %4314 = vst [vmem:[%s140 + $0x218] sm:$0xff] %v3290
        %4315 = vst [vmem:[%s140 + $0x220] sm:$0xff] %v3291
        %4316 = vst [vmem:[%s140 + $0x228] sm:$0xff] %v3292
        %4317 = vst [vmem:[%s140 + $0x230] sm:$0xff] %v3293
        %4318 = vst [vmem:[%s140 + $0x238] sm:$0xff] %v3294
        %4319 = vst [vmem:[%s140 + $0x240] sm:$0xff] %v3295
        %4320 = vst [vmem:[%s140 + $0x248] sm:$0xff] %v3296
        %4321 = vst [vmem:[%s140 + $0x250] sm:$0xff] %v3297
        %4322 = vst [vmem:[%s140 + $0x258] sm:$0xff] %v3298
        %4323 = vst [vmem:[%s140 + $0x260] sm:$0xff] %v3299
        %4324 = vst [vmem:[%s140 + $0x268] sm:$0xff] %v3300
        %4325 = vst [vmem:[%s140 + $0x270] sm:$0xff] %v3301
        %4326 = vst [vmem:[%s140 + $0x278] sm:$0xff] %v3302
        %4327 = vst [vmem:[%s140 + $0x280] sm:$0xff] %v3303
        %4328 = vst [vmem:[%s140 + $0x288] sm:$0xff] %v3304
        %4329 = vst [vmem:[%s140 + $0x290] sm:$0xff] %v3305
        %4330 = vst [vmem:[%s140 + $0x298] sm:$0xff] %v3306
        %4331 = vst [vmem:[%s140 + $0x2a0] sm:$0xff] %v3307
        %4332 = vst [vmem:[%s140 + $0x2a8] sm:$0xff] %v3308
        %4333 = vst [vmem:[%s140 + $0x2b0] sm:$0xff] %v3309
        %4334 = vst [vmem:[%s140 + $0x2b8] sm:$0xff] %v3310
        %4335 = vst [vmem:[%s140 + $0x2c0] sm:$0xff] %v3311
        %4336 = vst [vmem:[%s140 + $0x2c8] sm:$0xff] %v3312
        %4337 = vst [vmem:[%s140 + $0x2d0] sm:$0xff] %v3313
        %4338 = vst [vmem:[%s140 + $0x2d8] sm:$0xff] %v3314
        %4339 = vst [vmem:[%s140 + $0x2e0] sm:$0xff] %v3315
        %4340 = vst [vmem:[%s140 + $0x2e8] sm:$0xff] %v3316
        %4341 = vst [vmem:[%s140 + $0x2f0] sm:$0xff] %v3317
        %4342 = vst [vmem:[%s140 + $0x2f8] sm:$0xff] %v3318
        %4343 = vst [vmem:[%s140 + $0x300] sm:$0xff] %v3319
        %4344 = vst [vmem:[%s140 + $0x308] sm:$0xff] %v3320
        %4345 = vst [vmem:[%s140 + $0x310] sm:$0xff] %v3321
        %4346 = vst [vmem:[%s140 + $0x318] sm:$0xff] %v3322
        %4347 = vst [vmem:[%s140 + $0x320] sm:$0xff] %v3323
        %4348 = vst [vmem:[%s140 + $0x328] sm:$0xff] %v3324
        %4349 = vst [vmem:[%s140 + $0x330] sm:$0xff] %v3325
        %4350 = vst [vmem:[%s140 + $0x338] sm:$0xff] %v3326
        %4351 = vst [vmem:[%s140 + $0x340] sm:$0xff] %v3327
        %4352 = vst [vmem:[%s140 + $0x348] sm:$0xff] %v3328
        %4353 = vst [vmem:[%s140 + $0x350] sm:$0xff] %v3329
        %4354 = vst [vmem:[%s140 + $0x358] sm:$0xff] %v3330
        %4355 = vst [vmem:[%s140 + $0x360] sm:$0xff] %v3331
        %4356 = vst [vmem:[%s140 + $0x368] sm:$0xff] %v3332
        %4357 = vst [vmem:[%s140 + $0x370] sm:$0xff] %v3333
        %4358 = vst [vmem:[%s140 + $0x378] sm:$0xff] %v3334
        %4359 = vst [vmem:[%s140 + $0x380] sm:$0xff] %v3335
        %4360 = vst [vmem:[%s140 + $0x388] sm:$0xff] %v3336
        %4361 = vst [vmem:[%s140 + $0x390] sm:$0xff] %v3337
        %4362 = vst [vmem:[%s140 + $0x398] sm:$0xff] %v3338
        %4363 = vst [vmem:[%s140 + $0x3a0] sm:$0xff] %v3339
        %4364 = vst [vmem:[%s140 + $0x3a8] sm:$0xff] %v3340
        %4365 = vst [vmem:[%s140 + $0x3b0] sm:$0xff] %v3341
        %4366 = vst [vmem:[%s140 + $0x3b8] sm:$0xff] %v3342
        %4367 = vst [vmem:[%s140 + $0x3c0] sm:$0xff] %v3343
        %4368 = vst [vmem:[%s140 + $0x3c8] sm:$0xff] %v3344
        %4369 = vst [vmem:[%s140 + $0x3d0] sm:$0xff] %v3345
        %4370 = vst [vmem:[%s140 + $0x3d8] sm:$0xff] %v3346
        %4371 = vst [vmem:[%s140 + $0x3e0] sm:$0xff] %v3347
        %4372 = vst [vmem:[%s140 + $0x3e8] sm:$0xff] %v3348
        %4373 = vst [vmem:[%s140 + $0x3f0] sm:$0xff] %v3349
        %4374 = vst [vmem:[%s140 + $0x3f8] sm:$0xff] %v3350
        %4375 = vst [vmem:[%s140 + $0x400] sm:$0xff] %v3351
        %4376 = vst [vmem:[%s140 + $0x408] sm:$0xff] %v3352
        %4377 = vst [vmem:[%s140 + $0x410] sm:$0xff] %v3353
        %4378 = vst [vmem:[%s140 + $0x418] sm:$0xff] %v3354
        %4379 = vst [vmem:[%s140 + $0x420] sm:$0xff] %v3355
        %4380 = vst [vmem:[%s140 + $0x428] sm:$0xff] %v3356
        %4381 = vst [vmem:[%s140 + $0x430] sm:$0xff] %v3357
        %4382 = vst [vmem:[%s140 + $0x438] sm:$0xff] %v3358
        %4383 = vst [vmem:[%s140 + $0x440] sm:$0xff] %v3359
        %4384 = vst [vmem:[%s140 + $0x448] sm:$0xff] %v3360
        %4385 = vst [vmem:[%s140 + $0x450] sm:$0xff] %v3361
        %4386 = vst [vmem:[%s140 + $0x458] sm:$0xff] %v3362
        %4387 = vst [vmem:[%s140 + $0x460] sm:$0xff] %v3363
        %4388 = vst [vmem:[%s140 + $0x468] sm:$0xff] %v3364
        %4389 = vst [vmem:[%s140 + $0x470] sm:$0xff] %v3365
        %4390 = vst [vmem:[%s140 + $0x478] sm:$0xff] %v3366
        %4391 = vst [vmem:[%s140 + $0x480] sm:$0xff] %v3367
        %4392 = vst [vmem:[%s140 + $0x488] sm:$0xff] %v3368
        %4393 = vst [vmem:[%s140 + $0x490] sm:$0xff] %v3369
        %4394 = vst [vmem:[%s140 + $0x498] sm:$0xff] %v3370
        %4395 = vst [vmem:[%s140 + $0x4a0] sm:$0xff] %v3371
        %4396 = vst [vmem:[%s140 + $0x4a8] sm:$0xff] %v3372
        %4397 = vst [vmem:[%s140 + $0x4b0] sm:$0xff] %v3373
        %4398 = vst [vmem:[%s140 + $0x4b8] sm:$0xff] %v3374
        %4399 = vst [vmem:[%s140 + $0x4c0] sm:$0xff] %v3375
        %4400 = vst [vmem:[%s140 + $0x4c8] sm:$0xff] %v3376
        %4401 = vst [vmem:[%s140 + $0x4d0] sm:$0xff] %v3377
        %4402 = vst [vmem:[%s140 + $0x4d8] sm:$0xff] %v3378
        %4403 = vst [vmem:[%s140 + $0x4e0] sm:$0xff] %v3379
        %4404 = vst [vmem:[%s140 + $0x4e8] sm:$0xff] %v3380
        %4405 = vst [vmem:[%s140 + $0x4f0] sm:$0xff] %v3381
        %4406 = vst [vmem:[%s140 + $0x4f8] sm:$0xff] %v3382
        %4407 = vst [vmem:[%s140 + $0x500] sm:$0xff] %v3383
        %4408 = vst [vmem:[%s140 + $0x508] sm:$0xff] %v3384
        %4409 = vst [vmem:[%s140 + $0x510] sm:$0xff] %v3385
        %4410 = vst [vmem:[%s140 + $0x518] sm:$0xff] %v3386
        %4411 = vst [vmem:[%s140 + $0x520] sm:$0xff] %v3387
        %4412 = vst [vmem:[%s140 + $0x528] sm:$0xff] %v3388
        %4413 = vst [vmem:[%s140 + $0x530] sm:$0xff] %v3389
        %4414 = vst [vmem:[%s140 + $0x538] sm:$0xff] %v3390
        %4415 = vst [vmem:[%s140 + $0x540] sm:$0xff] %v3391
        %4416 = vst [vmem:[%s140 + $0x548] sm:$0xff] %v3392
        %4417 = vst [vmem:[%s140 + $0x550] sm:$0xff] %v3393
        %4418 = vst [vmem:[%s140 + $0x558] sm:$0xff] %v3394
        %4419 = vst [vmem:[%s140 + $0x560] sm:$0xff] %v3395
        %4420 = vst [vmem:[%s140 + $0x568] sm:$0xff] %v3396
        %4421 = vst [vmem:[%s140 + $0x570] sm:$0xff] %v3397
        %4422 = vst [vmem:[%s140 + $0x578] sm:$0xff] %v3398
        %4423 = vst [vmem:[%s140 + $0x580] sm:$0xff] %v3399
        %4424 = vst [vmem:[%s140 + $0x588] sm:$0xff] %v3400
        %4425 = vst [vmem:[%s140 + $0x590] sm:$0xff] %v3401
        %4426 = vst [vmem:[%s140 + $0x598] sm:$0xff] %v3402
        %4427 = vst [vmem:[%s140 + $0x5a0] sm:$0xff] %v3403
        %4428 = vst [vmem:[%s140 + $0x5a8] sm:$0xff] %v3404
        %4429 = vst [vmem:[%s140 + $0x5b0] sm:$0xff] %v3405
        %4430 = vst [vmem:[%s140 + $0x5b8] sm:$0xff] %v3406
        %4431 = vst [vmem:[%s140 + $0x5c0] sm:$0xff] %v3407
        %4432 = vst [vmem:[%s140 + $0x5c8] sm:$0xff] %v3408
        %4433 = vst [vmem:[%s140 + $0x5d0] sm:$0xff] %v3409
        %4434 = vst [vmem:[%s140 + $0x5d8] sm:$0xff] %v3410
        %4435 = vst [vmem:[%s140 + $0x5e0] sm:$0xff] %v3411
        %4436 = vst [vmem:[%s140 + $0x5e8] sm:$0xff] %v3412
        %4437 = vst [vmem:[%s140 + $0x5f0] sm:$0xff] %v3413
        %4438 = vst [vmem:[%s140 + $0x5f8] sm:$0xff] %v3414
        %4439 = vst [vmem:[%s140 + $0x600] sm:$0xff] %v3415
        %4440 = vst [vmem:[%s140 + $0x608] sm:$0xff] %v3416
        %4441 = vst [vmem:[%s140 + $0x610] sm:$0xff] %v3417
        %4442 = vst [vmem:[%s140 + $0x618] sm:$0xff] %v3418
        %4443 = vst [vmem:[%s140 + $0x620] sm:$0xff] %v3419
        %4444 = vst [vmem:[%s140 + $0x628] sm:$0xff] %v3420
        %4445 = vst [vmem:[%s140 + $0x630] sm:$0xff] %v3421
        %4446 = vst [vmem:[%s140 + $0x638] sm:$0xff] %v3422
        %4447 = vst [vmem:[%s140 + $0x640] sm:$0xff] %v3423
        %4448 = vst [vmem:[%s140 + $0x648] sm:$0xff] %v3424
        %4449 = vst [vmem:[%s140 + $0x650] sm:$0xff] %v3425
        %4450 = vst [vmem:[%s140 + $0x658] sm:$0xff] %v3426
        %4451 = vst [vmem:[%s140 + $0x660] sm:$0xff] %v3427
        %4452 = vst [vmem:[%s140 + $0x668] sm:$0xff] %v3428
        %4453 = vst [vmem:[%s140 + $0x670] sm:$0xff] %v3429
        %4454 = vst [vmem:[%s140 + $0x678] sm:$0xff] %v3430
        %4455 = vst [vmem:[%s140 + $0x680] sm:$0xff] %v3431
        %4456 = vst [vmem:[%s140 + $0x688] sm:$0xff] %v3432
        %4457 = vst [vmem:[%s140 + $0x690] sm:$0xff] %v3433
        %4458 = vst [vmem:[%s140 + $0x698] sm:$0xff] %v3434
        %4459 = vst [vmem:[%s140 + $0x6a0] sm:$0xff] %v3435
        %4460 = vst [vmem:[%s140 + $0x6a8] sm:$0xff] %v3436
        %4461 = vst [vmem:[%s140 + $0x6b0] sm:$0xff] %v3437
        %4462 = vst [vmem:[%s140 + $0x6b8] sm:$0xff] %v3438
        %4463 = vst [vmem:[%s140 + $0x6c0] sm:$0xff] %v3439
        %4464 = vst [vmem:[%s140 + $0x6c8] sm:$0xff] %v3440
        %4465 = vst [vmem:[%s140 + $0x6d0] sm:$0xff] %v3441
        %4466 = vst [vmem:[%s140 + $0x6d8] sm:$0xff] %v3442
        %4467 = vst [vmem:[%s140 + $0x6e0] sm:$0xff] %v3443
        %4468 = vst [vmem:[%s140 + $0x6e8] sm:$0xff] %v3444
        %4469 = vst [vmem:[%s140 + $0x6f0] sm:$0xff] %v3445
        %4470 = vst [vmem:[%s140 + $0x6f8] sm:$0xff] %v3446
        %4471 = vst [vmem:[%s140 + $0x700] sm:$0xff] %v3447
        %4472 = vst [vmem:[%s140 + $0x708] sm:$0xff] %v3448
        %4473 = vst [vmem:[%s140 + $0x710] sm:$0xff] %v3449
        %4474 = vst [vmem:[%s140 + $0x718] sm:$0xff] %v3450
        %4475 = vst [vmem:[%s140 + $0x720] sm:$0xff] %v3451
        %4476 = vst [vmem:[%s140 + $0x728] sm:$0xff] %v3452
        %4477 = vst [vmem:[%s140 + $0x730] sm:$0xff] %v3453
        %4478 = vst [vmem:[%s140 + $0x738] sm:$0xff] %v3454
        %4479 = vst [vmem:[%s140 + $0x740] sm:$0xff] %v3455
        %4480 = vst [vmem:[%s140 + $0x748] sm:$0xff] %v3456
        %4481 = vst [vmem:[%s140 + $0x750] sm:$0xff] %v3457
        %4482 = vst [vmem:[%s140 + $0x758] sm:$0xff] %v3458
        %4483 = vst [vmem:[%s140 + $0x760] sm:$0xff] %v3459
        %4484 = vst [vmem:[%s140 + $0x768] sm:$0xff] %v3460
        %4485 = vst [vmem:[%s140 + $0x770] sm:$0xff] %v3461
        %4486 = vst [vmem:[%s140 + $0x778] sm:$0xff] %v3462
        %4487 = vst [vmem:[%s140 + $0x780] sm:$0xff] %v3463
        %4488 = vst [vmem:[%s140 + $0x788] sm:$0xff] %v3464
        %4489 = vst [vmem:[%s140 + $0x790] sm:$0xff] %v3465
        %4490 = vst [vmem:[%s140 + $0x798] sm:$0xff] %v3466
        %4491 = vst [vmem:[%s140 + $0x7a0] sm:$0xff] %v3467
        %4492 = vst [vmem:[%s140 + $0x7a8] sm:$0xff] %v3468
        %4493 = vst [vmem:[%s140 + $0x7b0] sm:$0xff] %v3469
        %4494 = vst [vmem:[%s140 + $0x7b8] sm:$0xff] %v3470
        %4495 = vst [vmem:[%s140 + $0x7c0] sm:$0xff] %v3471
        %4496 = vst [vmem:[%s140 + $0x7c8] sm:$0xff] %v3472
        %4497 = vst [vmem:[%s140 + $0x7d0] sm:$0xff] %v3473
        %4498 = vst [vmem:[%s140 + $0x7d8] sm:$0xff] %v3474
        %4499 = vst [vmem:[%s140 + $0x7e0] sm:$0xff] %v3475
        %4500 = vst [vmem:[%s140 + $0x7e8] sm:$0xff] %v3476
        %4501 = vst [vmem:[%s140 + $0x7f0] sm:$0xff] %v3477
        %4502 = vst [vmem:[%s140 + $0x7f8] sm:$0xff] %v3478
        %4503 = vst [vmem:[%s140 + $0x800] sm:$0xff] %v3479
        %4504 = vst [vmem:[%s140 + $0x808] sm:$0xff] %v3480
        %4505 = vst [vmem:[%s140 + $0x810] sm:$0xff] %v3481
        %4506 = vst [vmem:[%s140 + $0x818] sm:$0xff] %v3482
        %4507 = vst [vmem:[%s140 + $0x820] sm:$0xff] %v3483
        %4508 = vst [vmem:[%s140 + $0x828] sm:$0xff] %v3484
        %4509 = vst [vmem:[%s140 + $0x830] sm:$0xff] %v3485
        %4510 = vst [vmem:[%s140 + $0x838] sm:$0xff] %v3486
        %4511 = vst [vmem:[%s140 + $0x840] sm:$0xff] %v3487
        %4512 = vst [vmem:[%s140 + $0x848] sm:$0xff] %v3488
        %4513 = vst [vmem:[%s140 + $0x850] sm:$0xff] %v3489
        %4514 = vst [vmem:[%s140 + $0x858] sm:$0xff] %v3490
        %4515 = vst [vmem:[%s140 + $0x860] sm:$0xff] %v3491
        %4516 = vst [vmem:[%s140 + $0x868] sm:$0xff] %v3492
        %4517 = vst [vmem:[%s140 + $0x870] sm:$0xff] %v3493
        %4518 = vst [vmem:[%s140 + $0x878] sm:$0xff] %v3494
        %4519 = vst [vmem:[%s140 + $0x880] sm:$0xff] %v3495
        %4520 = vst [vmem:[%s140 + $0x888] sm:$0xff] %v3496
        %4521 = vst [vmem:[%s140 + $0x890] sm:$0xff] %v3497
        %4522 = vst [vmem:[%s140 + $0x898] sm:$0xff] %v3498
        %4523 = vst [vmem:[%s140 + $0x8a0] sm:$0xff] %v3499
        %4524 = vst [vmem:[%s140 + $0x8a8] sm:$0xff] %v3500
        %4525 = vst [vmem:[%s140 + $0x8b0] sm:$0xff] %v3501
        %4526 = vst [vmem:[%s140 + $0x8b8] sm:$0xff] %v3502
        %4527 = vst [vmem:[%s140 + $0x8c0] sm:$0xff] %v3503
        %4528 = vst [vmem:[%s140 + $0x8c8] sm:$0xff] %v3504
        %4529 = vst [vmem:[%s140 + $0x8d0] sm:$0xff] %v3505
        %4530 = vst [vmem:[%s140 + $0x8d8] sm:$0xff] %v3506
        %4531 = vst [vmem:[%s140 + $0x8e0] sm:$0xff] %v3507
        %4532 = vst [vmem:[%s140 + $0x8e8] sm:$0xff] %v3508
        %4533 = vst [vmem:[%s140 + $0x8f0] sm:$0xff] %v3509
        %4534 = vst [vmem:[%s140 + $0x8f8] sm:$0xff] %v3510
        %4535 = vst [vmem:[%s140 + $0x900] sm:$0xff] %v3511
        %4536 = vst [vmem:[%s140 + $0x908] sm:$0xff] %v3512
        %4537 = vst [vmem:[%s140 + $0x910] sm:$0xff] %v3513
        %4538 = vst [vmem:[%s140 + $0x918] sm:$0xff] %v3514
        %4539 = vst [vmem:[%s140 + $0x920] sm:$0xff] %v3515
        %4540 = vst [vmem:[%s140 + $0x928] sm:$0xff] %v3516
        %4541 = vst [vmem:[%s140 + $0x930] sm:$0xff] %v3517
        %4542 = vst [vmem:[%s140 + $0x938] sm:$0xff] %v3518
        %4543 = vst [vmem:[%s140 + $0x940] sm:$0xff] %v3519
        %4544 = vst [vmem:[%s140 + $0x948] sm:$0xff] %v3520
        %4545 = vst [vmem:[%s140 + $0x950] sm:$0xff] %v3521
        %4546 = vst [vmem:[%s140 + $0x958] sm:$0xff] %v3522
        %4547 = vst [vmem:[%s140 + $0x960] sm:$0xff] %v3523
        %4548 = vst [vmem:[%s140 + $0x968] sm:$0xff] %v3524
        %4549 = vst [vmem:[%s140 + $0x970] sm:$0xff] %v3525
        %4550 = vst [vmem:[%s140 + $0x978] sm:$0xff] %v3526
        %4551 = vst [vmem:[%s140 + $0x980] sm:$0xff] %v3527
        %4552 = vst [vmem:[%s140 + $0x988] sm:$0xff] %v3528
        %4553 = vst [vmem:[%s140 + $0x990] sm:$0xff] %v3529
        %4554 = vst [vmem:[%s140 + $0x998] sm:$0xff] %v3530
        %4555 = vst [vmem:[%s140 + $0x9a0] sm:$0xff] %v3531
        %4556 = vst [vmem:[%s140 + $0x9a8] sm:$0xff] %v3532
        %4557 = vst [vmem:[%s140 + $0x9b0] sm:$0xff] %v3533
        %4558 = vst [vmem:[%s140 + $0x9b8] sm:$0xff] %v3534
        %4559 = vst [vmem:[%s140 + $0x9c0] sm:$0xff] %v3535
        %4560 = vst [vmem:[%s140 + $0x9c8] sm:$0xff] %v3536
        %4561 = vst [vmem:[%s140 + $0x9d0] sm:$0xff] %v3537
        %4562 = vst [vmem:[%s140 + $0x9d8] sm:$0xff] %v3538
        %4563 = vst [vmem:[%s140 + $0x9e0] sm:$0xff] %v3539
        %4564 = vst [vmem:[%s140 + $0x9e8] sm:$0xff] %v3540
        %4565 = vst [vmem:[%s140 + $0x9f0] sm:$0xff] %v3541
        %4566 = vst [vmem:[%s140 + $0x9f8] sm:$0xff] %v3542
        %4567 = vst [vmem:[%s140 + $0xa00] sm:$0xff] %v3543
        %4568 = vst [vmem:[%s140 + $0xa08] sm:$0xff] %v3544
        %4569 = vst [vmem:[%s140 + $0xa10] sm:$0xff] %v3545
        %4570 = vst [vmem:[%s140 + $0xa18] sm:$0xff] %v3546
        %4571 = vst [vmem:[%s140 + $0xa20] sm:$0xff] %v3547
        %4572 = vst [vmem:[%s140 + $0xa28] sm:$0xff] %v3548
        %4573 = vst [vmem:[%s140 + $0xa30] sm:$0xff] %v3549
        %4574 = vst [vmem:[%s140 + $0xa38] sm:$0xff] %v3550
        %4575 = vst [vmem:[%s140 + $0xa40] sm:$0xff] %v3551
        %4576 = vst [vmem:[%s140 + $0xa48] sm:$0xff] %v3552
        %4577 = vst [vmem:[%s140 + $0xa50] sm:$0xff] %v3553
        %4578 = vst [vmem:[%s140 + $0xa58] sm:$0xff] %v3554
        %4579 = vst [vmem:[%s140 + $0xa60] sm:$0xff] %v3555
        %4580 = vst [vmem:[%s140 + $0xa68] sm:$0xff] %v3556
        %4581 = vst [vmem:[%s140 + $0xa70] sm:$0xff] %v3557
        %4582 = vst [vmem:[%s140 + $0xa78] sm:$0xff] %v3558
        %4583 = vst [vmem:[%s140 + $0xa80] sm:$0xff] %v3559
        %4584 = vst [vmem:[%s140 + $0xa88] sm:$0xff] %v3560
        %4585 = vst [vmem:[%s140 + $0xa90] sm:$0xff] %v3561
        %4586 = vst [vmem:[%s140 + $0xa98] sm:$0xff] %v3562
        %4587 = vst [vmem:[%s140 + $0xaa0] sm:$0xff] %v3563
        %4588 = vst [vmem:[%s140 + $0xaa8] sm:$0xff] %v3564
        %4589 = vst [vmem:[%s140 + $0xab0] sm:$0xff] %v3565
        %4590 = vst [vmem:[%s140 + $0xab8] sm:$0xff] %v3566
        %4591 = vst [vmem:[%s140 + $0xac0] sm:$0xff] %v3567
        %4592 = vst [vmem:[%s140 + $0xac8] sm:$0xff] %v3568
        %4593 = vst [vmem:[%s140 + $0xad0] sm:$0xff] %v3569
        %4594 = vst [vmem:[%s140 + $0xad8] sm:$0xff] %v3570
        %4595 = vst [vmem:[%s140 + $0xae0] sm:$0xff] %v3571
        %4596 = vst [vmem:[%s140 + $0xae8] sm:$0xff] %v3572
        %4597 = vst [vmem:[%s140 + $0xaf0] sm:$0xff] %v3573
        %4598 = vst [vmem:[%s140 + $0xaf8] sm:$0xff] %v3574
        %4599 = vst [vmem:[%s140 + $0xb00] sm:$0xff] %v3575
        %4600 = vst [vmem:[%s140 + $0xb08] sm:$0xff] %v3576
        %4601 = vst [vmem:[%s140 + $0xb10] sm:$0xff] %v3577
        %4602 = vst [vmem:[%s140 + $0xb18] sm:$0xff] %v3578
        %4603 = vst [vmem:[%s140 + $0xb20] sm:$0xff] %v3579
        %4604 = vst [vmem:[%s140 + $0xb28] sm:$0xff] %v3580
        %4605 = vst [vmem:[%s140 + $0xb30] sm:$0xff] %v3581
        %4606 = vst [vmem:[%s140 + $0xb38] sm:$0xff] %v3582
        %4607 = vst [vmem:[%s140 + $0xb40] sm:$0xff] %v3583
        %4608 = vst [vmem:[%s140 + $0xb48] sm:$0xff] %v3584
        %4609 = vst [vmem:[%s140 + $0xb50] sm:$0xff] %v3585
        %4610 = vst [vmem:[%s140 + $0xb58] sm:$0xff] %v3586
        %4611 = vst [vmem:[%s140 + $0xb60] sm:$0xff] %v3587
        %4612 = vst [vmem:[%s140 + $0xb68] sm:$0xff] %v3588
        %4613 = vst [vmem:[%s140 + $0xb70] sm:$0xff] %v3589
        %4614 = vst [vmem:[%s140 + $0xb78] sm:$0xff] %v3590
        %4615 = vst [vmem:[%s140 + $0xb80] sm:$0xff] %v3591
        %4616 = vst [vmem:[%s140 + $0xb88] sm:$0xff] %v3592
        %4617 = vst [vmem:[%s140 + $0xb90] sm:$0xff] %v3593
        %4618 = vst [vmem:[%s140 + $0xb98] sm:$0xff] %v3594
        %4619 = vst [vmem:[%s140 + $0xba0] sm:$0xff] %v3595
        %4620 = vst [vmem:[%s140 + $0xba8] sm:$0xff] %v3596
        %4621 = vst [vmem:[%s140 + $0xbb0] sm:$0xff] %v3597
        %4622 = vst [vmem:[%s140 + $0xbb8] sm:$0xff] %v3598
        %4623 = vst [vmem:[%s140 + $0xbc0] sm:$0xff] %v3599
        %4624 = vst [vmem:[%s140 + $0xbc8] sm:$0xff] %v3600
        %4625 = vst [vmem:[%s140 + $0xbd0] sm:$0xff] %v3601
        %4626 = vst [vmem:[%s140 + $0xbd8] sm:$0xff] %v3602
        %4627 = vst [vmem:[%s140 + $0xbe0] sm:$0xff] %v3603
        %4628 = vst [vmem:[%s140 + $0xbe8] sm:$0xff] %v3604
        %4629 = vst [vmem:[%s140 + $0xbf0] sm:$0xff] %v3605
        %4630 = vst [vmem:[%s140 + $0xbf8] sm:$0xff] %v3606
        %4631 = vst [vmem:[%s140 + $0xc00] sm:$0xff] %v3607
        %4632 = vst [vmem:[%s140 + $0xc08] sm:$0xff] %v3608
        %4633 = vst [vmem:[%s140 + $0xc10] sm:$0xff] %v3609
        %4634 = vst [vmem:[%s140 + $0xc18] sm:$0xff] %v3610
        %4635 = vst [vmem:[%s140 + $0xc20] sm:$0xff] %v3611
        %4636 = vst [vmem:[%s140 + $0xc28] sm:$0xff] %v3612
        %4637 = vst [vmem:[%s140 + $0xc30] sm:$0xff] %v3613
        %4638 = vst [vmem:[%s140 + $0xc38] sm:$0xff] %v3614
        %4639 = vst [vmem:[%s140 + $0xc40] sm:$0xff] %v3615
        %4640 = vst [vmem:[%s140 + $0xc48] sm:$0xff] %v3616
        %4641 = vst [vmem:[%s140 + $0xc50] sm:$0xff] %v3617
        %4642 = vst [vmem:[%s140 + $0xc58] sm:$0xff] %v3618
        %4643 = vst [vmem:[%s140 + $0xc60] sm:$0xff] %v3619
        %4644 = vst [vmem:[%s140 + $0xc68] sm:$0xff] %v3620
        %4645 = vst [vmem:[%s140 + $0xc70] sm:$0xff] %v3621
        %4646 = vst [vmem:[%s140 + $0xc78] sm:$0xff] %v3622
        %4647 = vst [vmem:[%s140 + $0xc80] sm:$0xff] %v3623
        %4648 = vst [vmem:[%s140 + $0xc88] sm:$0xff] %v3624
        %4649 = vst [vmem:[%s140 + $0xc90] sm:$0xff] %v3625
        %4650 = vst [vmem:[%s140 + $0xc98] sm:$0xff] %v3626
        %4651 = vst [vmem:[%s140 + $0xca0] sm:$0xff] %v3627
        %4652 = vst [vmem:[%s140 + $0xca8] sm:$0xff] %v3628
        %4653 = vst [vmem:[%s140 + $0xcb0] sm:$0xff] %v3629
        %4654 = vst [vmem:[%s140 + $0xcb8] sm:$0xff] %v3630
        %4655 = vst [vmem:[%s140 + $0xcc0] sm:$0xff] %v3631
        %4656 = vst [vmem:[%s140 + $0xcc8] sm:$0xff] %v3632
        %4657 = vst [vmem:[%s140 + $0xcd0] sm:$0xff] %v3633
        %4658 = vst [vmem:[%s140 + $0xcd8] sm:$0xff] %v3634
        %4659 = vst [vmem:[%s140 + $0xce0] sm:$0xff] %v3635
        %4660 = vst [vmem:[%s140 + $0xce8] sm:$0xff] %v3636
        %4661 = vst [vmem:[%s140 + $0xcf0] sm:$0xff] %v3637
        %4662 = vst [vmem:[%s140 + $0xcf8] sm:$0xff] %v3638
        %4663 = vst [vmem:[%s140 + $0xd00] sm:$0xff] %v3639
        %4664 = vst [vmem:[%s140 + $0xd08] sm:$0xff] %v3640
        %4665 = vst [vmem:[%s140 + $0xd10] sm:$0xff] %v3641
        %4666 = vst [vmem:[%s140 + $0xd18] sm:$0xff] %v3642
        %4667 = vst [vmem:[%s140 + $0xd20] sm:$0xff] %v3643
        %4668 = vst [vmem:[%s140 + $0xd28] sm:$0xff] %v3644
        %4669 = vst [vmem:[%s140 + $0xd30] sm:$0xff] %v3645
        %4670 = vst [vmem:[%s140 + $0xd38] sm:$0xff] %v3646
        %4671 = vst [vmem:[%s140 + $0xd40] sm:$0xff] %v3647
        %4672 = vst [vmem:[%s140 + $0xd48] sm:$0xff] %v3648
        %4673 = vst [vmem:[%s140 + $0xd50] sm:$0xff] %v3649
        %4674 = vst [vmem:[%s140 + $0xd58] sm:$0xff] %v3650
        %4675 = vst [vmem:[%s140 + $0xd60] sm:$0xff] %v3651
        %4676 = vst [vmem:[%s140 + $0xd68] sm:$0xff] %v3652
        %4677 = vst [vmem:[%s140 + $0xd70] sm:$0xff] %v3653
        %4678 = vst [vmem:[%s140 + $0xd78] sm:$0xff] %v3654
        %4679 = vst [vmem:[%s140 + $0xd80] sm:$0xff] %v3655
        %4680 = vst [vmem:[%s140 + $0xd88] sm:$0xff] %v3656
        %4681 = vst [vmem:[%s140 + $0xd90] sm:$0xff] %v3657
        %4682 = vst [vmem:[%s140 + $0xd98] sm:$0xff] %v3658
        %4683 = vst [vmem:[%s140 + $0xda0] sm:$0xff] %v3659
        %4684 = vst [vmem:[%s140 + $0xda8] sm:$0xff] %v3660
        %4685 = vst [vmem:[%s140 + $0xdb0] sm:$0xff] %v3661
        %4686 = vst [vmem:[%s140 + $0xdb8] sm:$0xff] %v3662
        %4687 = vst [vmem:[%s140 + $0xdc0] sm:$0xff] %v3663
        %4688 = vst [vmem:[%s140 + $0xdc8] sm:$0xff] %v3664
        %4689 = vst [vmem:[%s140 + $0xdd0] sm:$0xff] %v3665
        %4690 = vst [vmem:[%s140 + $0xdd8] sm:$0xff] %v3666
        %4691 = vst [vmem:[%s140 + $0xde0] sm:$0xff] %v3667
        %4692 = vst [vmem:[%s140 + $0xde8] sm:$0xff] %v3668
        %4693 = vst [vmem:[%s140 + $0xdf0] sm:$0xff] %v3669
        %4694 = vst [vmem:[%s140 + $0xdf8] sm:$0xff] %v3670
        %4695 = vst [vmem:[%s140 + $0xe00] sm:$0xff] %v3671
        %4696 = vst [vmem:[%s140 + $0xe08] sm:$0xff] %v3672
        %4697 = vst [vmem:[%s140 + $0xe10] sm:$0xff] %v3673
        %4698 = vst [vmem:[%s140 + $0xe18] sm:$0xff] %v3674
        %4699 = vst [vmem:[%s140 + $0xe20] sm:$0xff] %v3675
        %4700 = vst [vmem:[%s140 + $0xe28] sm:$0xff] %v3676
        %4701 = vst [vmem:[%s140 + $0xe30] sm:$0xff] %v3677
        %4702 = vst [vmem:[%s140 + $0xe38] sm:$0xff] %v3678
        %4703 = vst [vmem:[%s140 + $0xe40] sm:$0xff] %v3679
        %4704 = vst [vmem:[%s140 + $0xe48] sm:$0xff] %v3680
        %4705 = vst [vmem:[%s140 + $0xe50] sm:$0xff] %v3681
        %4706 = vst [vmem:[%s140 + $0xe58] sm:$0xff] %v3682
        %4707 = vst [vmem:[%s140 + $0xe60] sm:$0xff] %v3683
        %4708 = vst [vmem:[%s140 + $0xe68] sm:$0xff] %v3684
        %4709 = vst [vmem:[%s140 + $0xe70] sm:$0xff] %v3685
        %4710 = vst [vmem:[%s140 + $0xe78] sm:$0xff] %v3686
        %4711 = vst [vmem:[%s140 + $0xe80] sm:$0xff] %v3687
        %4712 = vst [vmem:[%s140 + $0xe88] sm:$0xff] %v3688
        %4713 = vst [vmem:[%s140 + $0xe90] sm:$0xff] %v3689
        %4714 = vst [vmem:[%s140 + $0xe98] sm:$0xff] %v3690
        %4715 = vst [vmem:[%s140 + $0xea0] sm:$0xff] %v3691
        %4716 = vst [vmem:[%s140 + $0xea8] sm:$0xff] %v3692
        %4717 = vst [vmem:[%s140 + $0xeb0] sm:$0xff] %v3693
        %4718 = vst [vmem:[%s140 + $0xeb8] sm:$0xff] %v3694
        %4719 = vst [vmem:[%s140 + $0xec0] sm:$0xff] %v3695
        %4720 = vst [vmem:[%s140 + $0xec8] sm:$0xff] %v3696
        %4721 = vst [vmem:[%s140 + $0xed0] sm:$0xff] %v3697
        %4722 = vst [vmem:[%s140 + $0xed8] sm:$0xff] %v3698
        %4723 = vst [vmem:[%s140 + $0xee0] sm:$0xff] %v3699
        %4724 = vst [vmem:[%s140 + $0xee8] sm:$0xff] %v3700
        %4725 = vst [vmem:[%s140 + $0xef0] sm:$0xff] %v3701
        %4726 = vst [vmem:[%s140 + $0xef8] sm:$0xff] %v3702
        %4727 = vst [vmem:[%s140 + $0xf00] sm:$0xff] %v3703
        %4728 = vst [vmem:[%s140 + $0xf08] sm:$0xff] %v3704
        %4729 = vst [vmem:[%s140 + $0xf10] sm:$0xff] %v3705
        %4730 = vst [vmem:[%s140 + $0xf18] sm:$0xff] %v3706
        %4731 = vst [vmem:[%s140 + $0xf20] sm:$0xff] %v3707
        %4732 = vst [vmem:[%s140 + $0xf28] sm:$0xff] %v3708
        %4733 = vst [vmem:[%s140 + $0xf30] sm:$0xff] %v3709
        %4734 = vst [vmem:[%s140 + $0xf38] sm:$0xff] %v3710
        %4735 = vst [vmem:[%s140 + $0xf40] sm:$0xff] %v3711
        %4736 = vst [vmem:[%s140 + $0xf48] sm:$0xff] %v3712
        %4737 = vst [vmem:[%s140 + $0xf50] sm:$0xff] %v3713
        %4738 = vst [vmem:[%s140 + $0xf58] sm:$0xff] %v3714
        %4739 = vst [vmem:[%s140 + $0xf60] sm:$0xff] %v3715
        %4740 = vst [vmem:[%s140 + $0xf68] sm:$0xff] %v3716
        %4741 = vst [vmem:[%s140 + $0xf70] sm:$0xff] %v3717
        %4742 = vst [vmem:[%s140 + $0xf78] sm:$0xff] %v3718
        %4743 = vst [vmem:[%s140 + $0xf80] sm:$0xff] %v3719
        %4744 = vst [vmem:[%s140 + $0xf88] sm:$0xff] %v3720
        %4745 = vst [vmem:[%s140 + $0xf90] sm:$0xff] %v3721
        %4746 = vst [vmem:[%s140 + $0xf98] sm:$0xff] %v3722
        %4747 = vst [vmem:[%s140 + $0xfa0] sm:$0xff] %v3723
        %4748 = vst [vmem:[%s140 + $0xfa8] sm:$0xff] %v3724
        %4749 = vst [vmem:[%s140 + $0xfb0] sm:$0xff] %v3725
        %4750 = vst [vmem:[%s140 + $0xfb8] sm:$0xff] %v3726
        %4751 = vst [vmem:[%s140 + $0xfc0] sm:$0xff] %v3727
        %4752 = vst [vmem:[%s140 + $0xfc8] sm:$0xff] %v3728
        %4753 = vst [vmem:[%s140 + $0xfd0] sm:$0xff] %v3729
        %4754 = vst [vmem:[%s140 + $0xfd8] sm:$0xff] %v3730
        %4755 = vst [vmem:[%s140 + $0xfe0] sm:$0xff] %v3731
        %4756 = vst [vmem:[%s140 + $0xfe8] sm:$0xff] %v3732
        %4757 = vst [vmem:[%s140 + $0xff0] sm:$0xff] %v3733
        %4758 = vst [vmem:[%s140 + $0xff8] sm:$0xff] %v3734
        %4759 = vst [vmem:[%s140 + $0x1000] sm:$0xff] %v3735
        %4760 = vst [vmem:[%s140 + $0x1008] sm:$0xff] %v3736
        %4761 = vst [vmem:[%s140 + $0x1010] sm:$0xff] %v3737
        %4762 = vst [vmem:[%s140 + $0x1018] sm:$0xff] %v3738
        %4763 = vst [vmem:[%s140 + $0x1020] sm:$0xff] %v3739
        %4764 = vst [vmem:[%s140 + $0x1028] sm:$0xff] %v3740
        %4765 = vst [vmem:[%s140 + $0x1030] sm:$0xff] %v3741
        %4766 = vst [vmem:[%s140 + $0x1038] sm:$0xff] %v3742
        %4767 = vst [vmem:[%s140 + $0x1040] sm:$0xff] %v3743
        %4768 = vst [vmem:[%s140 + $0x1048] sm:$0xff] %v3744
        %4769 = vst [vmem:[%s140 + $0x1050] sm:$0xff] %v3745
        %4770 = vst [vmem:[%s140 + $0x1058] sm:$0xff] %v3746
        %4771 = vst [vmem:[%s140 + $0x1060] sm:$0xff] %v3747
        %4772 = vst [vmem:[%s140 + $0x1068] sm:$0xff] %v3748
        %4773 = vst [vmem:[%s140 + $0x1070] sm:$0xff] %v3749
        %4774 = vst [vmem:[%s140 + $0x1078] sm:$0xff] %v3750
        %4775 = vst [vmem:[%s140 + $0x1080] sm:$0xff] %v3751
        %4776 = vst [vmem:[%s140 + $0x1088] sm:$0xff] %v3752
        %4777 = vst [vmem:[%s140 + $0x1090] sm:$0xff] %v3753
        %4778 = vst [vmem:[%s140 + $0x1098] sm:$0xff] %v3754
        %4779 = vst [vmem:[%s140 + $0x10a0] sm:$0xff] %v3755
        %4780 = vst [vmem:[%s140 + $0x10a8] sm:$0xff] %v3756
        %4781 = vst [vmem:[%s140 + $0x10b0] sm:$0xff] %v3757
        %4782 = vst [vmem:[%s140 + $0x10b8] sm:$0xff] %v3758
        %4783 = vst [vmem:[%s140 + $0x10c0] sm:$0xff] %v3759
        %4784 = vst [vmem:[%s140 + $0x10c8] sm:$0xff] %v3760
        %4785 = vst [vmem:[%s140 + $0x10d0] sm:$0xff] %v3761
        %4786 = vst [vmem:[%s140 + $0x10d8] sm:$0xff] %v3762
        %4787 = vst [vmem:[%s140 + $0x10e0] sm:$0xff] %v3763
        %4788 = vst [vmem:[%s140 + $0x10e8] sm:$0xff] %v3764
        %4789 = vst [vmem:[%s140 + $0x10f0] sm:$0xff] %v3765
        %4790 = vst [vmem:[%s140 + $0x10f8] sm:$0xff] %v3766
        %4791 = vst [vmem:[%s140 + $0x1100] sm:$0xff] %v3767
        %4792 = vst [vmem:[%s140 + $0x1108] sm:$0xff] %v3768
        %4793 = vst [vmem:[%s140 + $0x1110] sm:$0xff] %v3769
        %4794 = vst [vmem:[%s140 + $0x1118] sm:$0xff] %v3770
        %4795 = vst [vmem:[%s140 + $0x1120] sm:$0xff] %v3771
        %4796 = vst [vmem:[%s140 + $0x1128] sm:$0xff] %v3772
        %4797 = vst [vmem:[%s140 + $0x1130] sm:$0xff] %v3773
        %4798 = vst [vmem:[%s140 + $0x1138] sm:$0xff] %v3774
        %4799 = vst [vmem:[%s140 + $0x1140] sm:$0xff] %v3775
        %4800 = vst [vmem:[%s140 + $0x1148] sm:$0xff] %v3776
        %4801 = vst [vmem:[%s140 + $0x1150] sm:$0xff] %v3777
        %4802 = vst [vmem:[%s140 + $0x1158] sm:$0xff] %v3778
        %4803 = vst [vmem:[%s140 + $0x1160] sm:$0xff] %v3779
        %4804 = vst [vmem:[%s140 + $0x1168] sm:$0xff] %v3780
        %4805 = vst [vmem:[%s140 + $0x1170] sm:$0xff] %v3781
        %4806 = vst [vmem:[%s140 + $0x1178] sm:$0xff] %v3782
        %4807 = vst [vmem:[%s140 + $0x1180] sm:$0xff] %v3783
        %4808 = vst [vmem:[%s140 + $0x1188] sm:$0xff] %v3784
        %4809 = vst [vmem:[%s140 + $0x1190] sm:$0xff] %v3785
        %4810 = vst [vmem:[%s140 + $0x1198] sm:$0xff] %v3786
        %4811 = vst [vmem:[%s140 + $0x11a0] sm:$0xff] %v3787
        %4812 = vst [vmem:[%s140 + $0x11a8] sm:$0xff] %v3788
        %4813 = vst [vmem:[%s140 + $0x11b0] sm:$0xff] %v3789
        %4814 = vst [vmem:[%s140 + $0x11b8] sm:$0xff] %v3790
        %4815 = vst [vmem:[%s140 + $0x11c0] sm:$0xff] %v3791
        %4816 = vst [vmem:[%s140 + $0x11c8] sm:$0xff] %v3792
        %4817 = vst [vmem:[%s140 + $0x11d0] sm:$0xff] %v3793
        %4818 = vst [vmem:[%s140 + $0x11d8] sm:$0xff] %v3794
        %4819 = vst [vmem:[%s140 + $0x11e0] sm:$0xff] %v3795
        %4820 = vst [vmem:[%s140 + $0x11e8] sm:$0xff] %v3796
        %4821 = vst [vmem:[%s140 + $0x11f0] sm:$0xff] %v3797
        %4822 = vst [vmem:[%s140 + $0x11f8] sm:$0xff] %v3798
        %4823 = vst [vmem:[%s140 + $0x1200] sm:$0xff] %v3799
        %4824 = vst [vmem:[%s140 + $0x1208] sm:$0xff] %v3800
        %4825 = vst [vmem:[%s140 + $0x1210] sm:$0xff] %v3801
        %4826 = vst [vmem:[%s140 + $0x1218] sm:$0xff] %v3802
        %4827 = vst [vmem:[%s140 + $0x1220] sm:$0xff] %v3803
        %4828 = vst [vmem:[%s140 + $0x1228] sm:$0xff] %v3804
        %4829 = vst [vmem:[%s140 + $0x1230] sm:$0xff] %v3805
        %4830 = vst [vmem:[%s140 + $0x1238] sm:$0xff] %v3806
        %4831 = vst [vmem:[%s140 + $0x1240] sm:$0xff] %v3807
        %4832 = vst [vmem:[%s140 + $0x1248] sm:$0xff] %v3808
        %4833 = vst [vmem:[%s140 + $0x1250] sm:$0xff] %v3809
        %4834 = vst [vmem:[%s140 + $0x1258] sm:$0xff] %v3810
        %4835 = vst [vmem:[%s140 + $0x1260] sm:$0xff] %v3811
        %4836 = vst [vmem:[%s140 + $0x1268] sm:$0xff] %v3812
        %4837 = vst [vmem:[%s140 + $0x1270] sm:$0xff] %v3813
        %4838 = vst [vmem:[%s140 + $0x1278] sm:$0xff] %v3814
        %4839 = vst [vmem:[%s140 + $0x1280] sm:$0xff] %v3815
        %4840 = vst [vmem:[%s140 + $0x1288] sm:$0xff] %v3816
        %4841 = vst [vmem:[%s140 + $0x1290] sm:$0xff] %v3817
        %4842 = vst [vmem:[%s140 + $0x1298] sm:$0xff] %v3818
        %4843 = vst [vmem:[%s140 + $0x12a0] sm:$0xff] %v3819
        %4844 = vst [vmem:[%s140 + $0x12a8] sm:$0xff] %v3820
        %4845 = vst [vmem:[%s140 + $0x12b0] sm:$0xff] %v3821
        %4846 = vst [vmem:[%s140 + $0x12b8] sm:$0xff] %v3822
        %4847 = vst [vmem:[%s140 + $0x12c0] sm:$0xff] %v3823
        %4848 = vst [vmem:[%s140 + $0x12c8] sm:$0xff] %v3824
        %4849 = vst [vmem:[%s140 + $0x12d0] sm:$0xff] %v3825
        %4850 = vst [vmem:[%s140 + $0x12d8] sm:$0xff] %v3826
        %4851 = vst [vmem:[%s140 + $0x12e0] sm:$0xff] %v3827
        %4852 = vst [vmem:[%s140 + $0x12e8] sm:$0xff] %v3828
        %4853 = vst [vmem:[%s140 + $0x12f0] sm:$0xff] %v3829
        %4854 = vst [vmem:[%s140 + $0x12f8] sm:$0xff] %v3830
        %4855 = vst [vmem:[%s140 + $0x1300] sm:$0xff] %v3831
        %4856 = vst [vmem:[%s140 + $0x1308] sm:$0xff] %v3832
        %4857 = vst [vmem:[%s140 + $0x1310] sm:$0xff] %v3833
        %4858 = vst [vmem:[%s140 + $0x1318] sm:$0xff] %v3834
        %4859 = vst [vmem:[%s140 + $0x1320] sm:$0xff] %v3835
        %4860 = vst [vmem:[%s140 + $0x1328] sm:$0xff] %v3836
        %4861 = vst [vmem:[%s140 + $0x1330] sm:$0xff] %v3837
        %4862 = vst [vmem:[%s140 + $0x1338] sm:$0xff] %v3838
        %4863 = vst [vmem:[%s140 + $0x1340] sm:$0xff] %v3839
        %4864 = vst [vmem:[%s140 + $0x1348] sm:$0xff] %v3840
        %4865 = vst [vmem:[%s140 + $0x1350] sm:$0xff] %v3841
        %4866 = vst [vmem:[%s140 + $0x1358] sm:$0xff] %v3842
        %4867 = vst [vmem:[%s140 + $0x1360] sm:$0xff] %v3843
        %4868 = vst [vmem:[%s140 + $0x1368] sm:$0xff] %v3844
        %4869 = vst [vmem:[%s140 + $0x1370] sm:$0xff] %v3845
        %4870 = vst [vmem:[%s140 + $0x1378] sm:$0xff] %v3846
        %4871 = vst [vmem:[%s140 + $0x1380] sm:$0xff] %v3847
        %4872 = vst [vmem:[%s140 + $0x1388] sm:$0xff] %v3848
        %4873 = vst [vmem:[%s140 + $0x1390] sm:$0xff] %v3849
        %4874 = vst [vmem:[%s140 + $0x1398] sm:$0xff] %v3850
        %4875 = vst [vmem:[%s140 + $0x13a0] sm:$0xff] %v3851
        %4876 = vst [vmem:[%s140 + $0x13a8] sm:$0xff] %v3852
        %4877 = vst [vmem:[%s140 + $0x13b0] sm:$0xff] %v3853
        %4878 = vst [vmem:[%s140 + $0x13b8] sm:$0xff] %v3854
        %4879 = vst [vmem:[%s140 + $0x13c0] sm:$0xff] %v3855
        %4880 = vst [vmem:[%s140 + $0x13c8] sm:$0xff] %v3856
        %4881 = vst [vmem:[%s140 + $0x13d0] sm:$0xff] %v3857
        %4882 = vst [vmem:[%s140 + $0x13d8] sm:$0xff] %v3858
        %4883 = vst [vmem:[%s140 + $0x13e0] sm:$0xff] %v3859
        %4884 = vst [vmem:[%s140 + $0x13e8] sm:$0xff] %v3860
        %4885 = vst [vmem:[%s140 + $0x13f0] sm:$0xff] %v3861
        %4886 = vst [vmem:[%s140 + $0x13f8] sm:$0xff] %v3862
        %4887 = vst [vmem:[%s140 + $0x1400] sm:$0xff] %v3863
        %4888 = vst [vmem:[%s140 + $0x1408] sm:$0xff] %v3864
        %4889 = vst [vmem:[%s140 + $0x1410] sm:$0xff] %v3865
        %4890 = vst [vmem:[%s140 + $0x1418] sm:$0xff] %v3866
        %4891 = vst [vmem:[%s140 + $0x1420] sm:$0xff] %v3867
        %4892 = vst [vmem:[%s140 + $0x1428] sm:$0xff] %v3868
        %4893 = vst [vmem:[%s140 + $0x1430] sm:$0xff] %v3869
        %4894 = vst [vmem:[%s140 + $0x1438] sm:$0xff] %v3870
        %4895 = vst [vmem:[%s140 + $0x1440] sm:$0xff] %v3871
        %4896 = vst [vmem:[%s140 + $0x1448] sm:$0xff] %v3872
        %4897 = vst [vmem:[%s140 + $0x1450] sm:$0xff] %v3873
        %4898 = vst [vmem:[%s140 + $0x1458] sm:$0xff] %v3874
        %4899 = vst [vmem:[%s140 + $0x1460] sm:$0xff] %v3875
        %4900 = vst [vmem:[%s140 + $0x1468] sm:$0xff] %v3876
        %4901 = vst [vmem:[%s140 + $0x1470] sm:$0xff] %v3877
        %4902 = vst [vmem:[%s140 + $0x1478] sm:$0xff] %v3878
        %4903 = vst [vmem:[%s140 + $0x1480] sm:$0xff] %v3879
        %4904 = vst [vmem:[%s140 + $0x1488] sm:$0xff] %v3880
        %4905 = vst [vmem:[%s140 + $0x1490] sm:$0xff] %v3881
        %4906 = vst [vmem:[%s140 + $0x1498] sm:$0xff] %v3882
        %4907 = vst [vmem:[%s140 + $0x14a0] sm:$0xff] %v3883
        %4908 = vst [vmem:[%s140 + $0x14a8] sm:$0xff] %v3884
        %4909 = vst [vmem:[%s140 + $0x14b0] sm:$0xff] %v3885
        %4910 = vst [vmem:[%s140 + $0x14b8] sm:$0xff] %v3886
        %4911 = vst [vmem:[%s140 + $0x14c0] sm:$0xff] %v3887
        %4912 = vst [vmem:[%s140 + $0x14c8] sm:$0xff] %v3888
        %4913 = vst [vmem:[%s140 + $0x14d0] sm:$0xff] %v3889
        %4914 = vst [vmem:[%s140 + $0x14d8] sm:$0xff] %v3890
        %4915 = vst [vmem:[%s140 + $0x14e0] sm:$0xff] %v3891
        %4916 = vst [vmem:[%s140 + $0x14e8] sm:$0xff] %v3892
        %4917 = vst [vmem:[%s140 + $0x14f0] sm:$0xff] %v3893
        %4918 = vst [vmem:[%s140 + $0x14f8] sm:$0xff] %v3894
        %4919 = vst [vmem:[%s140 + $0x1500] sm:$0xff] %v3895
        %4920 = vst [vmem:[%s140 + $0x1508] sm:$0xff] %v3896
        %4921 = vst [vmem:[%s140 + $0x1510] sm:$0xff] %v3897
        %4922 = vst [vmem:[%s140 + $0x1518] sm:$0xff] %v3898
        %4923 = vst [vmem:[%s140 + $0x1520] sm:$0xff] %v3899
        %4924 = vst [vmem:[%s140 + $0x1528] sm:$0xff] %v3900
        %4925 = vst [vmem:[%s140 + $0x1530] sm:$0xff] %v3901
        %4926 = vst [vmem:[%s140 + $0x1538] sm:$0xff] %v3902
        %4927 = vst [vmem:[%s140 + $0x1540] sm:$0xff] %v3903
        %4928 = vst [vmem:[%s140 + $0x1548] sm:$0xff] %v3904
        %4929 = vst [vmem:[%s140 + $0x1550] sm:$0xff] %v3905
        %4930 = vst [vmem:[%s140 + $0x1558] sm:$0xff] %v3906
        %4931 = vst [vmem:[%s140 + $0x1560] sm:$0xff] %v3907
        %4932 = vst [vmem:[%s140 + $0x1568] sm:$0xff] %v3908
        %4933 = vst [vmem:[%s140 + $0x1570] sm:$0xff] %v3909
        %4934 = vst [vmem:[%s140 + $0x1578] sm:$0xff] %v3910
        %4935 = vst [vmem:[%s140 + $0x1580] sm:$0xff] %v3911
        %4936 = vst [vmem:[%s140 + $0x1588] sm:$0xff] %v3912
        %4937 = vst [vmem:[%s140 + $0x1590] sm:$0xff] %v3913
        %4938 = vst [vmem:[%s140 + $0x1598] sm:$0xff] %v3914
        %4939 = vst [vmem:[%s140 + $0x15a0] sm:$0xff] %v3915
        %4940 = vst [vmem:[%s140 + $0x15a8] sm:$0xff] %v3916
        %4941 = vst [vmem:[%s140 + $0x15b0] sm:$0xff] %v3917
        %4942 = vst [vmem:[%s140 + $0x15b8] sm:$0xff] %v3918
        %4943 = vst [vmem:[%s140 + $0x15c0] sm:$0xff] %v3919
        %4944 = vst [vmem:[%s140 + $0x15c8] sm:$0xff] %v3920
        %4945 = vst [vmem:[%s140 + $0x15d0] sm:$0xff] %v3921
        %4946 = vst [vmem:[%s140 + $0x15d8] sm:$0xff] %v3922
        %4947 = vst [vmem:[%s140 + $0x15e0] sm:$0xff] %v3923
        %4948 = vst [vmem:[%s140 + $0x15e8] sm:$0xff] %v3924
        %4949 = vst [vmem:[%s140 + $0x15f0] sm:$0xff] %v3925
        %4950 = vst [vmem:[%s140 + $0x15f8] sm:$0xff] %v3926
        %4951 = vst [vmem:[%s140 + $0x1600] sm:$0xff] %v3927
        %4952 = vst [vmem:[%s140 + $0x1608] sm:$0xff] %v3928
        %4953 = vst [vmem:[%s140 + $0x1610] sm:$0xff] %v3929
        %4954 = vst [vmem:[%s140 + $0x1618] sm:$0xff] %v3930
        %4955 = vst [vmem:[%s140 + $0x1620] sm:$0xff] %v3931
        %4956 = vst [vmem:[%s140 + $0x1628] sm:$0xff] %v3932
        %4957 = vst [vmem:[%s140 + $0x1630] sm:$0xff] %v3933
        %4958 = vst [vmem:[%s140 + $0x1638] sm:$0xff] %v3934
        %4959 = vst [vmem:[%s140 + $0x1640] sm:$0xff] %v3935
        %4960 = vst [vmem:[%s140 + $0x1648] sm:$0xff] %v3936
        %4961 = vst [vmem:[%s140 + $0x1650] sm:$0xff] %v3937
        %4962 = vst [vmem:[%s140 + $0x1658] sm:$0xff] %v3938
        %4963 = vst [vmem:[%s140 + $0x1660] sm:$0xff] %v3939
        %4964 = vst [vmem:[%s140 + $0x1668] sm:$0xff] %v3940
        %4965 = vst [vmem:[%s140 + $0x1670] sm:$0xff] %v3941
        %4966 = vst [vmem:[%s140 + $0x1678] sm:$0xff] %v3942
        %4967 = vst [vmem:[%s140 + $0x1680] sm:$0xff] %v3943
        %4968 = vst [vmem:[%s140 + $0x1688] sm:$0xff] %v3944
        %4969 = vst [vmem:[%s140 + $0x1690] sm:$0xff] %v3945
        %4970 = vst [vmem:[%s140 + $0x1698] sm:$0xff] %v3946
        %4971 = vst [vmem:[%s140 + $0x16a0] sm:$0xff] %v3947
        %4972 = vst [vmem:[%s140 + $0x16a8] sm:$0xff] %v3948
        %4973 = vst [vmem:[%s140 + $0x16b0] sm:$0xff] %v3949
        %4974 = vst [vmem:[%s140 + $0x16b8] sm:$0xff] %v3950
        %4975 = vst [vmem:[%s140 + $0x16c0] sm:$0xff] %v3951
        %4976 = vst [vmem:[%s140 + $0x16c8] sm:$0xff] %v3952
        %4977 = vst [vmem:[%s140 + $0x16d0] sm:$0xff] %v3953
        %4978 = vst [vmem:[%s140 + $0x16d8] sm:$0xff] %v3954
        %4979 = vst [vmem:[%s140 + $0x16e0] sm:$0xff] %v3955
        %4980 = vst [vmem:[%s140 + $0x16e8] sm:$0xff] %v3956
        %4981 = vst [vmem:[%s140 + $0x16f0] sm:$0xff] %v3957
        %4982 = vst [vmem:[%s140 + $0x16f8] sm:$0xff] %v3958
        %4983 = vst [vmem:[%s140 + $0x1700] sm:$0xff] %v3959
        %4984 = vst [vmem:[%s140 + $0x1708] sm:$0xff] %v3960
        %4985 = vst [vmem:[%s140 + $0x1710] sm:$0xff] %v3961
        %4986 = vst [vmem:[%s140 + $0x1718] sm:$0xff] %v3962
        %4987 = vst [vmem:[%s140 + $0x1720] sm:$0xff] %v3963
        %4988 = vst [vmem:[%s140 + $0x1728] sm:$0xff] %v3964
        %4989 = vst [vmem:[%s140 + $0x1730] sm:$0xff] %v3965
        %4990 = vst [vmem:[%s140 + $0x1738] sm:$0xff] %v3966
        %4991 = vst [vmem:[%s140 + $0x1740] sm:$0xff] %v3967
        %4992 = vst [vmem:[%s140 + $0x1748] sm:$0xff] %v3968
        %4993 = vst [vmem:[%s140 + $0x1750] sm:$0xff] %v3969
        %4994 = vst [vmem:[%s140 + $0x1758] sm:$0xff] %v3970
        %4995 = vst [vmem:[%s140 + $0x1760] sm:$0xff] %v3971
        %4996 = vst [vmem:[%s140 + $0x1768] sm:$0xff] %v3972
        %4997 = vst [vmem:[%s140 + $0x1770] sm:$0xff] %v3973
        %4998 = vst [vmem:[%s140 + $0x1778] sm:$0xff] %v3974
        %4999 = vst [vmem:[%s140 + $0x1780] sm:$0xff] %v3975
        %5000 = vst [vmem:[%s140 + $0x1788] sm:$0xff] %v3976
        %5001 = vst [vmem:[%s140 + $0x1790] sm:$0xff] %v3977
        %5002 = vst [vmem:[%s140 + $0x1798] sm:$0xff] %v3978
        %5003 = vst [vmem:[%s140 + $0x17a0] sm:$0xff] %v3979
        %5004 = vst [vmem:[%s140 + $0x17a8] sm:$0xff] %v3980
        %5005 = vst [vmem:[%s140 + $0x17b0] sm:$0xff] %v3981
        %5006 = vst [vmem:[%s140 + $0x17b8] sm:$0xff] %v3982
        %5007 = vst [vmem:[%s140 + $0x17c0] sm:$0xff] %v3983
        %5008 = vst [vmem:[%s140 + $0x17c8] sm:$0xff] %v3984
        %5009 = vst [vmem:[%s140 + $0x17d0] sm:$0xff] %v3985
        %5010 = vst [vmem:[%s140 + $0x17d8] sm:$0xff] %v3986
        %5011 = vst [vmem:[%s140 + $0x17e0] sm:$0xff] %v3987
        %5012 = vst [vmem:[%s140 + $0x17e8] sm:$0xff] %v3988
        %5013 = vst [vmem:[%s140 + $0x17f0] sm:$0xff] %v3989
        %5014 = vst [vmem:[%s140 + $0x17f8] sm:$0xff] %v3990
        %5015 = vst [vmem:[%s140 + $0x1800] sm:$0xff] %v3991
        %5016 = vst [vmem:[%s140 + $0x1808] sm:$0xff] %v3992
        %5017 = vst [vmem:[%s140 + $0x1810] sm:$0xff] %v3993
        %5018 = vst [vmem:[%s140 + $0x1818] sm:$0xff] %v3994
        %5019 = vst [vmem:[%s140 + $0x1820] sm:$0xff] %v3995
        %5020 = vst [vmem:[%s140 + $0x1828] sm:$0xff] %v3996
        %5021 = vst [vmem:[%s140 + $0x1830] sm:$0xff] %v3997
        %5022 = vst [vmem:[%s140 + $0x1838] sm:$0xff] %v3998
        %5023 = vst [vmem:[%s140 + $0x1840] sm:$0xff] %v3999
        %5024 = vst [vmem:[%s140 + $0x1848] sm:$0xff] %v4000
        %5025 = vst [vmem:[%s140 + $0x1850] sm:$0xff] %v4001
        %5026 = vst [vmem:[%s140 + $0x1858] sm:$0xff] %v4002
        %5027 = vst [vmem:[%s140 + $0x1860] sm:$0xff] %v4003
        %5028 = vst [vmem:[%s140 + $0x1868] sm:$0xff] %v4004
        %5029 = vst [vmem:[%s140 + $0x1870] sm:$0xff] %v4005
        %5030 = vst [vmem:[%s140 + $0x1878] sm:$0xff] %v4006
        %5031 = vst [vmem:[%s140 + $0x1880] sm:$0xff] %v4007
        %5032 = vst [vmem:[%s140 + $0x1888] sm:$0xff] %v4008
        %5033 = vst [vmem:[%s140 + $0x1890] sm:$0xff] %v4009
        %5034 = vst [vmem:[%s140 + $0x1898] sm:$0xff] %v4010
        %5035 = vst [vmem:[%s140 + $0x18a0] sm:$0xff] %v4011
        %5036 = vst [vmem:[%s140 + $0x18a8] sm:$0xff] %v4012
        %5037 = vst [vmem:[%s140 + $0x18b0] sm:$0xff] %v4013
        %5038 = vst [vmem:[%s140 + $0x18b8] sm:$0xff] %v4014
        %5039 = vst [vmem:[%s140 + $0x18c0] sm:$0xff] %v4015
        %5040 = vst [vmem:[%s140 + $0x18c8] sm:$0xff] %v4016
        %5041 = vst [vmem:[%s140 + $0x18d0] sm:$0xff] %v4017
        %5042 = vst [vmem:[%s140 + $0x18d8] sm:$0xff] %v4018
        %5043 = vst [vmem:[%s140 + $0x18e0] sm:$0xff] %v4019
        %5044 = vst [vmem:[%s140 + $0x18e8] sm:$0xff] %v4020
        %5045 = vst [vmem:[%s140 + $0x18f0] sm:$0xff] %v4021
        %5046 = vst [vmem:[%s140 + $0x18f8] sm:$0xff] %v4022
        %5047 = vst [vmem:[%s140 + $0x1900] sm:$0xff] %v4023
        %5048 = vst [vmem:[%s140 + $0x1908] sm:$0xff] %v4024
        %5049 = vst [vmem:[%s140 + $0x1910] sm:$0xff] %v4025
        %5050 = vst [vmem:[%s140 + $0x1918] sm:$0xff] %v4026
        %5051 = vst [vmem:[%s140 + $0x1920] sm:$0xff] %v4027
        %5052 = vst [vmem:[%s140 + $0x1928] sm:$0xff] %v4028
        %5053 = vst [vmem:[%s140 + $0x1930] sm:$0xff] %v4029
        %5054 = vst [vmem:[%s140 + $0x1938] sm:$0xff] %v4030
        %5055 = vst [vmem:[%s140 + $0x1940] sm:$0xff] %v4031
        %5056 = vst [vmem:[%s140 + $0x1948] sm:$0xff] %v4032
        %5057 = vst [vmem:[%s140 + $0x1950] sm:$0xff] %v4033
        %5058 = vst [vmem:[%s140 + $0x1958] sm:$0xff] %v4034
        %5059 = vst [vmem:[%s140 + $0x1960] sm:$0xff] %v4035
        %5060 = vst [vmem:[%s140 + $0x1968] sm:$0xff] %v4036
        %5061 = vst [vmem:[%s140 + $0x1970] sm:$0xff] %v4037
        %5062 = vst [vmem:[%s140 + $0x1978] sm:$0xff] %v4038
        %5063 = vst [vmem:[%s140 + $0x1980] sm:$0xff] %v4039
        %5064 = vst [vmem:[%s140 + $0x1988] sm:$0xff] %v4040
        %5065 = vst [vmem:[%s140 + $0x1990] sm:$0xff] %v4041
        %5066 = vst [vmem:[%s140 + $0x1998] sm:$0xff] %v4042
        %5067 = vst [vmem:[%s140 + $0x19a0] sm:$0xff] %v4043
        %5068 = vst [vmem:[%s140 + $0x19a8] sm:$0xff] %v4044
        %5069 = vst [vmem:[%s140 + $0x19b0] sm:$0xff] %v4045
        %5070 = vst [vmem:[%s140 + $0x19b8] sm:$0xff] %v4046
        %5071 = vst [vmem:[%s140 + $0x19c0] sm:$0xff] %v4047
        %5072 = vst [vmem:[%s140 + $0x19c8] sm:$0xff] %v4048
        %5073 = vst [vmem:[%s140 + $0x19d0] sm:$0xff] %v4049
        %5074 = vst [vmem:[%s140 + $0x19d8] sm:$0xff] %v4050
        %5075 = vst [vmem:[%s140 + $0x19e0] sm:$0xff] %v4051
        %5076 = vst [vmem:[%s140 + $0x19e8] sm:$0xff] %v4052
        %5077 = vst [vmem:[%s140 + $0x19f0] sm:$0xff] %v4053
        %5078 = vst [vmem:[%s140 + $0x19f8] sm:$0xff] %v4054
        %5079 = vst [vmem:[%s140 + $0x1a00] sm:$0xff] %v4055
        %5080 = vst [vmem:[%s140 + $0x1a08] sm:$0xff] %v4056
        %5081 = vst [vmem:[%s140 + $0x1a10] sm:$0xff] %v4057
        %5082 = vst [vmem:[%s140 + $0x1a18] sm:$0xff] %v4058
        %5083 = vst [vmem:[%s140 + $0x1a20] sm:$0xff] %v4059
        %5084 = vst [vmem:[%s140 + $0x1a28] sm:$0xff] %v4060
        %5085 = vst [vmem:[%s140 + $0x1a30] sm:$0xff] %v4061
        %5086 = vst [vmem:[%s140 + $0x1a38] sm:$0xff] %v4062
        %5087 = vst [vmem:[%s140 + $0x1a40] sm:$0xff] %v4063
        %5088 = vst [vmem:[%s140 + $0x1a48] sm:$0xff] %v4064
        %5089 = vst [vmem:[%s140 + $0x1a50] sm:$0xff] %v4065
        %5090 = vst [vmem:[%s140 + $0x1a58] sm:$0xff] %v4066
        %5091 = vst [vmem:[%s140 + $0x1a60] sm:$0xff] %v4067
        %5092 = vst [vmem:[%s140 + $0x1a68] sm:$0xff] %v4068
        %5093 = vst [vmem:[%s140 + $0x1a70] sm:$0xff] %v4069
        %5094 = vst [vmem:[%s140 + $0x1a78] sm:$0xff] %v4070
        %5095 = vst [vmem:[%s140 + $0x1a80] sm:$0xff] %v4071
        %5096 = vst [vmem:[%s140 + $0x1a88] sm:$0xff] %v4072
        %5097 = vst [vmem:[%s140 + $0x1a90] sm:$0xff] %v4073
        %5098 = vst [vmem:[%s140 + $0x1a98] sm:$0xff] %v4074
        %5099 = vst [vmem:[%s140 + $0x1aa0] sm:$0xff] %v4075
        %5100 = vst [vmem:[%s140 + $0x1aa8] sm:$0xff] %v4076
        %5101 = vst [vmem:[%s140 + $0x1ab0] sm:$0xff] %v4077
        %5102 = vst [vmem:[%s140 + $0x1ab8] sm:$0xff] %v4078
        %5103 = vst [vmem:[%s140 + $0x1ac0] sm:$0xff] %v4079
        %5104 = vst [vmem:[%s140 + $0x1ac8] sm:$0xff] %v4080
        %5105 = vst [vmem:[%s140 + $0x1ad0] sm:$0xff] %v4081
        %5106 = vst [vmem:[%s140 + $0x1ad8] sm:$0xff] %v4082
        %5107 = vst [vmem:[%s140 + $0x1ae0] sm:$0xff] %v4083
        %5108 = vst [vmem:[%s140 + $0x1ae8] sm:$0xff] %v4084
        %5109 = vst [vmem:[%s140 + $0x1af0] sm:$0xff] %v4085
        %5110 = vst [vmem:[%s140 + $0x1af8] sm:$0xff] %v4086
        %5111 = vst [vmem:[%s140 + $0x1b00] sm:$0xff] %v4087
        %5112 = vst [vmem:[%s140 + $0x1b08] sm:$0xff] %v4088
        %5113 = vst [vmem:[%s140 + $0x1b10] sm:$0xff] %v4089
        %5114 = vst [vmem:[%s140 + $0x1b18] sm:$0xff] %v4090
        %5115 = vst [vmem:[%s140 + $0x1b20] sm:$0xff] %v4091
        %5116 = vst [vmem:[%s140 + $0x1b28] sm:$0xff] %v4092
        %5117 = vst [vmem:[%s140 + $0x1b30] sm:$0xff] %v4093
        %5118 = vst [vmem:[%s140 + $0x1b38] sm:$0xff] %v4094
        %5119 = vst [vmem:[%s140 + $0x1b40] sm:$0xff] %v4095
        %5120 = vst [vmem:[%s140 + $0x1b48] sm:$0xff] %v4096
        %5121 = vst [vmem:[%s140 + $0x1b50] sm:$0xff] %v4097
        %5122 = vst [vmem:[%s140 + $0x1b58] sm:$0xff] %v4098
        %5123 = vst [vmem:[%s140 + $0x1b60] sm:$0xff] %v4099
        %5124 = vst [vmem:[%s140 + $0x1b68] sm:$0xff] %v4100
        %5125 = vst [vmem:[%s140 + $0x1b70] sm:$0xff] %v4101
        %5126 = vst [vmem:[%s140 + $0x1b78] sm:$0xff] %v4102
        %5127 = vst [vmem:[%s140 + $0x1b80] sm:$0xff] %v4103
        %5128 = vst [vmem:[%s140 + $0x1b88] sm:$0xff] %v4104
        %5129 = vst [vmem:[%s140 + $0x1b90] sm:$0xff] %v4105
        %5130 = vst [vmem:[%s140 + $0x1b98] sm:$0xff] %v4106
        %5131 = vst [vmem:[%s140 + $0x1ba0] sm:$0xff] %v4107
        %5132 = vst [vmem:[%s140 + $0x1ba8] sm:$0xff] %v4108
        %5133 = vst [vmem:[%s140 + $0x1bb0] sm:$0xff] %v4109
        %5134 = vst [vmem:[%s140 + $0x1bb8] sm:$0xff] %v4110
        %5135 = vst [vmem:[%s140 + $0x1bc0] sm:$0xff] %v4111
        %5136 = vst [vmem:[%s140 + $0x1bc8] sm:$0xff] %v4112
        %5137 = vst [vmem:[%s140 + $0x1bd0] sm:$0xff] %v4113
        %5138 = vst [vmem:[%s140 + $0x1bd8] sm:$0xff] %v4114
        %5139 = vst [vmem:[%s140 + $0x1be0] sm:$0xff] %v4115
        %5140 = vst [vmem:[%s140 + $0x1be8] sm:$0xff] %v4116
        %5141 = vst [vmem:[%s140 + $0x1bf0] sm:$0xff] %v4117
        %5142 = vst [vmem:[%s140 + $0x1bf8] sm:$0xff] %v4118
        %5143 = vst [vmem:[%s140 + $0x1c00] sm:$0xff] %v4119
        %5144 = vst [vmem:[%s140 + $0x1c08] sm:$0xff] %v4120
        %5145 = vst [vmem:[%s140 + $0x1c10] sm:$0xff] %v4121
        %5146 = vst [vmem:[%s140 + $0x1c18] sm:$0xff] %v4122
        %5147 = vst [vmem:[%s140 + $0x1c20] sm:$0xff] %v4123
        %5148 = vst [vmem:[%s140 + $0x1c28] sm:$0xff] %v4124
        %5149 = vst [vmem:[%s140 + $0x1c30] sm:$0xff] %v4125
        %5150 = vst [vmem:[%s140 + $0x1c38] sm:$0xff] %v4126
        %5151 = vst [vmem:[%s140 + $0x1c40] sm:$0xff] %v4127
        %5152 = vst [vmem:[%s140 + $0x1c48] sm:$0xff] %v4128
        %5153 = vst [vmem:[%s140 + $0x1c50] sm:$0xff] %v4129
        %5154 = vst [vmem:[%s140 + $0x1c58] sm:$0xff] %v4130
        %5155 = vst [vmem:[%s140 + $0x1c60] sm:$0xff] %v4131
        %5156 = vst [vmem:[%s140 + $0x1c68] sm:$0xff] %v4132
        %5157 = vst [vmem:[%s140 + $0x1c70] sm:$0xff] %v4133
        %5158 = vst [vmem:[%s140 + $0x1c78] sm:$0xff] %v4134
        %5159 = vst [vmem:[%s140 + $0x1c80] sm:$0xff] %v4135
        %5160 = vst [vmem:[%s140 + $0x1c88] sm:$0xff] %v4136
        %5161 = vst [vmem:[%s140 + $0x1c90] sm:$0xff] %v4137
        %5162 = vst [vmem:[%s140 + $0x1c98] sm:$0xff] %v4138
        %5163 = vst [vmem:[%s140 + $0x1ca0] sm:$0xff] %v4139
        %5164 = vst [vmem:[%s140 + $0x1ca8] sm:$0xff] %v4140
        %5165 = vst [vmem:[%s140 + $0x1cb0] sm:$0xff] %v4141
        %5166 = vst [vmem:[%s140 + $0x1cb8] sm:$0xff] %v4142
        %5167 = vst [vmem:[%s140 + $0x1cc0] sm:$0xff] %v4143
        %5168 = vst [vmem:[%s140 + $0x1cc8] sm:$0xff] %v4144
        %5169 = vst [vmem:[%s140 + $0x1cd0] sm:$0xff] %v4145
        %5170 = vst [vmem:[%s140 + $0x1cd8] sm:$0xff] %v4146
        %5171 = vst [vmem:[%s140 + $0x1ce0] sm:$0xff] %v4147
        %5172 = vst [vmem:[%s140 + $0x1ce8] sm:$0xff] %v4148
        %5173 = vst [vmem:[%s140 + $0x1cf0] sm:$0xff] %v4149
        %5174 = vst [vmem:[%s140 + $0x1cf8] sm:$0xff] %v4150
        %5175 = vst [vmem:[%s140 + $0x1d00] sm:$0xff] %v4151
        %5176 = vst [vmem:[%s140 + $0x1d08] sm:$0xff] %v4152
        %5177 = vst [vmem:[%s140 + $0x1d10] sm:$0xff] %v4153
        %5178 = vst [vmem:[%s140 + $0x1d18] sm:$0xff] %v4154
        %5179 = vst [vmem:[%s140 + $0x1d20] sm:$0xff] %v4155
        %5180 = vst [vmem:[%s140 + $0x1d28] sm:$0xff] %v4156
        %5181 = vst [vmem:[%s140 + $0x1d30] sm:$0xff] %v4157
        %5182 = vst [vmem:[%s140 + $0x1d38] sm:$0xff] %v4158
        %5183 = vst [vmem:[%s140 + $0x1d40] sm:$0xff] %v4159
        %5184 = vst [vmem:[%s140 + $0x1d48] sm:$0xff] %v4160
        %5185 = vst [vmem:[%s140 + $0x1d50] sm:$0xff] %v4161
        %5186 = vst [vmem:[%s140 + $0x1d58] sm:$0xff] %v4162
        %5187 = vst [vmem:[%s140 + $0x1d60] sm:$0xff] %v4163
        %5188 = vst [vmem:[%s140 + $0x1d68] sm:$0xff] %v4164
        %5189 = vst [vmem:[%s140 + $0x1d70] sm:$0xff] %v4165
        %5190 = vst [vmem:[%s140 + $0x1d78] sm:$0xff] %v4166
        %5191 = vst [vmem:[%s140 + $0x1d80] sm:$0xff] %v4167
        %5192 = vst [vmem:[%s140 + $0x1d88] sm:$0xff] %v4168
        %5193 = vst [vmem:[%s140 + $0x1d90] sm:$0xff] %v4169
        %5194 = vst [vmem:[%s140 + $0x1d98] sm:$0xff] %v4170
        %5195 = vst [vmem:[%s140 + $0x1da0] sm:$0xff] %v4171
        %5196 = vst [vmem:[%s140 + $0x1da8] sm:$0xff] %v4172
        %5197 = vst [vmem:[%s140 + $0x1db0] sm:$0xff] %v4173
        %5198 = vst [vmem:[%s140 + $0x1db8] sm:$0xff] %v4174
        %5199 = vst [vmem:[%s140 + $0x1dc0] sm:$0xff] %v4175
        %5200 = vst [vmem:[%s140 + $0x1dc8] sm:$0xff] %v4176
        %5201 = vst [vmem:[%s140 + $0x1dd0] sm:$0xff] %v4177
        %5202 = vst [vmem:[%s140 + $0x1dd8] sm:$0xff] %v4178
        %5203 = vst [vmem:[%s140 + $0x1de0] sm:$0xff] %v4179
        %5204 = vst [vmem:[%s140 + $0x1de8] sm:$0xff] %v4180
        %5205 = vst [vmem:[%s140 + $0x1df0] sm:$0xff] %v4181
        %5206 = vst [vmem:[%s140 + $0x1df8] sm:$0xff] %v4182
        %5207 = vst [vmem:[%s140 + $0x1e00] sm:$0xff] %v4183
        %5208 = vst [vmem:[%s140 + $0x1e08] sm:$0xff] %v4184
        %5209 = vst [vmem:[%s140 + $0x1e10] sm:$0xff] %v4185
        %5210 = vst [vmem:[%s140 + $0x1e18] sm:$0xff] %v4186
        %5211 = vst [vmem:[%s140 + $0x1e20] sm:$0xff] %v4187
        %5212 = vst [vmem:[%s140 + $0x1e28] sm:$0xff] %v4188
        %5213 = vst [vmem:[%s140 + $0x1e30] sm:$0xff] %v4189
        %5214 = vst [vmem:[%s140 + $0x1e38] sm:$0xff] %v4190
        %5215 = vst [vmem:[%s140 + $0x1e40] sm:$0xff] %v4191
        %5216 = vst [vmem:[%s140 + $0x1e48] sm:$0xff] %v4192
        %5217 = vst [vmem:[%s140 + $0x1e50] sm:$0xff] %v4193
        %5218 = vst [vmem:[%s140 + $0x1e58] sm:$0xff] %v4194
        %5219 = vst [vmem:[%s140 + $0x1e60] sm:$0xff] %v4195
        %5220 = vst [vmem:[%s140 + $0x1e68] sm:$0xff] %v4196
        %5221 = vst [vmem:[%s140 + $0x1e70] sm:$0xff] %v4197
        %5222 = vst [vmem:[%s140 + $0x1e78] sm:$0xff] %v4198
        %5223 = vst [vmem:[%s140 + $0x1e80] sm:$0xff] %v4199
        %5224 = vst [vmem:[%s140 + $0x1e88] sm:$0xff] %v4200
        %5225 = vst [vmem:[%s140 + $0x1e90] sm:$0xff] %v4201
        %5226 = vst [vmem:[%s140 + $0x1e98] sm:$0xff] %v4202
        %5227 = vst [vmem:[%s140 + $0x1ea0] sm:$0xff] %v4203
        %5228 = vst [vmem:[%s140 + $0x1ea8] sm:$0xff] %v4204
        %5229 = vst [vmem:[%s140 + $0x1eb0] sm:$0xff] %v4205
        %5230 = vst [vmem:[%s140 + $0x1eb8] sm:$0xff] %v4206
        %5231 = vst [vmem:[%s140 + $0x1ec0] sm:$0xff] %v4207
        %5232 = vst [vmem:[%s140 + $0x1ec8] sm:$0xff] %v4208
        %5233 = vst [vmem:[%s140 + $0x1ed0] sm:$0xff] %v4209
        %5234 = vst [vmem:[%s140 + $0x1ed8] sm:$0xff] %v4210
        %5235 = vst [vmem:[%s140 + $0x1ee0] sm:$0xff] %v4211
        %5236 = vst [vmem:[%s140 + $0x1ee8] sm:$0xff] %v4212
        %5237 = vst [vmem:[%s140 + $0x1ef0] sm:$0xff] %v4213
        %5238 = vst [vmem:[%s140 + $0x1ef8] sm:$0xff] %v4214
        %5239 = vst [vmem:[%s140 + $0x1f00] sm:$0xff] %v4215
        %5240 = vst [vmem:[%s140 + $0x1f08] sm:$0xff] %v4216
        %5241 = vst [vmem:[%s140 + $0x1f10] sm:$0xff] %v4217
        %5242 = vst [vmem:[%s140 + $0x1f18] sm:$0xff] %v4218
        %5243 = vst [vmem:[%s140 + $0x1f20] sm:$0xff] %v4219
        %5244 = vst [vmem:[%s140 + $0x1f28] sm:$0xff] %v4220
        %5245 = vst [vmem:[%s140 + $0x1f30] sm:$0xff] %v4221
        %5246 = vst [vmem:[%s140 + $0x1f38] sm:$0xff] %v4222
        %5247 = vst [vmem:[%s140 + $0x1f40] sm:$0xff] %v4223
        %5248 = vst [vmem:[%s140 + $0x1f48] sm:$0xff] %v4224
        %5249 = vst [vmem:[%s140 + $0x1f50] sm:$0xff] %v4225
        %5250 = vst [vmem:[%s140 + $0x1f58] sm:$0xff] %v4226
        %5251 = vst [vmem:[%s140 + $0x1f60] sm:$0xff] %v4227
        %5252 = vst [vmem:[%s140 + $0x1f68] sm:$0xff] %v4228
        %5253 = vst [vmem:[%s140 + $0x1f70] sm:$0xff] %v4229
        %5254 = vst [vmem:[%s140 + $0x1f78] sm:$0xff] %v4230
        %5255 = vst [vmem:[%s140 + $0x1f80] sm:$0xff] %v4231
        %5256 = vst [vmem:[%s140 + $0x1f88] sm:$0xff] %v4232
        %5257 = vst [vmem:[%s140 + $0x1f90] sm:$0xff] %v4233
        %5258 = vst [vmem:[%s140 + $0x1f98] sm:$0xff] %v4234
        %5259 = vst [vmem:[%s140 + $0x1fa0] sm:$0xff] %v4235
        %5260 = vst [vmem:[%s140 + $0x1fa8] sm:$0xff] %v4236
        %5261 = vst [vmem:[%s140 + $0x1fb0] sm:$0xff] %v4237
        %5262 = vst [vmem:[%s140 + $0x1fb8] sm:$0xff] %v4238
        %5263 = vst [vmem:[%s140 + $0x1fc0] sm:$0xff] %v4239
        %5264 = vst [vmem:[%s140 + $0x1fc8] sm:$0xff] %v4240
        %5265 = vst [vmem:[%s140 + $0x1fd0] sm:$0xff] %v4241
        %5266 = vst [vmem:[%s140 + $0x1fd8] sm:$0xff] %v4242
        %5267 = vst [vmem:[%s140 + $0x1fe0] sm:$0xff] %v4243
        %5268 = vst [vmem:[%s140 + $0x1fe8] sm:$0xff] %v4244
        %5269 = vst [vmem:[%s140 + $0x1ff0] sm:$0xff] %v4245
        %5270 = vst [vmem:[%s140 + $0x1ff8] sm:$0xff] %v4246
        %s5271 = sand.u32 %s52, 1
        %s5272 = scalar_lea.sflag [#allocation4], %s5271
        %s5273 = sand.u32 %s52, 1
        %s5274 = smul.addr %s5273, 8192
        %s5275 = scalar_lea.vmem [#allocation5], %s5274
        // Predicated region
        $region29: #{tpu_custom_call.1} parent=23 // pred_check
          %p5276 = pneg %p62
        $region30: #{tpu_custom_call.1} parent=23 // pred_check_branch
          %5278 = sbr.rel (%p5276) target = $region32
        $region31: #{tpu_custom_call.1} parent=23 // pred_region
          %s5279 = smul.u32 1024, %s18
          %s5280 = ssub.s32 1280, %s5279
          %p5281 = scmp.lt.s32.totalorder %s5280, 1024
          %s5282 = scalar_select %p5281, %s5280, 1024
          %s5283 = smul.u32 128, %s5282
          %s5285 = ssub.s32 131072, %s5283
          %5286 = vsyncadd %s5272, %s5285
          %p5287 = scmp.ne.s32.totalorder 0, %s5283
          %s5288 = smul.addr %s5279, 128
          %s5289 = scalar_lea.hbm %s1, %s5288
          %s5290 = smul.u32 8, %s5282
          %s5291 = sshll.u32 %s5275, 4
          %s5292 = int_to_ptr.vmem [resolvable:$true] %s5291
          %s5293 = sshll.u32 %s5290, 4
          %5297 = dma.vmem_to_hbm [thread:$0]  (%p5287), %s5292, %s5293, %s5289, %s5272, 128, 128, 8
        $region32: #{tpu_custom_call.1} parent=23 // pred_fallthru
          _
      $region24: #{tpu_custom_call.1} parent=5 // pred_fallthru
        _
      %p5298 = scmp.le.s32.totalorder 2, %s13
      // Predicated region
      $region33: #{tpu_custom_call.1} parent=5 // pred_check
        %p5299 = pneg %p5298
      $region34: #{tpu_custom_call.1} parent=5 // pred_check_branch
        %5301 = sbr.rel (%p5299) target = $region36
      $region35: #{tpu_custom_call.1} parent=5 // pred_region
        %s5302 = ssub.s32 %s13, 2
        // Predicated region
        $region37: #{tpu_custom_call.1} parent=35 // pred_check
          %p5303 = pneg %p68
        $region38: #{tpu_custom_call.1} parent=35 // pred_check_branch
          %5305 = sbr.rel (%p5303) target = $region40
        $region39: #{tpu_custom_call.1} parent=35 // pred_region
          %s5306 = sand.u32 %s53, 1
          %s5307 = scalar_lea.sflag [#allocation4], %s5306
          %s5308 = sand.u32 %s53, 1
          %s5309 = smul.addr %s5308, 8192
          %s5310 = scalar_lea.vmem [#allocation5], %s5309
          %5311 = dma.done %s5307, 131072
        $region40: #{tpu_custom_call.1} parent=35 // pred_fallthru
          _
      $region36: #{tpu_custom_call.1} parent=5 // pred_fallthru
        _
    $region6: #{tpu_custom_call.1} parent=1 // loop_footer
      %s17 = sadd.s32 1, %s13
    $region7: #{tpu_custom_call.1} parent=1 // loop_footer_branch
      %12 = sbr.rel target = $region3
    $region8: #{tpu_custom_call.1} parent=1 // loop_exit
      _
    %5312 = vsyncpa [#allocation3], 1
    %s5313 = scalar_lea.sflag [#allocation3], 1
    %5314 = vsyncpa %s5313, 1
    %5315 = vsyncpa [#allocation4], 1
    %s5316 = scalar_lea.sflag [#allocation4], 1
    %5317 = vsyncpa %s5316, 1

</llo_original>
